<compile_context>
chip_gen: v7x
topology: tpu7x:2x2x1
jax: 0.10.0
libtpu: 0.0.40
codegen_flags: <defaults>
</compile_context>

<pallas_src>
import jax
import jax.numpy as jnp
from jax.experimental import pallas as pl
from jax.experimental.pallas import tpu as pltpu


def _round_up(n, m):
    return (n + m - 1) // m * m


def _dims(H, V):
    """Padded dims: Hp = state/contraction width, Hg = per-gate stride, Gp = gate width."""
    Hp = _round_up(H, 128)
    Vp = _round_up(V, 128)
    if 4 * H <= 128:            # pack all four gates into one 128-lane tile
        Hg, Gp = H, 128
    else:                       # per-gate padding (original layout)
        Hg, Gp = Hp, 4 * Hp
    return Hp, Hg, Gp, Vp


# ----------------------------- Pallas kernel ------------------------------ #
def _lstm_kernel(x_ref, h0_ref, c0_ref,
                 w0x_ref, w0h_ref, b0_ref,
                 w1_ref, b1_ref,
                 wfc_ref, bfc_ref,
                 out_ref, hn_ref, cn_ref,
                 gx_ref, htop_ref, xin_ref):
    """Single grid step: full 2-layer LSTM over all timesteps + one FC matmul."""
    Bp = h0_ref.shape[1]
    Hg = h0_ref.shape[2]          # per-gate block stride (== H when packed, else Hp)
    Hp = w0h_ref.shape[0]         # padded state / contraction width
    Gp = w0h_ref.shape[1]         # padded total gate width
    TB = x_ref.shape[0]
    T = TB // Bp
    f32, bf16 = jnp.float32, jnp.bfloat16
    packed = Gp <= 128            # all four gates in one lane tile

    # ---- hoisted layer-0 input projection: one (T*Bp, Vp) @ (Vp, Gp) matmul ----
    gx_ref[...] = (jnp.dot(x_ref[...], w0x_ref[...], preferred_element_type=f32)
                   + b0_ref[...])

    # hoisted layer-1 bias broadcast (would otherwise be re-emitted every step)
    b1_full = jnp.broadcast_to(b1_ref[...], (Bp, Gp))

    # Persistent bf16 [h_l0 ; h_l1] operand for the recurrent matmuls.  Zero the
    # padding lanes ONCE; per-step stores only touch the real lanes, so the
    # zero-padding invariant (padded lanes exactly 0) holds for all timesteps.
    xin_ref[...] = jnp.zeros_like(xin_ref)
    xin_ref[:, 0:Hg] = h0_ref[0].astype(bf16)
    xin_ref[:, Hp:Hp + Hg] = h0_ref[1].astype(bf16)
    if Hg < Hp:
        # padded lanes of htop must be zero (stale VMEM could be inf/NaN otherwise)
        htop_ref[...] = jnp.zeros_like(htop_ref)

    def gates_to_state(gates, c):
        # PyTorch gate order [i, f, g, o]; f32 nonlinearities + f32 cell state (v5e-safe).
        if packed:
            # 4H <= 128: two full-width EUP passes + cheap lane slices.
            sig = jax.nn.sigmoid(gates)
            tnh = jnp.tanh(gates)
            i = sig[:, 0 * Hg:1 * Hg]
            f = sig[:, 1 * Hg:2 * Hg]
            g = tnh[:, 2 * Hg:3 * Hg]
            o = sig[:, 3 * Hg:4 * Hg]
        else:
            i = jax.nn.sigmoid(gates[:, 0 * Hg:1 * Hg])
            f = jax.nn.sigmoid(gates[:, 1 * Hg:2 * Hg])
            g = jnp.tanh(gates[:, 2 * Hg:3 * Hg])
            o = jax.nn.sigmoid(gates[:, 3 * Hg:4 * Hg])
        c_new = f * c + i * g
        h_new = o * jnp.tanh(c_new)
        return h_new, c_new

    def step(t, carry):
        h_l0, c_l0, h_l1, c_l1 = carry            # f32 (Bp, Hg) each
        row = pl.multiple_of(t * Bp, Bp)

        # layer 0: only the recurrent matmul remains on the serial chain;
        # the bf16 operand is read directly from the pre-laid-out xin scratch.
        g0 = gx_ref[pl.ds(row, Bp), :] + jnp.dot(
            xin_ref[:, 0:Hp], w0h_ref[...], preferred_element_type=f32)
        h_l0, c_l0 = gates_to_state(g0, c_l0)
        xin_ref[:, 0:Hg] = h_l0.astype(bf16)

        # layer 1: fused [h_l0^t ; h_l1^{t-1}] @ [Wih^T ; Whh^T] -> one matmul/step.
        # (inter-layer dropout is identity in eval mode)
        g1 = jnp.dot(xin_ref[...], w1_ref[...], preferred_element_type=f32) + b1_full
        h_l1, c_l1 = gates_to_state(g1, c_l1)
        xin_ref[:, Hp:Hp + Hg] = h_l1.astype(bf16)

        htop_ref[pl.ds(row, Bp), 0:Hg] = h_l1     # f32, tile-aligned dynamic-row store
        return h_l0, c_l0, h_l1, c_l1

    h_l0, c_l0, h_l1, c_l1 = jax.lax.fori_loop(
        0, T, step,
        (h0_ref[0], c0_ref[0], h0_ref[1], c0_ref[1]),
        unroll=min(T, 8))

    # ---- hoisted FC head: one (T*Bp, Hp) @ (Hp, Vp) matmul, lane-dense store ----
    # (output dropout is identity in eval mode; slab cast is off the serial chain)
    out_ref[...] = (jnp.dot(htop_ref[...].astype(bf16), wfc_ref[...],
                            preferred_element_type=f32)
                    + bfc_ref[...]).astype(out_ref.dtype)

    hn_ref[0] = h_l0
    hn_ref[1] = h_l1
    cn_ref[0] = c_l0
    cn_ref[1] = c_l1


# ------------------------------ wrapper ----------------------------------- #
@jax.jit
def lstm_char_rnn_forward(x, hidden, params):
    """
    x:      (B, T, V) float32 one-hot input (batch_first, like PyTorch)
    hidden: (h0, c0) each (n_layers=2, B, H)
    params: kernel-ready packed params from pack_params().
    Returns (out, (hn, cn)) with out of shape (B*T, V)  [== fc(lstm_out.view(-1,H))].
    """
    B, T, V = x.shape
    h0, c0 = hidden
    L, _, H = h0.shape
    assert L == 2, "kernel is specialized for n_layers=2"

    Hp, Hg, Gp, Vp = _dims(H, V)
    Bp = _round_up(max(B, 8), 8)

    # Pad to vreg tiles and flatten time-major: (B,T,V) -> (T*Bp, Vp) bf16.
    xp = jnp.pad(x, ((0, Bp - B), (0, 0), (0, Vp - V)))
    x_tm = jnp.transpose(xp, (1, 0, 2)).reshape(T * Bp, Vp).astype(jnp.bfloat16)
    h0p = jnp.pad(h0, ((0, 0), (0, Bp - B), (0, Hg - H)))
    c0p = jnp.pad(c0, ((0, 0), (0, Bp - B), (0, Hg - H)))

    full = lambda shape: pl.BlockSpec(shape, lambda t: tuple(0 for _ in shape))

    grid_spec = pltpu.PrefetchScalarGridSpec(
        num_scalar_prefetch=0,
        grid=(1,),                                     # whole problem resident in VMEM
        in_specs=[
            full((T * Bp, Vp)),                        # x (time-major, bf16)
            full((L, Bp, Hg)),                         # h0
            full((L, Bp, Hg)),                         # c0
            full((Vp, Gp)),                            # W_ih_l0^T (bf16)
            full((Hp, Gp)),                            # W_hh_l0^T (bf16)
            full((1, Gp)),                             # b_l0 (f32)
            full((2 * Hp, Gp)),                        # [W_ih_l1^T ; W_hh_l1^T] (bf16)
            full((1, Gp)),                             # b_l1 (f32)
            full((Hp, Vp)),                            # W_fc^T (bf16)
            full((1, Vp)),                             # b_fc (f32)
        ],
        out_specs=[
            full((T * Bp, Vp)),                        # time-major logits
            full((L, Bp, Hg)),                         # h_n
            full((L, Bp, Hg)),                         # c_n
        ],
        scratch_shapes=[
            pltpu.VMEM((T * Bp, Gp), jnp.float32),     # hoisted layer-0 x-projection
            pltpu.VMEM((T * Bp, Hp), jnp.float32),     # top-layer h history (f32: aligned stores)
            pltpu.VMEM((Bp, 2 * Hp), jnp.bfloat16),    # persistent [h_l0 ; h_l1] bf16 operand
        ],
    )

    out_tm, hn_p, cn_p = pl.pallas_call(
        _lstm_kernel,
        grid_spec=grid_spec,
        out_shape=(
            jax.ShapeDtypeStruct((T * Bp, Vp), jnp.float32),
            jax.ShapeDtypeStruct((L, Bp, Hg), jnp.float32),
            jax.ShapeDtypeStruct((L, Bp, Hg), jnp.float32),
        ),
        compiler_params=pltpu.CompilerParams(
            dimension_semantics=("arbitrary",),
            vmem_limit_bytes=32 * 1024 * 1024,         # explicit budget; fits all gens
        ),
    )(x_tm, h0p, c0p,
      params["w0x"], params["w0h"], params["b0"],
      params["w1"], params["b1"],
      params["wfc"], params["bfc"])

    # time-major (T,Bp,Vp) -> batch-major (B*T, V), matching r_output.view(-1,H)->fc
    out = jnp.transpose(out_tm.reshape(T, Bp, Vp)[:, :B, :V], (1, 0, 2)).reshape(B * T, V)
    hn = hn_p[:, :B, :H]
    cn = cn_p[:, :B, :H]
    return out, (hn, cn)


# ------------------------ deterministic param init ------------------------ #
def init_raw_params(key, vocab_size, n_hidden):
    """PyTorch-shaped f32 parameters (nn.LSTM / nn.Linear layout)."""
    k = 1.0 / jnp.sqrt(jnp.float32(n_hidden))
    keys = jax.random.split(key, 10)
    u = lambda kk, shape: jax.random.uniform(kk, shape, jnp.float32, -k, k)
    return {
        "w_ih0": u(keys[0], (4 * n_hidden, vocab_size)),
        "w_hh0": u(keys[1], (4 * n_hidden, n_hidden)),
        "b_ih0": u(keys[2], (4 * n_hidden,)),
        "b_hh0": u(keys[3], (4 * n_hidden,)),
        "w_ih1": u(keys[4], (4 * n_hidden, n_hidden)),
        "w_hh1": u(keys[5], (4 * n_hidden, n_hidden)),
        "b_ih1": u(keys[6], (4 * n_hidden,)),
        "b_hh1": u(keys[7], (4 * n_hidden,)),
        "w_fc":  u(keys[8], (vocab_size, n_hidden)),
        "b_fc":  u(keys[9], (vocab_size,)),
    }


def pack_params(raw, n_hidden, vocab_size):
    """Pad to (sublane, lane) tiles with a packed gate axis when 4H <= 128 (else the
    per-gate-padded layout), transpose for row-major matmuls, pre-stack layer-1
    [Wih;Whh], fuse biases, cast matmul weights to bf16."""
    H, V = n_hidden, vocab_size
    Hp, Hg, Gp, Vp = _dims(H, V)
    bf = jnp.bfloat16

    def pad_gate_w(w, in_dim, in_pad):          # (4H, in) -> (Gp, in_pad)
        w4 = w.reshape(4, H, in_dim)
        w4 = jnp.pad(w4, ((0, 0), (0, Hg - H), (0, in_pad - in_dim)))
        w4 = w4.reshape(4 * Hg, in_pad)
        return jnp.pad(w4, ((0, Gp - 4 * Hg), (0, 0)))

    def pad_gate_b(b):                          # (4H,) -> (1, Gp)
        b4 = jnp.pad(b.reshape(4, H), ((0, 0), (0, Hg - H))).reshape(4 * Hg)
        return jnp.pad(b4, (0, Gp - 4 * Hg))[None, :]

    w0x = pad_gate_w(raw["w_ih0"], V, Vp).T.astype(bf)                   # (Vp, Gp)
    w0h = pad_gate_w(raw["w_hh0"], H, Hp).T.astype(bf)                   # (Hp, Gp)
    b0 = pad_gate_b(raw["b_ih0"] + raw["b_hh0"])                         # (1, Gp) f32
    w1 = jnp.concatenate([pad_gate_w(raw["w_ih1"], H, Hp).T,
                          pad_gate_w(raw["w_hh1"], H, Hp).T],
                         axis=0).astype(bf)                              # (2Hp, Gp)
    b1 = pad_gate_b(raw["b_ih1"] + raw["b_hh1"])                         # (1, Gp) f32
    wfc = jnp.pad(raw["w_fc"], ((0, Vp - V), (0, Hp - H))).T.astype(bf)  # (Hp, Vp)
    bfc = jnp.pad(raw["b_fc"], (0, Vp - V))[None, :]                     # (1, Vp) f32
    return {"w0x": w0x, "w0h": w0h, "b0": b0, "w1": w1, "b1": b1,
            "wfc": wfc, "bfc": bfc}


# ----------------------------- pure-JAX ref -------------------------------- #
def ref_forward(x, hidden, raw):
    """Unpadded reference with the same numerics (bf16 matmul operands, f32 acc)."""
    B, T, V = x.shape
    h, c = hidden
    H = h.shape[-1]
    bf, f32 = jnp.bfloat16, jnp.float32

    w0x = raw["w_ih0"].T.astype(bf)
    w0h = raw["w_hh0"].T.astype(bf)
    b0 = (raw["b_ih0"] + raw["b_hh0"])[None, :]
    w1 = jnp.concatenate([raw["w_ih1"].T, raw["w_hh1"].T], axis=0).astype(bf)
    b1 = (raw["b_ih1"] + raw["b_hh1"])[None, :]
    wfc = raw["w_fc"].T.astype(bf)
    bfc = raw["b_fc"][None, :]

    def gates_to_state(gates, c):
        i = jax.nn.sigmoid(gates[:, 0 * H:1 * H])
        f = jax.nn.sigmoid(gates[:, 1 * H:2 * H])
        g = jnp.tanh(gates[:, 2 * H:3 * H])
        o = jax.nn.sigmoid(gates[:, 3 * H:4 * H])
        c_new = f * c + i * g
        return o * jnp.tanh(c_new), c_new

    hs = [h[0], h[1]]
    cs = [c[0], c[1]]
    x_bf = x.astype(bf)
    tops = []
    for t in range(T):
        g0 = (jnp.dot(x_bf[:, t, :], w0x, preferred_element_type=f32) + b0
              + jnp.dot(hs[0].astype(bf), w0h, preferred_element_type=f32))
        hs[0], cs[0] = gates_to_state(g0, cs[0])
        xin = jnp.concatenate([hs[0], hs[1]], axis=-1).astype(bf)
        g1 = jnp.dot(xin, w1, preferred_element_type=f32) + b1
        hs[1], cs[1] = gates_to_state(g1, cs[1])
        tops.append(hs[1])
    r = jnp.stack(tops, axis=1)                                    # (B, T, H)
    out = (jnp.dot(r.reshape(-1, H).astype(bf), wfc, preferred_element_type=f32)
           + bfc)
    return out, (jnp.stack(hs), jnp.stack(cs))


# --------------------------------- main ------------------------------------ #
if __name__ == "__main__":
    B, T, H, V, L = 4, 8, 32, 16, 2   # batch, seq, n_hidden, len(vocab), n_layers

    key = jax.random.PRNGKey(0)
    kx, kp = jax.random.split(key)

    # synthetic one-hot character input (B, T, V), like nn.LSTM(len(vocab), ...)
    ids = jax.random.randint(kx, (B, T), 0, V)
    x = jax.nn.one_hot(ids, V, dtype=jnp.float32)

    raw = init_raw_params(kp, V, H)
    params = pack_params(raw, H, V)

    # init_hidden: zeros of shape (n_layers, B, n_hidden)
    h0 = jnp.zeros((L, B, H), jnp.float32)
    c0 = jnp.zeros((L, B, H), jnp.float32)

    out, (hn, cn) = lstm_char_rnn_forward(x, (h0, c0), params)
    jax.block_until_ready((out, hn, cn))

    # correctness check against pure-JAX reference (same bf16/f32 numerics)
    out_r, (hn_r, cn_r) = ref_forward(x, (h0, c0), raw)
    assert out.shape == (B * T, V) and hn.shape == (L, B, H) and cn.shape == (L, B, H)
    assert jnp.allclose(out, out_r, atol=2e-3, rtol=2e-3), float(jnp.max(jnp.abs(out - out_r)))
    assert jnp.allclose(hn, hn_r, atol=2e-3, rtol=2e-3)
    assert jnp.allclose(cn, cn_r, atol=2e-3, rtol=2e-3)

    print("KERNEL_OK")
</pallas_src>

<mosaic_0001>
module attributes {stable_mosaic.version = 11 : i64} {
  func.func @_lstm_kernel(%arg0: i32, %arg1: memref<64x128xbf16, #tpu.memory_space<vmem>>, %arg2: memref<2x8x32xf32, #tpu.memory_space<vmem>>, %arg3: memref<2x8x32xf32, #tpu.memory_space<vmem>>, %arg4: memref<128x128xbf16, #tpu.memory_space<vmem>>, %arg5: memref<128x128xbf16, #tpu.memory_space<vmem>>, %arg6: memref<1x128xf32, #tpu.memory_space<vmem>>, %arg7: memref<256x128xbf16, #tpu.memory_space<vmem>>, %arg8: memref<1x128xf32, #tpu.memory_space<vmem>>, %arg9: memref<128x128xbf16, #tpu.memory_space<vmem>>, %arg10: memref<1x128xf32, #tpu.memory_space<vmem>>, %arg11: memref<64x128xf32, #tpu.memory_space<vmem>>, %arg12: memref<2x8x32xf32, #tpu.memory_space<vmem>>, %arg13: memref<2x8x32xf32, #tpu.memory_space<vmem>>, %arg14: memref<64x128xf32, #tpu.memory_space<vmem>>, %arg15: memref<64x128xf32, #tpu.memory_space<vmem>>, %arg16: memref<8x256xbf16, #tpu.memory_space<vmem>>) attributes {dimension_semantics = [#tpu.dimension_semantics<arbitrary>], iteration_bounds = array<i64: 1>, scalar_prefetch = 0 : i64, scratch_operands = 3 : i64, tpu.core_type = #tpu.core_type<tc>, window_params = [{pipeline_mode = #tpu.pipeline_mode<synchronous>, transform_indices = @transform_0, window_bounds = array<i64: 64, 128>}, {pipeline_mode = #tpu.pipeline_mode<synchronous>, transform_indices = @transform_1, window_bounds = array<i64: 2, 8, 32>}, {pipeline_mode = #tpu.pipeline_mode<synchronous>, transform_indices = @transform_2, window_bounds = array<i64: 2, 8, 32>}, {pipeline_mode = #tpu.pipeline_mode<synchronous>, transform_indices = @transform_3, window_bounds = array<i64: 128, 128>}, {pipeline_mode = #tpu.pipeline_mode<synchronous>, transform_indices = @transform_4, window_bounds = array<i64: 128, 128>}, {pipeline_mode = #tpu.pipeline_mode<synchronous>, transform_indices = @transform_5, window_bounds = array<i64: 1, 128>}, {pipeline_mode = #tpu.pipeline_mode<synchronous>, transform_indices = @transform_6, window_bounds = array<i64: 256, 128>}, {pipeline_mode = #tpu.pipeline_mode<synchronous>, transform_indices = @transform_7, window_bounds = array<i64: 1, 128>}, {pipeline_mode = #tpu.pipeline_mode<synchronous>, transform_indices = @transform_8, window_bounds = array<i64: 128, 128>}, {pipeline_mode = #tpu.pipeline_mode<synchronous>, transform_indices = @transform_9, window_bounds = array<i64: 1, 128>}, {pipeline_mode = #tpu.pipeline_mode<synchronous>, transform_indices = @transform_10, window_bounds = array<i64: 64, 128>}, {pipeline_mode = #tpu.pipeline_mode<synchronous>, transform_indices = @transform_11, window_bounds = array<i64: 2, 8, 32>}, {pipeline_mode = #tpu.pipeline_mode<synchronous>, transform_indices = @transform_12, window_bounds = array<i64: 2, 8, 32>}]} {
    %c0 = arith.constant 0 : index
    %c0_0 = arith.constant 0 : index
    %0 = vector.load %arg1[%c0, %c0_0] : memref<64x128xbf16, #tpu.memory_space<vmem>>, vector<64x128xbf16>
    %c0_1 = arith.constant 0 : index
    %c0_2 = arith.constant 0 : index
    %1 = vector.load %arg4[%c0_1, %c0_2] : memref<128x128xbf16, #tpu.memory_space<vmem>>, vector<128x128xbf16>
    %cst = arith.constant dense<0.000000e+00> : vector<64x128xf32>
    %2 = tpu.matmul %0, %1, %cst {dimension_numbers = #tpu.dot_dimension_numbers<[1], [0], [0], [1], [0, 0, 1, 1], [], []>} : vector<64x128xbf16>, vector<128x128xbf16>, vector<64x128xf32> -> vector<64x128xf32>
    %c0_3 = arith.constant 0 : index
    %c0_4 = arith.constant 0 : index
    %3 = vector.load %arg6[%c0_3, %c0_4] : memref<1x128xf32, #tpu.memory_space<vmem>>, vector<1x128xf32>
    %4 = vector.broadcast %3 : vector<1x128xf32> to vector<64x128xf32>
    %5 = arith.addf %2, %4 : vector<64x128xf32>
    %c0_5 = arith.constant 0 : index
    %c0_6 = arith.constant 0 : index
    %6 = vector.load %arg14[%c0_5, %c0_6] : memref<64x128xf32, #tpu.memory_space<vmem>>, vector<64x128xf32>
    tpu.vector_store %arg14[%c0_5, %c0_6], %5 {strides = array<i32>} : memref<64x128xf32, #tpu.memory_space<vmem>>, vector<64x128xf32>,
    %c0_7 = arith.constant 0 : index
    %c0_8 = arith.constant 0 : index
    %7 = vector.load %arg8[%c0_7, %c0_8] : memref<1x128xf32, #tpu.memory_space<vmem>>, vector<1x128xf32>
    %8 = vector.shape_cast %7 : vector<1x128xf32> to vector<1x128xf32>
    %9 = vector.broadcast %8 : vector<1x128xf32> to vector<8x128xf32>
    %cst_9 = arith.constant 0.000000e+00 : bf16
    %10 = vector.broadcast %cst_9 : bf16 to vector<8x256xbf16>
    %c0_10 = arith.constant 0 : index
    %c0_11 = arith.constant 0 : index
    %11 = vector.load %arg16[%c0_10, %c0_11] : memref<8x256xbf16, #tpu.memory_space<vmem>>, vector<8x256xbf16>
    tpu.vector_store %arg16[%c0_10, %c0_11], %10 {strides = array<i32>} : memref<8x256xbf16, #tpu.memory_space<vmem>>, vector<8x256xbf16>,
    %c0_12 = arith.constant 0 : index
    %c0_13 = arith.constant 0 : index
    %c0_14 = arith.constant 0 : index
    %12 = vector.load %arg2[%c0_12, %c0_13, %c0_14] : memref<2x8x32xf32, #tpu.memory_space<vmem>>, vector<1x8x32xf32>
    %13 = vector.shape_cast %12 : vector<1x8x32xf32> to vector<8x32xf32>
    %14 = arith.truncf %13 : vector<8x32xf32> to vector<8x32xbf16>
    %c0_15 = arith.constant 0 : index
    %c0_16 = arith.constant 0 : index
    %15 = vector.load %arg16[%c0_15, %c0_16] : memref<8x256xbf16, #tpu.memory_space<vmem>>, vector<8x32xbf16>
    tpu.vector_store %arg16[%c0_15, %c0_16], %14 {strides = array<i32>} : memref<8x256xbf16, #tpu.memory_space<vmem>>, vector<8x32xbf16>,
    %c1 = arith.constant 1 : index
    %c0_17 = arith.constant 0 : index
    %c0_18 = arith.constant 0 : index
    %16 = vector.load %arg2[%c1, %c0_17, %c0_18] : memref<2x8x32xf32, #tpu.memory_space<vmem>>, vector<1x8x32xf32>
    %17 = vector.shape_cast %16 : vector<1x8x32xf32> to vector<8x32xf32>
    %18 = arith.truncf %17 : vector<8x32xf32> to vector<8x32xbf16>
    %c0_19 = arith.constant 0 : index
    %c128 = arith.constant 128 : index
    %19 = vector.load %arg16[%c0_19, %c128] : memref<8x256xbf16, #tpu.memory_space<vmem>>, vector<8x32xbf16>
    tpu.vector_store %arg16[%c0_19, %c128], %18 {strides = array<i32>} : memref<8x256xbf16, #tpu.memory_space<vmem>>, vector<8x32xbf16>,
    %cst_20 = arith.constant 0.000000e+00 : f32
    %20 = vector.broadcast %cst_20 : f32 to vector<64x128xf32>
    %c0_21 = arith.constant 0 : index
    %c0_22 = arith.constant 0 : index
    %21 = vector.load %arg15[%c0_21, %c0_22] : memref<64x128xf32, #tpu.memory_space<vmem>>, vector<64x128xf32>
    tpu.vector_store %arg15[%c0_21, %c0_22], %20 {strides = array<i32>} : memref<64x128xf32, #tpu.memory_space<vmem>>, vector<64x128xf32>,
    %c0_23 = arith.constant 0 : index
    %c0_24 = arith.constant 0 : index
    %c0_25 = arith.constant 0 : index
    %22 = vector.load %arg2[%c0_23, %c0_24, %c0_25] : memref<2x8x32xf32, #tpu.memory_space<vmem>>, vector<1x8x32xf32>
    %23 = vector.shape_cast %22 : vector<1x8x32xf32> to vector<8x32xf32>
    %c0_26 = arith.constant 0 : index
    %c0_27 = arith.constant 0 : index
    %c0_28 = arith.constant 0 : index
    %24 = vector.load %arg3[%c0_26, %c0_27, %c0_28] : memref<2x8x32xf32, #tpu.memory_space<vmem>>, vector<1x8x32xf32>
    %25 = vector.shape_cast %24 : vector<1x8x32xf32> to vector<8x32xf32>
    %c1_29 = arith.constant 1 : index
    %c0_30 = arith.constant 0 : index
    %c0_31 = arith.constant 0 : index
    %26 = vector.load %arg2[%c1_29, %c0_30, %c0_31] : memref<2x8x32xf32, #tpu.memory_space<vmem>>, vector<1x8x32xf32>
    %27 = vector.shape_cast %26 : vector<1x8x32xf32> to vector<8x32xf32>
    %c1_32 = arith.constant 1 : index
    %c0_33 = arith.constant 0 : index
    %c0_34 = arith.constant 0 : index
    %28 = vector.load %arg3[%c1_32, %c0_33, %c0_34] : memref<2x8x32xf32, #tpu.memory_space<vmem>>, vector<1x8x32xf32>
    %29 = vector.shape_cast %28 : vector<1x8x32xf32> to vector<8x32xf32>
    %c0_i32 = arith.constant 0 : i32
    %c8_i32 = arith.constant 8 : i32
    %30 = arith.muli %c0_i32, %c8_i32 : i32
    %31 = tpu.assume_multiple %30, 8 : i32
    %32 = arith.index_cast %31 : i32 to index
    %c0_35 = arith.constant 0 : index
    %33 = vector.load %arg14[%32, %c0_35] : memref<64x128xf32, #tpu.memory_space<vmem>>, vector<8x128xf32>
    %c0_36 = arith.constant 0 : index
    %c0_37 = arith.constant 0 : index
    %34 = vector.load %arg16[%c0_36, %c0_37] : memref<8x256xbf16, #tpu.memory_space<vmem>>, vector<8x128xbf16>
    %c0_38 = arith.constant 0 : index
    %c0_39 = arith.constant 0 : index
    %35 = vector.load %arg5[%c0_38, %c0_39] : memref<128x128xbf16, #tpu.memory_space<vmem>>, vector<128x128xbf16>
    %cst_40 = arith.constant dense<0.000000e+00> : vector<8x128xf32>
    %36 = tpu.matmul %34, %35, %cst_40 {dimension_numbers = #tpu.dot_dimension_numbers<[1], [0], [0], [1], [0, 0, 1, 1], [], []>} : vector<8x128xbf16>, vector<128x128xbf16>, vector<8x128xf32> -> vector<8x128xf32>
    %37 = arith.addf %33, %36 : vector<8x128xf32>
    %38 = arith.negf %37 : vector<8x128xf32>
    %39 = math.exp %38 : vector<8x128xf32>
    %cst_41 = arith.constant 1.000000e+00 : f32
    %40 = vector.broadcast %cst_41 : f32 to vector<8x128xf32>
    %41 = arith.addf %40, %39 : vector<8x128xf32>
    %42 = arith.divf %40, %41 : vector<8x128xf32>
    %43 = math.tanh %37 : vector<8x128xf32>
    %44 = vector.extract_strided_slice %42 {offsets = [0, 0], sizes = [8, 32], strides = [1, 1]} : vector<8x128xf32> to vector<8x32xf32>
    %45 = vector.extract_strided_slice %42 {offsets = [0, 32], sizes = [8, 32], strides = [1, 1]} : vector<8x128xf32> to vector<8x32xf32>
    %46 = vector.extract_strided_slice %43 {offsets = [0, 64], sizes = [8, 32], strides = [1, 1]} : vector<8x128xf32> to vector<8x32xf32>
    %47 = vector.extract_strided_slice %42 {offsets = [0, 96], sizes = [8, 32], strides = [1, 1]} : vector<8x128xf32> to vector<8x32xf32>
    %48 = arith.mulf %45, %25 : vector<8x32xf32>
    %49 = arith.mulf %44, %46 : vector<8x32xf32>
    %50 = arith.addf %48, %49 : vector<8x32xf32>
    %51 = math.tanh %50 : vector<8x32xf32>
    %52 = arith.mulf %47, %51 : vector<8x32xf32>
    %53 = arith.truncf %52 : vector<8x32xf32> to vector<8x32xbf16>
    %c0_42 = arith.constant 0 : index
    %c0_43 = arith.constant 0 : index
    %54 = vector.load %arg16[%c0_42, %c0_43] : memref<8x256xbf16, #tpu.memory_space<vmem>>, vector<8x32xbf16>
    tpu.vector_store %arg16[%c0_42, %c0_43], %53 {strides = array<i32>} : memref<8x256xbf16, #tpu.memory_space<vmem>>, vector<8x32xbf16>,
    %c0_44 = arith.constant 0 : index
    %c0_45 = arith.constant 0 : index
    %55 = vector.load %arg16[%c0_44, %c0_45] : memref<8x256xbf16, #tpu.memory_space<vmem>>, vector<8x256xbf16>
    %c0_46 = arith.constant 0 : index
    %c0_47 = arith.constant 0 : index
    %56 = vector.load %arg7[%c0_46, %c0_47] : memref<256x128xbf16, #tpu.memory_space<vmem>>, vector<256x128xbf16>
    %cst_48 = arith.constant dense<0.000000e+00> : vector<8x128xf32>
    %57 = tpu.matmul %55, %56, %cst_48 {dimension_numbers = #tpu.dot_dimension_numbers<[1], [0], [0], [1], [0, 0, 1, 1], [], []>} : vector<8x256xbf16>, vector<256x128xbf16>, vector<8x128xf32> -> vector<8x128xf32>
    %58 = arith.addf %57, %9 : vector<8x128xf32>
    %59 = arith.negf %58 : vector<8x128xf32>
    %60 = math.exp %59 : vector<8x128xf32>
    %cst_49 = arith.constant 1.000000e+00 : f32
    %61 = vector.broadcast %cst_49 : f32 to vector<8x128xf32>
    %62 = arith.addf %61, %60 : vector<8x128xf32>
    %63 = arith.divf %61, %62 : vector<8x128xf32>
    %64 = math.tanh %58 : vector<8x128xf32>
    %65 = vector.extract_strided_slice %63 {offsets = [0, 0], sizes = [8, 32], strides = [1, 1]} : vector<8x128xf32> to vector<8x32xf32>
    %66 = vector.extract_strided_slice %63 {offsets = [0, 32], sizes = [8, 32], strides = [1, 1]} : vector<8x128xf32> to vector<8x32xf32>
    %67 = vector.extract_strided_slice %64 {offsets = [0, 64], sizes = [8, 32], strides = [1, 1]} : vector<8x128xf32> to vector<8x32xf32>
    %68 = vector.extract_strided_slice %63 {offsets = [0, 96], sizes = [8, 32], strides = [1, 1]} : vector<8x128xf32> to vector<8x32xf32>
    %69 = arith.mulf %66, %29 : vector<8x32xf32>
    %70 = arith.mulf %65, %67 : vector<8x32xf32>
    %71 = arith.addf %69, %70 : vector<8x32xf32>
    %72 = math.tanh %71 : vector<8x32xf32>
    %73 = arith.mulf %68, %72 : vector<8x32xf32>
    %74 = arith.truncf %73 : vector<8x32xf32> to vector<8x32xbf16>
    %c0_50 = arith.constant 0 : index
    %c128_51 = arith.constant 128 : index
    %75 = vector.load %arg16[%c0_50, %c128_51] : memref<8x256xbf16, #tpu.memory_space<vmem>>, vector<8x32xbf16>
    tpu.vector_store %arg16[%c0_50, %c128_51], %74 {strides = array<i32>} : memref<8x256xbf16, #tpu.memory_space<vmem>>, vector<8x32xbf16>,
    %76 = arith.index_cast %31 : i32 to index
    %c0_52 = arith.constant 0 : index
    %77 = vector.load %arg15[%76, %c0_52] : memref<64x128xf32, #tpu.memory_space<vmem>>, vector<8x32xf32>
    tpu.vector_store %arg15[%76, %c0_52], %73 {strides = array<i32>} : memref<64x128xf32, #tpu.memory_space<vmem>>, vector<8x32xf32>,
    %c1_i32 = arith.constant 1 : i32
    %c8_i32_53 = arith.constant 8 : i32
    %78 = arith.muli %c1_i32, %c8_i32_53 : i32
    %79 = tpu.assume_multiple %78, 8 : i32
    %80 = arith.index_cast %79 : i32 to index
    %c0_54 = arith.constant 0 : index
    %81 = vector.load %arg14[%80, %c0_54] : memref<64x128xf32, #tpu.memory_space<vmem>>, vector<8x128xf32>
    %c0_55 = arith.constant 0 : index
    %c0_56 = arith.constant 0 : index
    %82 = vector.load %arg16[%c0_55, %c0_56] : memref<8x256xbf16, #tpu.memory_space<vmem>>, vector<8x128xbf16>
    %c0_57 = arith.constant 0 : index
    %c0_58 = arith.constant 0 : index
    %83 = vector.load %arg5[%c0_57, %c0_58] : memref<128x128xbf16, #tpu.memory_space<vmem>>, vector<128x128xbf16>
    %cst_59 = arith.constant dense<0.000000e+00> : vector<8x128xf32>
    %84 = tpu.matmul %82, %83, %cst_59 {dimension_numbers = #tpu.dot_dimension_numbers<[1], [0], [0], [1], [0, 0, 1, 1], [], []>} : vector<8x128xbf16>, vector<128x128xbf16>, vector<8x128xf32> -> vector<8x128xf32>
    %85 = arith.addf %81, %84 : vector<8x128xf32>
    %86 = arith.negf %85 : vector<8x128xf32>
    %87 = math.exp %86 : vector<8x128xf32>
    %cst_60 = arith.constant 1.000000e+00 : f32
    %88 = vector.broadcast %cst_60 : f32 to vector<8x128xf32>
    %89 = arith.addf %88, %87 : vector<8x128xf32>
    %90 = arith.divf %88, %89 : vector<8x128xf32>
    %91 = math.tanh %85 : vector<8x128xf32>
    %92 = vector.extract_strided_slice %90 {offsets = [0, 0], sizes = [8, 32], strides = [1, 1]} : vector<8x128xf32> to vector<8x32xf32>
    %93 = vector.extract_strided_slice %90 {offsets = [0, 32], sizes = [8, 32], strides = [1, 1]} : vector<8x128xf32> to vector<8x32xf32>
    %94 = vector.extract_strided_slice %91 {offsets = [0, 64], sizes = [8, 32], strides = [1, 1]} : vector<8x128xf32> to vector<8x32xf32>
    %95 = vector.extract_strided_slice %90 {offsets = [0, 96], sizes = [8, 32], strides = [1, 1]} : vector<8x128xf32> to vector<8x32xf32>
    %96 = arith.mulf %93, %50 : vector<8x32xf32>
    %97 = arith.mulf %92, %94 : vector<8x32xf32>
    %98 = arith.addf %96, %97 : vector<8x32xf32>
    %99 = math.tanh %98 : vector<8x32xf32>
    %100 = arith.mulf %95, %99 : vector<8x32xf32>
    %101 = arith.truncf %100 : vector<8x32xf32> to vector<8x32xbf16>
    %c0_61 = arith.constant 0 : index
    %c0_62 = arith.constant 0 : index
    %102 = vector.load %arg16[%c0_61, %c0_62] : memref<8x256xbf16, #tpu.memory_space<vmem>>, vector<8x32xbf16>
    tpu.vector_store %arg16[%c0_61, %c0_62], %101 {strides = array<i32>} : memref<8x256xbf16, #tpu.memory_space<vmem>>, vector<8x32xbf16>,
    %c0_63 = arith.constant 0 : index
    %c0_64 = arith.constant 0 : index
    %103 = vector.load %arg16[%c0_63, %c0_64] : memref<8x256xbf16, #tpu.memory_space<vmem>>, vector<8x256xbf16>
    %c0_65 = arith.constant 0 : index
    %c0_66 = arith.constant 0 : index
    %104 = vector.load %arg7[%c0_65, %c0_66] : memref<256x128xbf16, #tpu.memory_space<vmem>>, vector<256x128xbf16>
    %cst_67 = arith.constant dense<0.000000e+00> : vector<8x128xf32>
    %105 = tpu.matmul %103, %104, %cst_67 {dimension_numbers = #tpu.dot_dimension_numbers<[1], [0], [0], [1], [0, 0, 1, 1], [], []>} : vector<8x256xbf16>, vector<256x128xbf16>, vector<8x128xf32> -> vector<8x128xf32>
    %106 = arith.addf %105, %9 : vector<8x128xf32>
    %107 = arith.negf %106 : vector<8x128xf32>
    %108 = math.exp %107 : vector<8x128xf32>
    %cst_68 = arith.constant 1.000000e+00 : f32
    %109 = vector.broadcast %cst_68 : f32 to vector<8x128xf32>
    %110 = arith.addf %109, %108 : vector<8x128xf32>
    %111 = arith.divf %109, %110 : vector<8x128xf32>
    %112 = math.tanh %106 : vector<8x128xf32>
    %113 = vector.extract_strided_slice %111 {offsets = [0, 0], sizes = [8, 32], strides = [1, 1]} : vector<8x128xf32> to vector<8x32xf32>
    %114 = vector.extract_strided_slice %111 {offsets = [0, 32], sizes = [8, 32], strides = [1, 1]} : vector<8x128xf32> to vector<8x32xf32>
    %115 = vector.extract_strided_slice %112 {offsets = [0, 64], sizes = [8, 32], strides = [1, 1]} : vector<8x128xf32> to vector<8x32xf32>
    %116 = vector.extract_strided_slice %111 {offsets = [0, 96], sizes = [8, 32], strides = [1, 1]} : vector<8x128xf32> to vector<8x32xf32>
    %117 = arith.mulf %114, %71 : vector<8x32xf32>
    %118 = arith.mulf %113, %115 : vector<8x32xf32>
    %119 = arith.addf %117, %118 : vector<8x32xf32>
    %120 = math.tanh %119 : vector<8x32xf32>
    %121 = arith.mulf %116, %120 : vector<8x32xf32>
    %122 = arith.truncf %121 : vector<8x32xf32> to vector<8x32xbf16>
    %c0_69 = arith.constant 0 : index
    %c128_70 = arith.constant 128 : index
    %123 = vector.load %arg16[%c0_69, %c128_70] : memref<8x256xbf16, #tpu.memory_space<vmem>>, vector<8x32xbf16>
    tpu.vector_store %arg16[%c0_69, %c128_70], %122 {strides = array<i32>} : memref<8x256xbf16, #tpu.memory_space<vmem>>, vector<8x32xbf16>,
    %124 = arith.index_cast %79 : i32 to index
    %c0_71 = arith.constant 0 : index
    %125 = vector.load %arg15[%124, %c0_71] : memref<64x128xf32, #tpu.memory_space<vmem>>, vector<8x32xf32>
    tpu.vector_store %arg15[%124, %c0_71], %121 {strides = array<i32>} : memref<64x128xf32, #tpu.memory_space<vmem>>, vector<8x32xf32>,
    %c2_i32 = arith.constant 2 : i32
    %c8_i32_72 = arith.constant 8 : i32
    %126 = arith.muli %c2_i32, %c8_i32_72 : i32
    %127 = tpu.assume_multiple %126, 8 : i32
    %128 = arith.index_cast %127 : i32 to index
    %c0_73 = arith.constant 0 : index
    %129 = vector.load %arg14[%128, %c0_73] : memref<64x128xf32, #tpu.memory_space<vmem>>, vector<8x128xf32>
    %c0_74 = arith.constant 0 : index
    %c0_75 = arith.constant 0 : index
    %130 = vector.load %arg16[%c0_74, %c0_75] : memref<8x256xbf16, #tpu.memory_space<vmem>>, vector<8x128xbf16>
    %c0_76 = arith.constant 0 : index
    %c0_77 = arith.constant 0 : index
    %131 = vector.load %arg5[%c0_76, %c0_77] : memref<128x128xbf16, #tpu.memory_space<vmem>>, vector<128x128xbf16>
    %cst_78 = arith.constant dense<0.000000e+00> : vector<8x128xf32>
    %132 = tpu.matmul %130, %131, %cst_78 {dimension_numbers = #tpu.dot_dimension_numbers<[1], [0], [0], [1], [0, 0, 1, 1], [], []>} : vector<8x128xbf16>, vector<128x128xbf16>, vector<8x128xf32> -> vector<8x128xf32>
    %133 = arith.addf %129, %132 : vector<8x128xf32>
    %134 = arith.negf %133 : vector<8x128xf32>
    %135 = math.exp %134 : vector<8x128xf32>
    %cst_79 = arith.constant 1.000000e+00 : f32
    %136 = vector.broadcast %cst_79 : f32 to vector<8x128xf32>
    %137 = arith.addf %136, %135 : vector<8x128xf32>
    %138 = arith.divf %136, %137 : vector<8x128xf32>
    %139 = math.tanh %133 : vector<8x128xf32>
    %140 = vector.extract_strided_slice %138 {offsets = [0, 0], sizes = [8, 32], strides = [1, 1]} : vector<8x128xf32> to vector<8x32xf32>
    %141 = vector.extract_strided_slice %138 {offsets = [0, 32], sizes = [8, 32], strides = [1, 1]} : vector<8x128xf32> to vector<8x32xf32>
    %142 = vector.extract_strided_slice %139 {offsets = [0, 64], sizes = [8, 32], strides = [1, 1]} : vector<8x128xf32> to vector<8x32xf32>
    %143 = vector.extract_strided_slice %138 {offsets = [0, 96], sizes = [8, 32], strides = [1, 1]} : vector<8x128xf32> to vector<8x32xf32>
    %144 = arith.mulf %141, %98 : vector<8x32xf32>
    %145 = arith.mulf %140, %142 : vector<8x32xf32>
    %146 = arith.addf %144, %145 : vector<8x32xf32>
    %147 = math.tanh %146 : vector<8x32xf32>
    %148 = arith.mulf %143, %147 : vector<8x32xf32>
    %149 = arith.truncf %148 : vector<8x32xf32> to vector<8x32xbf16>
    %c0_80 = arith.constant 0 : index
    %c0_81 = arith.constant 0 : index
    %150 = vector.load %arg16[%c0_80, %c0_81] : memref<8x256xbf16, #tpu.memory_space<vmem>>, vector<8x32xbf16>
    tpu.vector_store %arg16[%c0_80, %c0_81], %149 {strides = array<i32>} : memref<8x256xbf16, #tpu.memory_space<vmem>>, vector<8x32xbf16>,
    %c0_82 = arith.constant 0 : index
    %c0_83 = arith.constant 0 : index
    %151 = vector.load %arg16[%c0_82, %c0_83] : memref<8x256xbf16, #tpu.memory_space<vmem>>, vector<8x256xbf16>
    %c0_84 = arith.constant 0 : index
    %c0_85 = arith.constant 0 : index
    %152 = vector.load %arg7[%c0_84, %c0_85] : memref<256x128xbf16, #tpu.memory_space<vmem>>, vector<256x128xbf16>
    %cst_86 = arith.constant dense<0.000000e+00> : vector<8x128xf32>
    %153 = tpu.matmul %151, %152, %cst_86 {dimension_numbers = #tpu.dot_dimension_numbers<[1], [0], [0], [1], [0, 0, 1, 1], [], []>} : vector<8x256xbf16>, vector<256x128xbf16>, vector<8x128xf32> -> vector<8x128xf32>
    %154 = arith.addf %153, %9 : vector<8x128xf32>
    %155 = arith.negf %154 : vector<8x128xf32>
    %156 = math.exp %155 : vector<8x128xf32>
    %cst_87 = arith.constant 1.000000e+00 : f32
    %157 = vector.broadcast %cst_87 : f32 to vector<8x128xf32>
    %158 = arith.addf %157, %156 : vector<8x128xf32>
    %159 = arith.divf %157, %158 : vector<8x128xf32>
    %160 = math.tanh %154 : vector<8x128xf32>
    %161 = vector.extract_strided_slice %159 {offsets = [0, 0], sizes = [8, 32], strides = [1, 1]} : vector<8x128xf32> to vector<8x32xf32>
    %162 = vector.extract_strided_slice %159 {offsets = [0, 32], sizes = [8, 32], strides = [1, 1]} : vector<8x128xf32> to vector<8x32xf32>
    %163 = vector.extract_strided_slice %160 {offsets = [0, 64], sizes = [8, 32], strides = [1, 1]} : vector<8x128xf32> to vector<8x32xf32>
    %164 = vector.extract_strided_slice %159 {offsets = [0, 96], sizes = [8, 32], strides = [1, 1]} : vector<8x128xf32> to vector<8x32xf32>
    %165 = arith.mulf %162, %119 : vector<8x32xf32>
    %166 = arith.mulf %161, %163 : vector<8x32xf32>
    %167 = arith.addf %165, %166 : vector<8x32xf32>
    %168 = math.tanh %167 : vector<8x32xf32>
    %169 = arith.mulf %164, %168 : vector<8x32xf32>
    %170 = arith.truncf %169 : vector<8x32xf32> to vector<8x32xbf16>
    %c0_88 = arith.constant 0 : index
    %c128_89 = arith.constant 128 : index
    %171 = vector.load %arg16[%c0_88, %c128_89] : memref<8x256xbf16, #tpu.memory_space<vmem>>, vector<8x32xbf16>
    tpu.vector_store %arg16[%c0_88, %c128_89], %170 {strides = array<i32>} : memref<8x256xbf16, #tpu.memory_space<vmem>>, vector<8x32xbf16>,
    %172 = arith.index_cast %127 : i32 to index
    %c0_90 = arith.constant 0 : index
    %173 = vector.load %arg15[%172, %c0_90] : memref<64x128xf32, #tpu.memory_space<vmem>>, vector<8x32xf32>
    tpu.vector_store %arg15[%172, %c0_90], %169 {strides = array<i32>} : memref<64x128xf32, #tpu.memory_space<vmem>>, vector<8x32xf32>,
    %c3_i32 = arith.constant 3 : i32
    %c8_i32_91 = arith.constant 8 : i32
    %174 = arith.muli %c3_i32, %c8_i32_91 : i32
    %175 = tpu.assume_multiple %174, 8 : i32
    %176 = arith.index_cast %175 : i32 to index
    %c0_92 = arith.constant 0 : index
    %177 = vector.load %arg14[%176, %c0_92] : memref<64x128xf32, #tpu.memory_space<vmem>>, vector<8x128xf32>
    %c0_93 = arith.constant 0 : index
    %c0_94 = arith.constant 0 : index
    %178 = vector.load %arg16[%c0_93, %c0_94] : memref<8x256xbf16, #tpu.memory_space<vmem>>, vector<8x128xbf16>
    %c0_95 = arith.constant 0 : index
    %c0_96 = arith.constant 0 : index
    %179 = vector.load %arg5[%c0_95, %c0_96] : memref<128x128xbf16, #tpu.memory_space<vmem>>, vector<128x128xbf16>
    %cst_97 = arith.constant dense<0.000000e+00> : vector<8x128xf32>
    %180 = tpu.matmul %178, %179, %cst_97 {dimension_numbers = #tpu.dot_dimension_numbers<[1], [0], [0], [1], [0, 0, 1, 1], [], []>} : vector<8x128xbf16>, vector<128x128xbf16>, vector<8x128xf32> -> vector<8x128xf32>
    %181 = arith.addf %177, %180 : vector<8x128xf32>
    %182 = arith.negf %181 : vector<8x128xf32>
    %183 = math.exp %182 : vector<8x128xf32>
    %cst_98 = arith.constant 1.000000e+00 : f32
    %184 = vector.broadcast %cst_98 : f32 to vector<8x128xf32>
    %185 = arith.addf %184, %183 : vector<8x128xf32>
    %186 = arith.divf %184, %185 : vector<8x128xf32>
    %187 = math.tanh %181 : vector<8x128xf32>
    %188 = vector.extract_strided_slice %186 {offsets = [0, 0], sizes = [8, 32], strides = [1, 1]} : vector<8x128xf32> to vector<8x32xf32>
    %189 = vector.extract_strided_slice %186 {offsets = [0, 32], sizes = [8, 32], strides = [1, 1]} : vector<8x128xf32> to vector<8x32xf32>
    %190 = vector.extract_strided_slice %187 {offsets = [0, 64], sizes = [8, 32], strides = [1, 1]} : vector<8x128xf32> to vector<8x32xf32>
    %191 = vector.extract_strided_slice %186 {offsets = [0, 96], sizes = [8, 32], strides = [1, 1]} : vector<8x128xf32> to vector<8x32xf32>
    %192 = arith.mulf %189, %146 : vector<8x32xf32>
    %193 = arith.mulf %188, %190 : vector<8x32xf32>
    %194 = arith.addf %192, %193 : vector<8x32xf32>
    %195 = math.tanh %194 : vector<8x32xf32>
    %196 = arith.mulf %191, %195 : vector<8x32xf32>
    %197 = arith.truncf %196 : vector<8x32xf32> to vector<8x32xbf16>
    %c0_99 = arith.constant 0 : index
    %c0_100 = arith.constant 0 : index
    %198 = vector.load %arg16[%c0_99, %c0_100] : memref<8x256xbf16, #tpu.memory_space<vmem>>, vector<8x32xbf16>
    tpu.vector_store %arg16[%c0_99, %c0_100], %197 {strides = array<i32>} : memref<8x256xbf16, #tpu.memory_space<vmem>>, vector<8x32xbf16>,
    %c0_101 = arith.constant 0 : index
    %c0_102 = arith.constant 0 : index
    %199 = vector.load %arg16[%c0_101, %c0_102] : memref<8x256xbf16, #tpu.memory_space<vmem>>, vector<8x256xbf16>
    %c0_103 = arith.constant 0 : index
    %c0_104 = arith.constant 0 : index
    %200 = vector.load %arg7[%c0_103, %c0_104] : memref<256x128xbf16, #tpu.memory_space<vmem>>, vector<256x128xbf16>
    %cst_105 = arith.constant dense<0.000000e+00> : vector<8x128xf32>
    %201 = tpu.matmul %199, %200, %cst_105 {dimension_numbers = #tpu.dot_dimension_numbers<[1], [0], [0], [1], [0, 0, 1, 1], [], []>} : vector<8x256xbf16>, vector<256x128xbf16>, vector<8x128xf32> -> vector<8x128xf32>
    %202 = arith.addf %201, %9 : vector<8x128xf32>
    %203 = arith.negf %202 : vector<8x128xf32>
    %204 = math.exp %203 : vector<8x128xf32>
    %cst_106 = arith.constant 1.000000e+00 : f32
    %205 = vector.broadcast %cst_106 : f32 to vector<8x128xf32>
    %206 = arith.addf %205, %204 : vector<8x128xf32>
    %207 = arith.divf %205, %206 : vector<8x128xf32>
    %208 = math.tanh %202 : vector<8x128xf32>
    %209 = vector.extract_strided_slice %207 {offsets = [0, 0], sizes = [8, 32], strides = [1, 1]} : vector<8x128xf32> to vector<8x32xf32>
    %210 = vector.extract_strided_slice %207 {offsets = [0, 32], sizes = [8, 32], strides = [1, 1]} : vector<8x128xf32> to vector<8x32xf32>
    %211 = vector.extract_strided_slice %208 {offsets = [0, 64], sizes = [8, 32], strides = [1, 1]} : vector<8x128xf32> to vector<8x32xf32>
    %212 = vector.extract_strided_slice %207 {offsets = [0, 96], sizes = [8, 32], strides = [1, 1]} : vector<8x128xf32> to vector<8x32xf32>
    %213 = arith.mulf %210, %167 : vector<8x32xf32>
    %214 = arith.mulf %209, %211 : vector<8x32xf32>
    %215 = arith.addf %213, %214 : vector<8x32xf32>
    %216 = math.tanh %215 : vector<8x32xf32>
    %217 = arith.mulf %212, %216 : vector<8x32xf32>
    %218 = arith.truncf %217 : vector<8x32xf32> to vector<8x32xbf16>
    %c0_107 = arith.constant 0 : index
    %c128_108 = arith.constant 128 : index
    %219 = vector.load %arg16[%c0_107, %c128_108] : memref<8x256xbf16, #tpu.memory_space<vmem>>, vector<8x32xbf16>
    tpu.vector_store %arg16[%c0_107, %c128_108], %218 {strides = array<i32>} : memref<8x256xbf16, #tpu.memory_space<vmem>>, vector<8x32xbf16>,
    %220 = arith.index_cast %175 : i32 to index
    %c0_109 = arith.constant 0 : index
    %221 = vector.load %arg15[%220, %c0_109] : memref<64x128xf32, #tpu.memory_space<vmem>>, vector<8x32xf32>
    tpu.vector_store %arg15[%220, %c0_109], %217 {strides = array<i32>} : memref<64x128xf32, #tpu.memory_space<vmem>>, vector<8x32xf32>,
    %c4_i32 = arith.constant 4 : i32
    %c8_i32_110 = arith.constant 8 : i32
    %222 = arith.muli %c4_i32, %c8_i32_110 : i32
    %223 = tpu.assume_multiple %222, 8 : i32
    %224 = arith.index_cast %223 : i32 to index
    %c0_111 = arith.constant 0 : index
    %225 = vector.load %arg14[%224, %c0_111] : memref<64x128xf32, #tpu.memory_space<vmem>>, vector<8x128xf32>
    %c0_112 = arith.constant 0 : index
    %c0_113 = arith.constant 0 : index
    %226 = vector.load %arg16[%c0_112, %c0_113] : memref<8x256xbf16, #tpu.memory_space<vmem>>, vector<8x128xbf16>
    %c0_114 = arith.constant 0 : index
    %c0_115 = arith.constant 0 : index
    %227 = vector.load %arg5[%c0_114, %c0_115] : memref<128x128xbf16, #tpu.memory_space<vmem>>, vector<128x128xbf16>
    %cst_116 = arith.constant dense<0.000000e+00> : vector<8x128xf32>
    %228 = tpu.matmul %226, %227, %cst_116 {dimension_numbers = #tpu.dot_dimension_numbers<[1], [0], [0], [1], [0, 0, 1, 1], [], []>} : vector<8x128xbf16>, vector<128x128xbf16>, vector<8x128xf32> -> vector<8x128xf32>
    %229 = arith.addf %225, %228 : vector<8x128xf32>
    %230 = arith.negf %229 : vector<8x128xf32>
    %231 = math.exp %230 : vector<8x128xf32>
    %cst_117 = arith.constant 1.000000e+00 : f32
    %232 = vector.broadcast %cst_117 : f32 to vector<8x128xf32>
    %233 = arith.addf %232, %231 : vector<8x128xf32>
    %234 = arith.divf %232, %233 : vector<8x128xf32>
    %235 = math.tanh %229 : vector<8x128xf32>
    %236 = vector.extract_strided_slice %234 {offsets = [0, 0], sizes = [8, 32], strides = [1, 1]} : vector<8x128xf32> to vector<8x32xf32>
    %237 = vector.extract_strided_slice %234 {offsets = [0, 32], sizes = [8, 32], strides = [1, 1]} : vector<8x128xf32> to vector<8x32xf32>
    %238 = vector.extract_strided_slice %235 {offsets = [0, 64], sizes = [8, 32], strides = [1, 1]} : vector<8x128xf32> to vector<8x32xf32>
    %239 = vector.extract_strided_slice %234 {offsets = [0, 96], sizes = [8, 32], strides = [1, 1]} : vector<8x128xf32> to vector<8x32xf32>
    %240 = arith.mulf %237, %194 : vector<8x32xf32>
    %241 = arith.mulf %236, %238 : vector<8x32xf32>
    %242 = arith.addf %240, %241 : vector<8x32xf32>
    %243 = math.tanh %242 : vector<8x32xf32>
    %244 = arith.mulf %239, %243 : vector<8x32xf32>
    %245 = arith.truncf %244 : vector<8x32xf32> to vector<8x32xbf16>
    %c0_118 = arith.constant 0 : index
    %c0_119 = arith.constant 0 : index
    %246 = vector.load %arg16[%c0_118, %c0_119] : memref<8x256xbf16, #tpu.memory_space<vmem>>, vector<8x32xbf16>
    tpu.vector_store %arg16[%c0_118, %c0_119], %245 {strides = array<i32>} : memref<8x256xbf16, #tpu.memory_space<vmem>>, vector<8x32xbf16>,
    %c0_120 = arith.constant 0 : index
    %c0_121 = arith.constant 0 : index
    %247 = vector.load %arg16[%c0_120, %c0_121] : memref<8x256xbf16, #tpu.memory_space<vmem>>, vector<8x256xbf16>
    %c0_122 = arith.constant 0 : index
    %c0_123 = arith.constant 0 : index
    %248 = vector.load %arg7[%c0_122, %c0_123] : memref<256x128xbf16, #tpu.memory_space<vmem>>, vector<256x128xbf16>
    %cst_124 = arith.constant dense<0.000000e+00> : vector<8x128xf32>
    %249 = tpu.matmul %247, %248, %cst_124 {dimension_numbers = #tpu.dot_dimension_numbers<[1], [0], [0], [1], [0, 0, 1, 1], [], []>} : vector<8x256xbf16>, vector<256x128xbf16>, vector<8x128xf32> -> vector<8x128xf32>
    %250 = arith.addf %249, %9 : vector<8x128xf32>
    %251 = arith.negf %250 : vector<8x128xf32>
    %252 = math.exp %251 : vector<8x128xf32>
    %cst_125 = arith.constant 1.000000e+00 : f32
    %253 = vector.broadcast %cst_125 : f32 to vector<8x128xf32>
    %254 = arith.addf %253, %252 : vector<8x128xf32>
    %255 = arith.divf %253, %254 : vector<8x128xf32>
    %256 = math.tanh %250 : vector<8x128xf32>
    %257 = vector.extract_strided_slice %255 {offsets = [0, 0], sizes = [8, 32], strides = [1, 1]} : vector<8x128xf32> to vector<8x32xf32>
    %258 = vector.extract_strided_slice %255 {offsets = [0, 32], sizes = [8, 32], strides = [1, 1]} : vector<8x128xf32> to vector<8x32xf32>
    %259 = vector.extract_strided_slice %256 {offsets = [0, 64], sizes = [8, 32], strides = [1, 1]} : vector<8x128xf32> to vector<8x32xf32>
    %260 = vector.extract_strided_slice %255 {offsets = [0, 96], sizes = [8, 32], strides = [1, 1]} : vector<8x128xf32> to vector<8x32xf32>
    %261 = arith.mulf %258, %215 : vector<8x32xf32>
    %262 = arith.mulf %257, %259 : vector<8x32xf32>
    %263 = arith.addf %261, %262 : vector<8x32xf32>
    %264 = math.tanh %263 : vector<8x32xf32>
    %265 = arith.mulf %260, %264 : vector<8x32xf32>
    %266 = arith.truncf %265 : vector<8x32xf32> to vector<8x32xbf16>
    %c0_126 = arith.constant 0 : index
    %c128_127 = arith.constant 128 : index
    %267 = vector.load %arg16[%c0_126, %c128_127] : memref<8x256xbf16, #tpu.memory_space<vmem>>, vector<8x32xbf16>
    tpu.vector_store %arg16[%c0_126, %c128_127], %266 {strides = array<i32>} : memref<8x256xbf16, #tpu.memory_space<vmem>>, vector<8x32xbf16>,
    %268 = arith.index_cast %223 : i32 to index
    %c0_128 = arith.constant 0 : index
    %269 = vector.load %arg15[%268, %c0_128] : memref<64x128xf32, #tpu.memory_space<vmem>>, vector<8x32xf32>
    tpu.vector_store %arg15[%268, %c0_128], %265 {strides = array<i32>} : memref<64x128xf32, #tpu.memory_space<vmem>>, vector<8x32xf32>,
    %c5_i32 = arith.constant 5 : i32
    %c8_i32_129 = arith.constant 8 : i32
    %270 = arith.muli %c5_i32, %c8_i32_129 : i32
    %271 = tpu.assume_multiple %270, 8 : i32
    %272 = arith.index_cast %271 : i32 to index
    %c0_130 = arith.constant 0 : index
    %273 = vector.load %arg14[%272, %c0_130] : memref<64x128xf32, #tpu.memory_space<vmem>>, vector<8x128xf32>
    %c0_131 = arith.constant 0 : index
    %c0_132 = arith.constant 0 : index
    %274 = vector.load %arg16[%c0_131, %c0_132] : memref<8x256xbf16, #tpu.memory_space<vmem>>, vector<8x128xbf16>
    %c0_133 = arith.constant 0 : index
    %c0_134 = arith.constant 0 : index
    %275 = vector.load %arg5[%c0_133, %c0_134] : memref<128x128xbf16, #tpu.memory_space<vmem>>, vector<128x128xbf16>
    %cst_135 = arith.constant dense<0.000000e+00> : vector<8x128xf32>
    %276 = tpu.matmul %274, %275, %cst_135 {dimension_numbers = #tpu.dot_dimension_numbers<[1], [0], [0], [1], [0, 0, 1, 1], [], []>} : vector<8x128xbf16>, vector<128x128xbf16>, vector<8x128xf32> -> vector<8x128xf32>
    %277 = arith.addf %273, %276 : vector<8x128xf32>
    %278 = arith.negf %277 : vector<8x128xf32>
    %279 = math.exp %278 : vector<8x128xf32>
    %cst_136 = arith.constant 1.000000e+00 : f32
    %280 = vector.broadcast %cst_136 : f32 to vector<8x128xf32>
    %281 = arith.addf %280, %279 : vector<8x128xf32>
    %282 = arith.divf %280, %281 : vector<8x128xf32>
    %283 = math.tanh %277 : vector<8x128xf32>
    %284 = vector.extract_strided_slice %282 {offsets = [0, 0], sizes = [8, 32], strides = [1, 1]} : vector<8x128xf32> to vector<8x32xf32>
    %285 = vector.extract_strided_slice %282 {offsets = [0, 32], sizes = [8, 32], strides = [1, 1]} : vector<8x128xf32> to vector<8x32xf32>
    %286 = vector.extract_strided_slice %283 {offsets = [0, 64], sizes = [8, 32], strides = [1, 1]} : vector<8x128xf32> to vector<8x32xf32>
    %287 = vector.extract_strided_slice %282 {offsets = [0, 96], sizes = [8, 32], strides = [1, 1]} : vector<8x128xf32> to vector<8x32xf32>
    %288 = arith.mulf %285, %242 : vector<8x32xf32>
    %289 = arith.mulf %284, %286 : vector<8x32xf32>
    %290 = arith.addf %288, %289 : vector<8x32xf32>
    %291 = math.tanh %290 : vector<8x32xf32>
    %292 = arith.mulf %287, %291 : vector<8x32xf32>
    %293 = arith.truncf %292 : vector<8x32xf32> to vector<8x32xbf16>
    %c0_137 = arith.constant 0 : index
    %c0_138 = arith.constant 0 : index
    %294 = vector.load %arg16[%c0_137, %c0_138] : memref<8x256xbf16, #tpu.memory_space<vmem>>, vector<8x32xbf16>
    tpu.vector_store %arg16[%c0_137, %c0_138], %293 {strides = array<i32>} : memref<8x256xbf16, #tpu.memory_space<vmem>>, vector<8x32xbf16>,
    %c0_139 = arith.constant 0 : index
    %c0_140 = arith.constant 0 : index
    %295 = vector.load %arg16[%c0_139, %c0_140] : memref<8x256xbf16, #tpu.memory_space<vmem>>, vector<8x256xbf16>
    %c0_141 = arith.constant 0 : index
    %c0_142 = arith.constant 0 : index
    %296 = vector.load %arg7[%c0_141, %c0_142] : memref<256x128xbf16, #tpu.memory_space<vmem>>, vector<256x128xbf16>
    %cst_143 = arith.constant dense<0.000000e+00> : vector<8x128xf32>
    %297 = tpu.matmul %295, %296, %cst_143 {dimension_numbers = #tpu.dot_dimension_numbers<[1], [0], [0], [1], [0, 0, 1, 1], [], []>} : vector<8x256xbf16>, vector<256x128xbf16>, vector<8x128xf32> -> vector<8x128xf32>
    %298 = arith.addf %297, %9 : vector<8x128xf32>
    %299 = arith.negf %298 : vector<8x128xf32>
    %300 = math.exp %299 : vector<8x128xf32>
    %cst_144 = arith.constant 1.000000e+00 : f32
    %301 = vector.broadcast %cst_144 : f32 to vector<8x128xf32>
    %302 = arith.addf %301, %300 : vector<8x128xf32>
    %303 = arith.divf %301, %302 : vector<8x128xf32>
    %304 = math.tanh %298 : vector<8x128xf32>
    %305 = vector.extract_strided_slice %303 {offsets = [0, 0], sizes = [8, 32], strides = [1, 1]} : vector<8x128xf32> to vector<8x32xf32>
    %306 = vector.extract_strided_slice %303 {offsets = [0, 32], sizes = [8, 32], strides = [1, 1]} : vector<8x128xf32> to vector<8x32xf32>
    %307 = vector.extract_strided_slice %304 {offsets = [0, 64], sizes = [8, 32], strides = [1, 1]} : vector<8x128xf32> to vector<8x32xf32>
    %308 = vector.extract_strided_slice %303 {offsets = [0, 96], sizes = [8, 32], strides = [1, 1]} : vector<8x128xf32> to vector<8x32xf32>
    %309 = arith.mulf %306, %263 : vector<8x32xf32>
    %310 = arith.mulf %305, %307 : vector<8x32xf32>
    %311 = arith.addf %309, %310 : vector<8x32xf32>
    %312 = math.tanh %311 : vector<8x32xf32>
    %313 = arith.mulf %308, %312 : vector<8x32xf32>
    %314 = arith.truncf %313 : vector<8x32xf32> to vector<8x32xbf16>
    %c0_145 = arith.constant 0 : index
    %c128_146 = arith.constant 128 : index
    %315 = vector.load %arg16[%c0_145, %c128_146] : memref<8x256xbf16, #tpu.memory_space<vmem>>, vector<8x32xbf16>
    tpu.vector_store %arg16[%c0_145, %c128_146], %314 {strides = array<i32>} : memref<8x256xbf16, #tpu.memory_space<vmem>>, vector<8x32xbf16>,
    %316 = arith.index_cast %271 : i32 to index
    %c0_147 = arith.constant 0 : index
    %317 = vector.load %arg15[%316, %c0_147] : memref<64x128xf32, #tpu.memory_space<vmem>>, vector<8x32xf32>
    tpu.vector_store %arg15[%316, %c0_147], %313 {strides = array<i32>} : memref<64x128xf32, #tpu.memory_space<vmem>>, vector<8x32xf32>,
    %c6_i32 = arith.constant 6 : i32
    %c8_i32_148 = arith.constant 8 : i32
    %318 = arith.muli %c6_i32, %c8_i32_148 : i32
    %319 = tpu.assume_multiple %318, 8 : i32
    %320 = arith.index_cast %319 : i32 to index
    %c0_149 = arith.constant 0 : index
    %321 = vector.load %arg14[%320, %c0_149] : memref<64x128xf32, #tpu.memory_space<vmem>>, vector<8x128xf32>
    %c0_150 = arith.constant 0 : index
    %c0_151 = arith.constant 0 : index
    %322 = vector.load %arg16[%c0_150, %c0_151] : memref<8x256xbf16, #tpu.memory_space<vmem>>, vector<8x128xbf16>
    %c0_152 = arith.constant 0 : index
    %c0_153 = arith.constant 0 : index
    %323 = vector.load %arg5[%c0_152, %c0_153] : memref<128x128xbf16, #tpu.memory_space<vmem>>, vector<128x128xbf16>
    %cst_154 = arith.constant dense<0.000000e+00> : vector<8x128xf32>
    %324 = tpu.matmul %322, %323, %cst_154 {dimension_numbers = #tpu.dot_dimension_numbers<[1], [0], [0], [1], [0, 0, 1, 1], [], []>} : vector<8x128xbf16>, vector<128x128xbf16>, vector<8x128xf32> -> vector<8x128xf32>
    %325 = arith.addf %321, %324 : vector<8x128xf32>
    %326 = arith.negf %325 : vector<8x128xf32>
    %327 = math.exp %326 : vector<8x128xf32>
    %cst_155 = arith.constant 1.000000e+00 : f32
    %328 = vector.broadcast %cst_155 : f32 to vector<8x128xf32>
    %329 = arith.addf %328, %327 : vector<8x128xf32>
    %330 = arith.divf %328, %329 : vector<8x128xf32>
    %331 = math.tanh %325 : vector<8x128xf32>
    %332 = vector.extract_strided_slice %330 {offsets = [0, 0], sizes = [8, 32], strides = [1, 1]} : vector<8x128xf32> to vector<8x32xf32>
    %333 = vector.extract_strided_slice %330 {offsets = [0, 32], sizes = [8, 32], strides = [1, 1]} : vector<8x128xf32> to vector<8x32xf32>
    %334 = vector.extract_strided_slice %331 {offsets = [0, 64], sizes = [8, 32], strides = [1, 1]} : vector<8x128xf32> to vector<8x32xf32>
    %335 = vector.extract_strided_slice %330 {offsets = [0, 96], sizes = [8, 32], strides = [1, 1]} : vector<8x128xf32> to vector<8x32xf32>
    %336 = arith.mulf %333, %290 : vector<8x32xf32>
    %337 = arith.mulf %332, %334 : vector<8x32xf32>
    %338 = arith.addf %336, %337 : vector<8x32xf32>
    %339 = math.tanh %338 : vector<8x32xf32>
    %340 = arith.mulf %335, %339 : vector<8x32xf32>
    %341 = arith.truncf %340 : vector<8x32xf32> to vector<8x32xbf16>
    %c0_156 = arith.constant 0 : index
    %c0_157 = arith.constant 0 : index
    %342 = vector.load %arg16[%c0_156, %c0_157] : memref<8x256xbf16, #tpu.memory_space<vmem>>, vector<8x32xbf16>
    tpu.vector_store %arg16[%c0_156, %c0_157], %341 {strides = array<i32>} : memref<8x256xbf16, #tpu.memory_space<vmem>>, vector<8x32xbf16>,
    %c0_158 = arith.constant 0 : index
    %c0_159 = arith.constant 0 : index
    %343 = vector.load %arg16[%c0_158, %c0_159] : memref<8x256xbf16, #tpu.memory_space<vmem>>, vector<8x256xbf16>
    %c0_160 = arith.constant 0 : index
    %c0_161 = arith.constant 0 : index
    %344 = vector.load %arg7[%c0_160, %c0_161] : memref<256x128xbf16, #tpu.memory_space<vmem>>, vector<256x128xbf16>
    %cst_162 = arith.constant dense<0.000000e+00> : vector<8x128xf32>
    %345 = tpu.matmul %343, %344, %cst_162 {dimension_numbers = #tpu.dot_dimension_numbers<[1], [0], [0], [1], [0, 0, 1, 1], [], []>} : vector<8x256xbf16>, vector<256x128xbf16>, vector<8x128xf32> -> vector<8x128xf32>
    %346 = arith.addf %345, %9 : vector<8x128xf32>
    %347 = arith.negf %346 : vector<8x128xf32>
    %348 = math.exp %347 : vector<8x128xf32>
    %cst_163 = arith.constant 1.000000e+00 : f32
    %349 = vector.broadcast %cst_163 : f32 to vector<8x128xf32>
    %350 = arith.addf %349, %348 : vector<8x128xf32>
    %351 = arith.divf %349, %350 : vector<8x128xf32>
    %352 = math.tanh %346 : vector<8x128xf32>
    %353 = vector.extract_strided_slice %351 {offsets = [0, 0], sizes = [8, 32], strides = [1, 1]} : vector<8x128xf32> to vector<8x32xf32>
    %354 = vector.extract_strided_slice %351 {offsets = [0, 32], sizes = [8, 32], strides = [1, 1]} : vector<8x128xf32> to vector<8x32xf32>
    %355 = vector.extract_strided_slice %352 {offsets = [0, 64], sizes = [8, 32], strides = [1, 1]} : vector<8x128xf32> to vector<8x32xf32>
    %356 = vector.extract_strided_slice %351 {offsets = [0, 96], sizes = [8, 32], strides = [1, 1]} : vector<8x128xf32> to vector<8x32xf32>
    %357 = arith.mulf %354, %311 : vector<8x32xf32>
    %358 = arith.mulf %353, %355 : vector<8x32xf32>
    %359 = arith.addf %357, %358 : vector<8x32xf32>
    %360 = math.tanh %359 : vector<8x32xf32>
    %361 = arith.mulf %356, %360 : vector<8x32xf32>
    %362 = arith.truncf %361 : vector<8x32xf32> to vector<8x32xbf16>
    %c0_164 = arith.constant 0 : index
    %c128_165 = arith.constant 128 : index
    %363 = vector.load %arg16[%c0_164, %c128_165] : memref<8x256xbf16, #tpu.memory_space<vmem>>, vector<8x32xbf16>
    tpu.vector_store %arg16[%c0_164, %c128_165], %362 {strides = array<i32>} : memref<8x256xbf16, #tpu.memory_space<vmem>>, vector<8x32xbf16>,
    %364 = arith.index_cast %319 : i32 to index
    %c0_166 = arith.constant 0 : index
    %365 = vector.load %arg15[%364, %c0_166] : memref<64x128xf32, #tpu.memory_space<vmem>>, vector<8x32xf32>
    tpu.vector_store %arg15[%364, %c0_166], %361 {strides = array<i32>} : memref<64x128xf32, #tpu.memory_space<vmem>>, vector<8x32xf32>,
    %c7_i32 = arith.constant 7 : i32
    %c8_i32_167 = arith.constant 8 : i32
    %366 = arith.muli %c7_i32, %c8_i32_167 : i32
    %367 = tpu.assume_multiple %366, 8 : i32
    %368 = arith.index_cast %367 : i32 to index
    %c0_168 = arith.constant 0 : index
    %369 = vector.load %arg14[%368, %c0_168] : memref<64x128xf32, #tpu.memory_space<vmem>>, vector<8x128xf32>
    %c0_169 = arith.constant 0 : index
    %c0_170 = arith.constant 0 : index
    %370 = vector.load %arg16[%c0_169, %c0_170] : memref<8x256xbf16, #tpu.memory_space<vmem>>, vector<8x128xbf16>
    %c0_171 = arith.constant 0 : index
    %c0_172 = arith.constant 0 : index
    %371 = vector.load %arg5[%c0_171, %c0_172] : memref<128x128xbf16, #tpu.memory_space<vmem>>, vector<128x128xbf16>
    %cst_173 = arith.constant dense<0.000000e+00> : vector<8x128xf32>
    %372 = tpu.matmul %370, %371, %cst_173 {dimension_numbers = #tpu.dot_dimension_numbers<[1], [0], [0], [1], [0, 0, 1, 1], [], []>} : vector<8x128xbf16>, vector<128x128xbf16>, vector<8x128xf32> -> vector<8x128xf32>
    %373 = arith.addf %369, %372 : vector<8x128xf32>
    %374 = arith.negf %373 : vector<8x128xf32>
    %375 = math.exp %374 : vector<8x128xf32>
    %cst_174 = arith.constant 1.000000e+00 : f32
    %376 = vector.broadcast %cst_174 : f32 to vector<8x128xf32>
    %377 = arith.addf %376, %375 : vector<8x128xf32>
    %378 = arith.divf %376, %377 : vector<8x128xf32>
    %379 = math.tanh %373 : vector<8x128xf32>
    %380 = vector.extract_strided_slice %378 {offsets = [0, 0], sizes = [8, 32], strides = [1, 1]} : vector<8x128xf32> to vector<8x32xf32>
    %381 = vector.extract_strided_slice %378 {offsets = [0, 32], sizes = [8, 32], strides = [1, 1]} : vector<8x128xf32> to vector<8x32xf32>
    %382 = vector.extract_strided_slice %379 {offsets = [0, 64], sizes = [8, 32], strides = [1, 1]} : vector<8x128xf32> to vector<8x32xf32>
    %383 = vector.extract_strided_slice %378 {offsets = [0, 96], sizes = [8, 32], strides = [1, 1]} : vector<8x128xf32> to vector<8x32xf32>
    %384 = arith.mulf %381, %338 : vector<8x32xf32>
    %385 = arith.mulf %380, %382 : vector<8x32xf32>
    %386 = arith.addf %384, %385 : vector<8x32xf32>
    %387 = math.tanh %386 : vector<8x32xf32>
    %388 = arith.mulf %383, %387 : vector<8x32xf32>
    %389 = arith.truncf %388 : vector<8x32xf32> to vector<8x32xbf16>
    %c0_175 = arith.constant 0 : index
    %c0_176 = arith.constant 0 : index
    %390 = vector.load %arg16[%c0_175, %c0_176] : memref<8x256xbf16, #tpu.memory_space<vmem>>, vector<8x32xbf16>
    tpu.vector_store %arg16[%c0_175, %c0_176], %389 {strides = array<i32>} : memref<8x256xbf16, #tpu.memory_space<vmem>>, vector<8x32xbf16>,
    %c0_177 = arith.constant 0 : index
    %c0_178 = arith.constant 0 : index
    %391 = vector.load %arg16[%c0_177, %c0_178] : memref<8x256xbf16, #tpu.memory_space<vmem>>, vector<8x256xbf16>
    %c0_179 = arith.constant 0 : index
    %c0_180 = arith.constant 0 : index
    %392 = vector.load %arg7[%c0_179, %c0_180] : memref<256x128xbf16, #tpu.memory_space<vmem>>, vector<256x128xbf16>
    %cst_181 = arith.constant dense<0.000000e+00> : vector<8x128xf32>
    %393 = tpu.matmul %391, %392, %cst_181 {dimension_numbers = #tpu.dot_dimension_numbers<[1], [0], [0], [1], [0, 0, 1, 1], [], []>} : vector<8x256xbf16>, vector<256x128xbf16>, vector<8x128xf32> -> vector<8x128xf32>
    %394 = arith.addf %393, %9 : vector<8x128xf32>
    %395 = arith.negf %394 : vector<8x128xf32>
    %396 = math.exp %395 : vector<8x128xf32>
    %cst_182 = arith.constant 1.000000e+00 : f32
    %397 = vector.broadcast %cst_182 : f32 to vector<8x128xf32>
    %398 = arith.addf %397, %396 : vector<8x128xf32>
    %399 = arith.divf %397, %398 : vector<8x128xf32>
    %400 = math.tanh %394 : vector<8x128xf32>
    %401 = vector.extract_strided_slice %399 {offsets = [0, 0], sizes = [8, 32], strides = [1, 1]} : vector<8x128xf32> to vector<8x32xf32>
    %402 = vector.extract_strided_slice %399 {offsets = [0, 32], sizes = [8, 32], strides = [1, 1]} : vector<8x128xf32> to vector<8x32xf32>
    %403 = vector.extract_strided_slice %400 {offsets = [0, 64], sizes = [8, 32], strides = [1, 1]} : vector<8x128xf32> to vector<8x32xf32>
    %404 = vector.extract_strided_slice %399 {offsets = [0, 96], sizes = [8, 32], strides = [1, 1]} : vector<8x128xf32> to vector<8x32xf32>
    %405 = arith.mulf %402, %359 : vector<8x32xf32>
    %406 = arith.mulf %401, %403 : vector<8x32xf32>
    %407 = arith.addf %405, %406 : vector<8x32xf32>
    %408 = math.tanh %407 : vector<8x32xf32>
    %409 = arith.mulf %404, %408 : vector<8x32xf32>
    %410 = arith.truncf %409 : vector<8x32xf32> to vector<8x32xbf16>
    %c0_183 = arith.constant 0 : index
    %c128_184 = arith.constant 128 : index
    %411 = vector.load %arg16[%c0_183, %c128_184] : memref<8x256xbf16, #tpu.memory_space<vmem>>, vector<8x32xbf16>
    tpu.vector_store %arg16[%c0_183, %c128_184], %410 {strides = array<i32>} : memref<8x256xbf16, #tpu.memory_space<vmem>>, vector<8x32xbf16>,
    %412 = arith.index_cast %367 : i32 to index
    %c0_185 = arith.constant 0 : index
    %413 = vector.load %arg15[%412, %c0_185] : memref<64x128xf32, #tpu.memory_space<vmem>>, vector<8x32xf32>
    tpu.vector_store %arg15[%412, %c0_185], %409 {strides = array<i32>} : memref<64x128xf32, #tpu.memory_space<vmem>>, vector<8x32xf32>,
    %c8_i32_186 = arith.constant 8 : i32
    %c0_187 = arith.constant 0 : index
    %c0_188 = arith.constant 0 : index
    %414 = vector.load %arg15[%c0_187, %c0_188] : memref<64x128xf32, #tpu.memory_space<vmem>>, vector<64x128xf32>
    %415 = arith.truncf %414 : vector<64x128xf32> to vector<64x128xbf16>
    %c0_189 = arith.constant 0 : index
    %c0_190 = arith.constant 0 : index
    %416 = vector.load %arg9[%c0_189, %c0_190] : memref<128x128xbf16, #tpu.memory_space<vmem>>, vector<128x128xbf16>
    %cst_191 = arith.constant dense<0.000000e+00> : vector<64x128xf32>
    %417 = tpu.matmul %415, %416, %cst_191 {dimension_numbers = #tpu.dot_dimension_numbers<[1], [0], [0], [1], [0, 0, 1, 1], [], []>} : vector<64x128xbf16>, vector<128x128xbf16>, vector<64x128xf32> -> vector<64x128xf32>
    %c0_192 = arith.constant 0 : index
    %c0_193 = arith.constant 0 : index
    %418 = vector.load %arg10[%c0_192, %c0_193] : memref<1x128xf32, #tpu.memory_space<vmem>>, vector<1x128xf32>
    %419 = vector.broadcast %418 : vector<1x128xf32> to vector<64x128xf32>
    %420 = arith.addf %417, %419 : vector<64x128xf32>
    %c0_194 = arith.constant 0 : index
    %c0_195 = arith.constant 0 : index
    %421 = vector.load %arg11[%c0_194, %c0_195] : memref<64x128xf32, #tpu.memory_space<vmem>>, vector<64x128xf32>
    tpu.vector_store %arg11[%c0_194, %c0_195], %420 {strides = array<i32>} : memref<64x128xf32, #tpu.memory_space<vmem>>, vector<64x128xf32>,
    %c0_196 = arith.constant 0 : index
    %c0_197 = arith.constant 0 : index
    %c0_198 = arith.constant 0 : index
    %422 = vector.load %arg12[%c0_196, %c0_197, %c0_198] : memref<2x8x32xf32, #tpu.memory_space<vmem>>, vector<1x8x32xf32>
    %423 = vector.shape_cast %422 : vector<1x8x32xf32> to vector<8x32xf32>
    %424 = vector.shape_cast %388 : vector<8x32xf32> to vector<1x8x32xf32>
    tpu.vector_store %arg12[%c0_196, %c0_197, %c0_198], %424 {strides = array<i32>} : memref<2x8x32xf32, #tpu.memory_space<vmem>>, vector<1x8x32xf32>,
    %c1_199 = arith.constant 1 : index
    %c0_200 = arith.constant 0 : index
    %c0_201 = arith.constant 0 : index
    %425 = vector.load %arg12[%c1_199, %c0_200, %c0_201] : memref<2x8x32xf32, #tpu.memory_space<vmem>>, vector<1x8x32xf32>
    %426 = vector.shape_cast %425 : vector<1x8x32xf32> to vector<8x32xf32>
    %427 = vector.shape_cast %409 : vector<8x32xf32> to vector<1x8x32xf32>
    tpu.vector_store %arg12[%c1_199, %c0_200, %c0_201], %427 {strides = array<i32>} : memref<2x8x32xf32, #tpu.memory_space<vmem>>, vector<1x8x32xf32>,
    %c0_202 = arith.constant 0 : index
    %c0_203 = arith.constant 0 : index
    %c0_204 = arith.constant 0 : index
    %428 = vector.load %arg13[%c0_202, %c0_203, %c0_204] : memref<2x8x32xf32, #tpu.memory_space<vmem>>, vector<1x8x32xf32>
    %429 = vector.shape_cast %428 : vector<1x8x32xf32> to vector<8x32xf32>
    %430 = vector.shape_cast %386 : vector<8x32xf32> to vector<1x8x32xf32>
    tpu.vector_store %arg13[%c0_202, %c0_203, %c0_204], %430 {strides = array<i32>} : memref<2x8x32xf32, #tpu.memory_space<vmem>>, vector<1x8x32xf32>,
    %c1_205 = arith.constant 1 : index
    %c0_206 = arith.constant 0 : index
    %c0_207 = arith.constant 0 : index
    %431 = vector.load %arg13[%c1_205, %c0_206, %c0_207] : memref<2x8x32xf32, #tpu.memory_space<vmem>>, vector<1x8x32xf32>
    %432 = vector.shape_cast %431 : vector<1x8x32xf32> to vector<8x32xf32>
    %433 = vector.shape_cast %407 : vector<8x32xf32> to vector<1x8x32xf32>
    tpu.vector_store %arg13[%c1_205, %c0_206, %c0_207], %433 {strides = array<i32>} : memref<2x8x32xf32, #tpu.memory_space<vmem>>, vector<1x8x32xf32>,
    return
  }
  func.func @transform_0(%arg0: i32) -> (i32, i32) {
    %c0_i32 = arith.constant 0 : i32
    %c0_i32_0 = arith.constant 0 : i32
    %c0_i32_1 = arith.constant 0 : i32
    return %c0_i32, %c0_i32_0 : i32, i32
  }
  func.func @transform_1(%arg0: i32) -> (i32, i32, i32) {
    %c0_i32 = arith.constant 0 : i32
    %c0_i32_0 = arith.constant 0 : i32
    %c0_i32_1 = arith.constant 0 : i32
    %c0_i32_2 = arith.constant 0 : i32
    return %c0_i32, %c0_i32_0, %c0_i32_1 : i32, i32, i32
  }
  func.func @transform_2(%arg0: i32) -> (i32, i32, i32) {
    %c0_i32 = arith.constant 0 : i32
    %c0_i32_0 = arith.constant 0 : i32
    %c0_i32_1 = arith.constant 0 : i32
    %c0_i32_2 = arith.constant 0 : i32
    return %c0_i32, %c0_i32_0, %c0_i32_1 : i32, i32, i32
  }
  func.func @transform_3(%arg0: i32) -> (i32, i32) {
    %c0_i32 = arith.constant 0 : i32
    %c0_i32_0 = arith.constant 0 : i32
    %c0_i32_1 = arith.constant 0 : i32
    return %c0_i32, %c0_i32_0 : i32, i32
  }
  func.func @transform_4(%arg0: i32) -> (i32, i32) {
    %c0_i32 = arith.constant 0 : i32
    %c0_i32_0 = arith.constant 0 : i32
    %c0_i32_1 = arith.constant 0 : i32
    return %c0_i32, %c0_i32_0 : i32, i32
  }
  func.func @transform_5(%arg0: i32) -> (i32, i32) {
    %c0_i32 = arith.constant 0 : i32
    %c0_i32_0 = arith.constant 0 : i32
    %c0_i32_1 = arith.constant 0 : i32
    return %c0_i32, %c0_i32_0 : i32, i32
  }
  func.func @transform_6(%arg0: i32) -> (i32, i32) {
    %c0_i32 = arith.constant 0 : i32
    %c0_i32_0 = arith.constant 0 : i32
    %c0_i32_1 = arith.constant 0 : i32
    return %c0_i32, %c0_i32_0 : i32, i32
  }
  func.func @transform_7(%arg0: i32) -> (i32, i32) {
    %c0_i32 = arith.constant 0 : i32
    %c0_i32_0 = arith.constant 0 : i32
    %c0_i32_1 = arith.constant 0 : i32
    return %c0_i32, %c0_i32_0 : i32, i32
  }
  func.func @transform_8(%arg0: i32) -> (i32, i32) {
    %c0_i32 = arith.constant 0 : i32
    %c0_i32_0 = arith.constant 0 : i32
    %c0_i32_1 = arith.constant 0 : i32
    return %c0_i32, %c0_i32_0 : i32, i32
  }
  func.func @transform_9(%arg0: i32) -> (i32, i32) {
    %c0_i32 = arith.constant 0 : i32
    %c0_i32_0 = arith.constant 0 : i32
    %c0_i32_1 = arith.constant 0 : i32
    return %c0_i32, %c0_i32_0 : i32, i32
  }
  func.func @transform_10(%arg0: i32) -> (i32, i32) {
    %c0_i32 = arith.constant 0 : i32
    %c0_i32_0 = arith.constant 0 : i32
    %c0_i32_1 = arith.constant 0 : i32
    return %c0_i32, %c0_i32_0 : i32, i32
  }
  func.func @transform_11(%arg0: i32) -> (i32, i32, i32) {
    %c0_i32 = arith.constant 0 : i32
    %c0_i32_0 = arith.constant 0 : i32
    %c0_i32_1 = arith.constant 0 : i32
    %c0_i32_2 = arith.constant 0 : i32
    return %c0_i32, %c0_i32_0, %c0_i32_1 : i32, i32, i32
  }
  func.func @transform_12(%arg0: i32) -> (i32, i32, i32) {
    %c0_i32 = arith.constant 0 : i32
    %c0_i32_0 = arith.constant 0 : i32
    %c0_i32_1 = arith.constant 0 : i32
    %c0_i32_2 = arith.constant 0 : i32
    return %c0_i32, %c0_i32_0, %c0_i32_1 : i32, i32, i32
  }
}

</mosaic_0001>

<llo_original>
// kernel: lstm_char_rnn_forward.1
$region0: #{lstm_char_rnn_forward.1}
  #allocation0 [shape = 'u32[]', space=smem, size = 0x4, offset = 0x4, fixed_abs, tag = 'smem constant byte address 0x4 - core index']
  #allocation1 [shape = 'u32[144,128]{1,0:T(1,128)}', space=vmem, size = 0x12000, scoped, tag = 'internal scratch']
  #allocation2 [shape = 'f32[64,128]{1,0:T(8,128)}', space=vmem, size = 0x8000, scoped, tag = 'scratch operand']
  #allocation3 [shape = 'f32[64,128]{1,0:T(8,128)}', space=vmem, size = 0x8000, scoped, tag = 'scratch operand']
  #allocation4 [shape = 'bf16[8,256]{1,0:T(8,128)(2,1)}', space=vmem, size = 0x1000, scoped, tag = 'scratch operand']
  %s0 = inlined_call_operand.vmem [shape: bf16[64,128], index: 0, kind: input, shape index: {}]
  %s1 = inlined_call_operand.vmem [shape: f32[2,8,32], index: 1, kind: input, shape index: {}]
  %s2 = inlined_call_operand.vmem [shape: f32[2,8,32], index: 2, kind: input, shape index: {}]
  %s3 = inlined_call_operand.vmem [shape: bf16[128,128], index: 3, kind: input, shape index: {}]
  %s4 = inlined_call_operand.hbm [shape: bf16[128,128], index: 4, kind: input, shape index: {}]
  %s5 = inlined_call_operand.vmem [shape: f32[1,128], index: 5, kind: input, shape index: {}]
  %s6 = inlined_call_operand.vmem [shape: bf16[256,128], index: 6, kind: input, shape index: {}]
  %s7 = inlined_call_operand.vmem [shape: f32[1,128], index: 7, kind: input, shape index: {}]
  %s8 = inlined_call_operand.hbm [shape: bf16[128,128], index: 8, kind: input, shape index: {}]
  %s9 = inlined_call_operand.vmem [shape: f32[1,128], index: 9, kind: input, shape index: {}]
  %s10 = inlined_call_operand.vmem [shape: f32[64,128], index: 10, kind: output, shape index: {0}]
  %s11 = inlined_call_operand.vmem [shape: f32[2,8,32], index: 11, kind: output, shape index: {1}]
  %s12 = inlined_call_operand.vmem [shape: f32[2,8,32], index: 12, kind: output, shape index: {2}]
  %13 = xla_tuple %s10, %s11, %s12
  %s14 = sld [smem:[#allocation0]]
  $region74: #{lstm_char_rnn_forward.1} parent=0
    _
  %s16 = ssub.s32 1, %s14
  %s17 = scalar_select 0, %s16, %s14
  $region1: #{lstm_char_rnn_forward.1} parent=0
    #allocation5 [shape = 'u8[32768]{0}', space=vmem, size = 0x8000, scoped, tag = 'input window, operand 4, single buffered']
    #allocation6 [shape = 's32[1]{0}', space=sflag, size = 0x4, scoped, tag = 'scoped memory for lstm_char_rnn_forward.1']
    #allocation7 [shape = 'u8[32768]{0}', space=vmem, size = 0x8000, scoped, tag = 'input window, operand 8, single buffered']
    #allocation8 [shape = 's32[1]{0}', space=sflag, size = 0x4, scoped, tag = 'scoped memory for lstm_char_rnn_forward.1']
    %18 = vsyncpa [#allocation6], 0
    %19 = vsyncpa [#allocation8], 0
    // Predicated region
    $region2: #{lstm_char_rnn_forward.1} parent=1 // pred_check
      _
    $region3: #{lstm_char_rnn_forward.1} parent=1 // pred_check_branch
      %21 = sbr.rel (0) target = $region5
    $region4: #{lstm_char_rnn_forward.1} parent=1 // pred_region
      _
    $region5: #{lstm_char_rnn_forward.1} parent=1 // pred_fallthru
      _
    // Predicated region
    $region6: #{lstm_char_rnn_forward.1} parent=1 // pred_check
      _
    $region7: #{lstm_char_rnn_forward.1} parent=1 // pred_check_branch
      %23 = sbr.rel (0) target = $region9
    $region8: #{lstm_char_rnn_forward.1} parent=1 // pred_region
      _
    $region9: #{lstm_char_rnn_forward.1} parent=1 // pred_fallthru
      _
    // Predicated region
    $region10: #{lstm_char_rnn_forward.1} parent=1 // pred_check
      _
    $region11: #{lstm_char_rnn_forward.1} parent=1 // pred_check_branch
      %25 = sbr.rel (0) target = $region13
    $region12: #{lstm_char_rnn_forward.1} parent=1 // pred_region
      _
    $region13: #{lstm_char_rnn_forward.1} parent=1 // pred_fallthru
      _
    // Predicated region
    $region14: #{lstm_char_rnn_forward.1} parent=1 // pred_check
      _
    $region15: #{lstm_char_rnn_forward.1} parent=1 // pred_check_branch
      %27 = sbr.rel (0) target = $region17
    $region16: #{lstm_char_rnn_forward.1} parent=1 // pred_region
      _
    $region17: #{lstm_char_rnn_forward.1} parent=1 // pred_fallthru
      _
    // Predicated region
    $region18: #{lstm_char_rnn_forward.1} parent=1 // pred_check
      _
    $region19: #{lstm_char_rnn_forward.1} parent=1 // pred_check_branch
      %29 = sbr.rel (0) target = $region21
    $region20: #{lstm_char_rnn_forward.1} parent=1 // pred_region
      %s31 = ssub.s32 1024, 1024
      %32 = vsyncadd [#allocation6], %s31
      %s33 = sshll.u32 [#allocation5], 4
      %s34 = int_to_ptr.vmem [resolvable:$true] %s33
      %39 = dma.hbm_to_vmem [thread:$0]  %s4, 1024, %s34, [#allocation6], 64, 64, 4
    $region21: #{lstm_char_rnn_forward.1} parent=1 // pred_fallthru
      _
    // Predicated region
    $region22: #{lstm_char_rnn_forward.1} parent=1 // pred_check
      _
    $region23: #{lstm_char_rnn_forward.1} parent=1 // pred_check_branch
      %41 = sbr.rel (0) target = $region25
    $region24: #{lstm_char_rnn_forward.1} parent=1 // pred_region
      _
    $region25: #{lstm_char_rnn_forward.1} parent=1 // pred_fallthru
      _
    // Predicated region
    $region26: #{lstm_char_rnn_forward.1} parent=1 // pred_check
      _
    $region27: #{lstm_char_rnn_forward.1} parent=1 // pred_check_branch
      %43 = sbr.rel (0) target = $region29
    $region28: #{lstm_char_rnn_forward.1} parent=1 // pred_region
      _
    $region29: #{lstm_char_rnn_forward.1} parent=1 // pred_fallthru
      _
    // Predicated region
    $region30: #{lstm_char_rnn_forward.1} parent=1 // pred_check
      _
    $region31: #{lstm_char_rnn_forward.1} parent=1 // pred_check_branch
      %45 = sbr.rel (0) target = $region33
    $region32: #{lstm_char_rnn_forward.1} parent=1 // pred_region
      _
    $region33: #{lstm_char_rnn_forward.1} parent=1 // pred_fallthru
      _
    // Predicated region
    $region34: #{lstm_char_rnn_forward.1} parent=1 // pred_check
      _
    $region35: #{lstm_char_rnn_forward.1} parent=1 // pred_check_branch
      %47 = sbr.rel (0) target = $region37
    $region36: #{lstm_char_rnn_forward.1} parent=1 // pred_region
      %s49 = ssub.s32 1024, 1024
      %50 = vsyncadd [#allocation8], %s49
      %s51 = sshll.u32 [#allocation7], 4
      %s52 = int_to_ptr.vmem [resolvable:$true] %s51
      %57 = dma.hbm_to_vmem [thread:$0]  %s8, 1024, %s52, [#allocation8], 64, 64, 4
    $region37: #{lstm_char_rnn_forward.1} parent=1 // pred_fallthru
      _
    // Predicated region
    $region38: #{lstm_char_rnn_forward.1} parent=1 // pred_check
      _
    $region39: #{lstm_char_rnn_forward.1} parent=1 // pred_check_branch
      %59 = sbr.rel (0) target = $region41
    $region40: #{lstm_char_rnn_forward.1} parent=1 // pred_region
      _
    $region41: #{lstm_char_rnn_forward.1} parent=1 // pred_fallthru
      _
    // Predicated region
    $region42: #{lstm_char_rnn_forward.1} parent=1 // pred_check
      _
    $region43: #{lstm_char_rnn_forward.1} parent=1 // pred_check_branch
      %61 = sbr.rel (0) target = $region45
    $region44: #{lstm_char_rnn_forward.1} parent=1 // pred_region
      %62 = dma.done [#allocation6], 1024
    $region45: #{lstm_char_rnn_forward.1} parent=1 // pred_fallthru
      _
    // Predicated region
    $region46: #{lstm_char_rnn_forward.1} parent=1 // pred_check
      _
    $region47: #{lstm_char_rnn_forward.1} parent=1 // pred_check_branch
      %64 = sbr.rel (0) target = $region49
    $region48: #{lstm_char_rnn_forward.1} parent=1 // pred_region
      %65 = dma.done [#allocation8], 1024
    $region49: #{lstm_char_rnn_forward.1} parent=1 // pred_fallthru
      _
    %v67 = vld [vmem:[%s0] sm:$0xf]
    %v68 = vld [vmem:[%s0 + $0x4] sm:$0xf]
    %v69 = vld [vmem:[%s0 + $0x8] sm:$0xf]
    %v70 = vld [vmem:[%s0 + $0xc] sm:$0xf]
    %v71 = vld [vmem:[%s0 + $0x10] sm:$0xf]
    %v72 = vld [vmem:[%s0 + $0x14] sm:$0xf]
    %v73 = vld [vmem:[%s0 + $0x18] sm:$0xf]
    %v74 = vld [vmem:[%s0 + $0x1c] sm:$0xf]
    %v75 = vld [vmem:[%s3] sm:$0xf]
    %v76 = vld [vmem:[%s3 + $0x4] sm:$0xf]
    %v77 = vld [vmem:[%s3 + $0x8] sm:$0xf]
    %v78 = vld [vmem:[%s3 + $0xc] sm:$0xf]
    %v79 = vld [vmem:[%s3 + $0x10] sm:$0xf]
    %v80 = vld [vmem:[%s3 + $0x14] sm:$0xf]
    %v81 = vld [vmem:[%s3 + $0x18] sm:$0xf]
    %v82 = vld [vmem:[%s3 + $0x1c] sm:$0xf]
    %v83 = vld [vmem:[%s3 + $0x20] sm:$0xf]
    %v84 = vld [vmem:[%s3 + $0x24] sm:$0xf]
    %v85 = vld [vmem:[%s3 + $0x28] sm:$0xf]
    %v86 = vld [vmem:[%s3 + $0x2c] sm:$0xf]
    %v87 = vld [vmem:[%s3 + $0x30] sm:$0xf]
    %v88 = vld [vmem:[%s3 + $0x34] sm:$0xf]
    %v89 = vld [vmem:[%s3 + $0x38] sm:$0xf]
    %v90 = vld [vmem:[%s3 + $0x3c] sm:$0xf]
    %v91 = vld [vmem:[%s5] sm:$0x1]
    %v93 = vlaneseq
    %v94 = vshrl.u32 %v93, 7
    %v95 = vsub.s32 0, %v94
    %v96 = vrot.slane %v91, %v95
    %v106 = vunpack.c.l.b16 %v67
    %v107 = vunpack.c.l.b16 %v68
    %v108 = vunpack.c.l.b16 %v69
    %v109 = vunpack.c.l.b16 %v70
    %v110 = vunpack.c.l.b16 %v71
    %v111 = vunpack.c.l.b16 %v72
    %v112 = vunpack.c.l.b16 %v73
    %v113 = vunpack.c.l.b16 %v74
    %v114 = vpack.c.b16 %v107, %v106
    %v115 = vpack.c.b16 %v109, %v108
    %v116 = vpack.c.b16 %v111, %v110
    %v117 = vpack.c.b16 %v113, %v112
    %v138 = vunpack.c.l.b16 %v75
    %v139 = vunpack.c.l.b16 %v76
    %v140 = vunpack.c.l.b16 %v77
    %v141 = vunpack.c.l.b16 %v78
    %v142 = vunpack.c.l.b16 %v79
    %v143 = vunpack.c.l.b16 %v80
    %v144 = vunpack.c.l.b16 %v81
    %v145 = vunpack.c.l.b16 %v82
    %v146 = vunpack.c.l.b16 %v83
    %v147 = vunpack.c.l.b16 %v84
    %v148 = vunpack.c.l.b16 %v85
    %v149 = vunpack.c.l.b16 %v86
    %v150 = vunpack.c.l.b16 %v87
    %v151 = vunpack.c.l.b16 %v88
    %v152 = vunpack.c.l.b16 %v89
    %v153 = vunpack.c.l.b16 %v90
    %v154 = vpack.c.b16 %v139, %v138
    %v155 = vpack.c.b16 %v141, %v140
    %v156 = vpack.c.b16 %v143, %v142
    %v157 = vpack.c.b16 %v145, %v144
    %v158 = vpack.c.b16 %v147, %v146
    %v159 = vpack.c.b16 %v149, %v148
    %v160 = vpack.c.b16 %v151, %v150
    %v161 = vpack.c.b16 %v153, %v152
    %170 = vmatprep.subr.bf16.mxu0 0
    %171 = vmatpush1.bf16.msra.mxu0 %v154
    %172 = vmatprep.subr.bf16.mxu0 0
    %173 = vmatpush1.bf16.msra.mxu0 %v155
    %174 = vmatprep.subr.bf16.mxu0 0
    %175 = vmatpush1.bf16.msra.mxu0 %v156
    %176 = vmatprep.subr.bf16.mxu0 0
    %177 = vmatpush1.bf16.msra.mxu0 %v157
    %178 = vmatprep.subr.bf16.mxu0 0
    %179 = vmatpush1.bf16.msra.mxu0 %v158
    %180 = vmatprep.subr.bf16.mxu0 0
    %181 = vmatpush1.bf16.msra.mxu0 %v159
    %182 = vmatprep.subr.bf16.mxu0 0
    %183 = vmatpush1.bf16.msra.mxu0 %v160
    %184 = vmatprep.subr.bf16.mxu0 0
    %185 = vmatpush1.bf16.msra.mxu0 %v161
    %186 = vmatprep.subr.bf16.mxu0 0
    %187 = vmatpush1.bf16.msra.mxu0 0
    %188 = vmatprep.subr.bf16.mxu0 0
    %189 = vmatpush1.bf16.msra.mxu0 0
    %190 = vmatprep.subr.bf16.mxu0 0
    %191 = vmatpush1.bf16.msra.mxu0 0
    %192 = vmatprep.subr.bf16.mxu0 0
    %193 = vmatpush1.bf16.msra.mxu0 0
    %194 = vmatprep.subr.bf16.mxu0 0
    %195 = vmatpush1.bf16.msra.mxu0 0
    %196 = vmatprep.subr.bf16.mxu0 0
    %197 = vmatpush1.bf16.msra.mxu0 0
    %198 = vmatprep.subr.bf16.mxu0 0
    %199 = vmatpush1.bf16.msra.mxu0 0
    %200 = vmatprep.subr.bf16.mxu0 0
    %201 = vmatpush1.bf16.msra.mxu0 0
    %202 = vmatprep.mubr.bf16.mxu0 0
    %203 = vmatmul.mubr.bf16.gmra.mrb[0].mxu0 %v114
    %v204 = vpop.f32.mrb[0].mxu0
    %v205 = vadd.f32 %v96, %v204
    %v206 = vpop.f32.mrb[0].mxu0
    %v207 = vpop.f32.mrb[0].mxu0
    %v208 = vadd.f32 %v96, %v207
    %v209 = vpop.f32.mrb[0].mxu0
    %210 = vmatprep.mubr.bf16.mxu0 0
    %211 = vmatmul.mubr.bf16.gmra.mrb[0].mxu0 %v115
    %v212 = vpop.f32.mrb[0].mxu0
    %v213 = vadd.f32 %v96, %v212
    %v214 = vpop.f32.mrb[0].mxu0
    %v215 = vpop.f32.mrb[0].mxu0
    %v216 = vadd.f32 %v96, %v215
    %v217 = vpop.f32.mrb[0].mxu0
    %218 = vmatprep.mubr.bf16.mxu0 0
    %219 = vmatmul.mubr.bf16.gmra.mrb[0].mxu0 %v116
    %v220 = vpop.f32.mrb[0].mxu0
    %v221 = vadd.f32 %v96, %v220
    %v222 = vpop.f32.mrb[0].mxu0
    %v223 = vpop.f32.mrb[0].mxu0
    %v224 = vadd.f32 %v96, %v223
    %v225 = vpop.f32.mrb[0].mxu0
    %226 = vmatprep.mubr.bf16.mxu0 0
    %227 = vmatmul.mubr.bf16.gmra.mrb[0].mxu0 %v117
    %v228 = vpop.f32.mrb[0].mxu0
    %v229 = vadd.f32 %v96, %v228
    %v230 = vpop.f32.mrb[0].mxu0
    %v231 = vpop.f32.mrb[0].mxu0
    %v232 = vadd.f32 %v96, %v231
    %v233 = vpop.f32.mrb[0].mxu0
    %234 = vdwg.mxu0
    %235 = vst [vmem:[#allocation2] sm:$0xff] %v205
    %236 = vst [vmem:[#allocation2 + $0x8] sm:$0xff] %v208
    %237 = vst [vmem:[#allocation2 + $0x10] sm:$0xff] %v213
    %238 = vst [vmem:[#allocation2 + $0x18] sm:$0xff] %v216
    %239 = vst [vmem:[#allocation2 + $0x20] sm:$0xff] %v221
    %240 = vst [vmem:[#allocation2 + $0x28] sm:$0xff] %v224
    %241 = vst [vmem:[#allocation2 + $0x30] sm:$0xff] %v229
    %242 = vst [vmem:[#allocation2 + $0x38] sm:$0xff] %v232
    %v243 = vld [vmem:[%s7] sm:$0x1]
    %v245 = vlaneseq
    %v246 = vshrl.u32 %v245, 7
    %v247 = vsub.s32 0, %v246
    %v248 = vrot.slane %v243, %v247
    %250 = vst [vmem:[#allocation4] sm:$0xff] 0
    %v251 = vld [vmem:[%s1] sm:$0xff]
    %v252 = vpack.c.bf16 %v251, %v251
    %vm253 = vcmask 257024
    %254 = vst.msk [vmem:[#allocation4] sm:$0xf] %vm253, %v252
    %s255 = scalar_lea.vmem %s1, 8
    %v256 = vld [vmem:[%s255] sm:$0xff]
    %v257 = vpack.c.bf16 %v256, %v256
    %258 = vst.msk [vmem:[#allocation4 + $0x4] sm:$0xf] %vm253, %v257
    %259 = vst [vmem:[#allocation3] sm:$0xff] 0.0
    %260 = vst [vmem:[#allocation3 + $0x8] sm:$0xff] 0.0
    %261 = vst [vmem:[#allocation3 + $0x10] sm:$0xff] 0.0
    %262 = vst [vmem:[#allocation3 + $0x18] sm:$0xff] 0.0
    %263 = vst [vmem:[#allocation3 + $0x20] sm:$0xff] 0.0
    %264 = vst [vmem:[#allocation3 + $0x28] sm:$0xff] 0.0
    %265 = vst [vmem:[#allocation3 + $0x30] sm:$0xff] 0.0
    %266 = vst [vmem:[#allocation3 + $0x38] sm:$0xff] 0.0
    %v267 = vld [vmem:[%s2] sm:$0xff]
    %s268 = scalar_lea.vmem %s2, 8
    %v269 = vld [vmem:[%s268] sm:$0xff]
    %v270 = vld [vmem:[#allocation2] sm:$0xff]
    %v271 = vld [vmem:[#allocation4] sm:$0xf]
    %v272 = vld [vmem:[#allocation5] sm:$0xf]
    %v273 = vld [vmem:[#allocation5 + $0x4] sm:$0xf]
    %v274 = vld [vmem:[#allocation5 + $0x8] sm:$0xf]
    %v275 = vld [vmem:[#allocation5 + $0xc] sm:$0xf]
    %v276 = vld [vmem:[#allocation5 + $0x10] sm:$0xf]
    %v277 = vld [vmem:[#allocation5 + $0x14] sm:$0xf]
    %v278 = vld [vmem:[#allocation5 + $0x18] sm:$0xf]
    %v279 = vld [vmem:[#allocation5 + $0x1c] sm:$0xf]
    %v280 = vld [vmem:[#allocation5 + $0x20] sm:$0xf]
    %v281 = vld [vmem:[#allocation5 + $0x24] sm:$0xf]
    %v282 = vld [vmem:[#allocation5 + $0x28] sm:$0xf]
    %v283 = vld [vmem:[#allocation5 + $0x2c] sm:$0xf]
    %v284 = vld [vmem:[#allocation5 + $0x30] sm:$0xf]
    %v285 = vld [vmem:[#allocation5 + $0x34] sm:$0xf]
    %v286 = vld [vmem:[#allocation5 + $0x38] sm:$0xf]
    %v287 = vld [vmem:[#allocation5 + $0x3c] sm:$0xf]
    %v304 = vunpack.c.l.b16 %v272
    %v305 = vunpack.c.l.b16 %v273
    %v306 = vunpack.c.l.b16 %v274
    %v307 = vunpack.c.l.b16 %v275
    %v308 = vunpack.c.l.b16 %v276
    %v309 = vunpack.c.l.b16 %v277
    %v310 = vunpack.c.l.b16 %v278
    %v311 = vunpack.c.l.b16 %v279
    %v312 = vunpack.c.l.b16 %v280
    %v313 = vunpack.c.l.b16 %v281
    %v314 = vunpack.c.l.b16 %v282
    %v315 = vunpack.c.l.b16 %v283
    %v316 = vunpack.c.l.b16 %v284
    %v317 = vunpack.c.l.b16 %v285
    %v318 = vunpack.c.l.b16 %v286
    %v319 = vunpack.c.l.b16 %v287
    %v320 = vpack.c.b16 %v305, %v304
    %v321 = vpack.c.b16 %v307, %v306
    %v322 = vpack.c.b16 %v309, %v308
    %v323 = vpack.c.b16 %v311, %v310
    %v324 = vpack.c.b16 %v313, %v312
    %v325 = vpack.c.b16 %v315, %v314
    %v326 = vpack.c.b16 %v317, %v316
    %v327 = vpack.c.b16 %v319, %v318
    %336 = vmatprep.subr.bf16.mxu0 0
    %337 = vmatpush1.bf16.msra.mxu0 %v320
    %338 = vmatprep.subr.bf16.mxu0 0
    %339 = vmatpush1.bf16.msra.mxu0 %v321
    %340 = vmatprep.subr.bf16.mxu0 0
    %341 = vmatpush1.bf16.msra.mxu0 %v322
    %342 = vmatprep.subr.bf16.mxu0 0
    %343 = vmatpush1.bf16.msra.mxu0 %v323
    %344 = vmatprep.subr.bf16.mxu0 0
    %345 = vmatpush1.bf16.msra.mxu0 %v324
    %346 = vmatprep.subr.bf16.mxu0 0
    %347 = vmatpush1.bf16.msra.mxu0 %v325
    %348 = vmatprep.subr.bf16.mxu0 0
    %349 = vmatpush1.bf16.msra.mxu0 %v326
    %350 = vmatprep.subr.bf16.mxu0 0
    %351 = vmatpush1.bf16.msra.mxu0 %v327
    %352 = vmatprep.subr.bf16.mxu0 0
    %353 = vmatpush1.bf16.msra.mxu0 0
    %354 = vmatprep.subr.bf16.mxu0 0
    %355 = vmatpush1.bf16.msra.mxu0 0
    %356 = vmatprep.subr.bf16.mxu0 0
    %357 = vmatpush1.bf16.msra.mxu0 0
    %358 = vmatprep.subr.bf16.mxu0 0
    %359 = vmatpush1.bf16.msra.mxu0 0
    %360 = vmatprep.subr.bf16.mxu0 0
    %361 = vmatpush1.bf16.msra.mxu0 0
    %362 = vmatprep.subr.bf16.mxu0 0
    %363 = vmatpush1.bf16.msra.mxu0 0
    %364 = vmatprep.subr.bf16.mxu0 0
    %365 = vmatpush1.bf16.msra.mxu0 0
    %366 = vmatprep.subr.bf16.mxu0 0
    %367 = vmatpush1.bf16.msra.mxu0 0
    %368 = vmatprep.mubr.bf16.mxu0 0
    %369 = vmatmul.mubr.bf16.gmra.mrb[0].mxu0 %v271
    %v370 = vpop.f32.mrb[0].mxu0
    %v371 = vadd.f32 0.0, %v370
    %v372 = vpop.f32.mrb[0].mxu0
    %v373 = vpop.f32.mrb[0].mxu0
    %v374 = vpop.f32.mrb[0].mxu0
    %375 = vdwg.mxu0
    %v376 = vadd.f32 %v270, %v371
    %v377 = vxor.u32 %v376, 2147483648
    %v378 = vmul.f32 %v377, 1.442695
    %v379 = vpow.pop %v378
    %v380 = vadd.f32 %v379, 1.0
    %v381 = vrcp.pop %v380
    %v382 = vmul.f32 1.0, %v381
    %v383 = vtanh.pop %v376
    %385 = vrot.lane.b32.xlu0 %v267, 32
    %v386 = vpop.permute.xlu0 %385
    %v388 = vmul.f32 %v382, %v386
    %390 = vrot.lane.b32.xlu0 %v383, 64
    %v391 = vpop.permute.xlu0 %390
    %v393 = vmul.f32 %v382, %v391
    %395 = vrot.lane.b32.xlu0 %v393, 32
    %v396 = vpop.permute.xlu0 %395
    %v398 = vadd.f32 %v388, %v396
    %v399 = vtanh.pop %v398
    %401 = vrot.lane.b32.xlu0 %v399, 64
    %v402 = vpop.permute.xlu0 %401
    %v404 = vmul.f32 %v382, %v402
    %v405 = vpack.c.bf16 %v404, %v404
    %v407 = vunpack.c.l.b16 %v405
    %v408 = vpack.c.b16 %v407, %v407
    %409 = vrot.lane.b32.xlu0 %v408, 32
    %v410 = vpop.permute.xlu0 %409
    %412 = vst.msk [vmem:[#allocation4] sm:$0xf] %vm253, %v410
    %v413 = vld [vmem:[#allocation4] sm:$0xff]
    %v414 = vld [vmem:[%s6] sm:$0xf]
    %v415 = vld [vmem:[%s6 + $0x4] sm:$0xf]
    %v416 = vld [vmem:[%s6 + $0x8] sm:$0xf]
    %v417 = vld [vmem:[%s6 + $0xc] sm:$0xf]
    %v418 = vld [vmem:[%s6 + $0x10] sm:$0xf]
    %v419 = vld [vmem:[%s6 + $0x14] sm:$0xf]
    %v420 = vld [vmem:[%s6 + $0x18] sm:$0xf]
    %v421 = vld [vmem:[%s6 + $0x1c] sm:$0xf]
    %v422 = vld [vmem:[%s6 + $0x20] sm:$0xf]
    %v423 = vld [vmem:[%s6 + $0x24] sm:$0xf]
    %v424 = vld [vmem:[%s6 + $0x28] sm:$0xf]
    %v425 = vld [vmem:[%s6 + $0x2c] sm:$0xf]
    %v426 = vld [vmem:[%s6 + $0x30] sm:$0xf]
    %v427 = vld [vmem:[%s6 + $0x34] sm:$0xf]
    %v428 = vld [vmem:[%s6 + $0x38] sm:$0xf]
    %v429 = vld [vmem:[%s6 + $0x3c] sm:$0xf]
    %v430 = vld [vmem:[%s6 + $0x40] sm:$0xf]
    %v431 = vld [vmem:[%s6 + $0x44] sm:$0xf]
    %v432 = vld [vmem:[%s6 + $0x48] sm:$0xf]
    %v433 = vld [vmem:[%s6 + $0x4c] sm:$0xf]
    %v434 = vld [vmem:[%s6 + $0x50] sm:$0xf]
    %v435 = vld [vmem:[%s6 + $0x54] sm:$0xf]
    %v436 = vld [vmem:[%s6 + $0x58] sm:$0xf]
    %v437 = vld [vmem:[%s6 + $0x5c] sm:$0xf]
    %v438 = vld [vmem:[%s6 + $0x60] sm:$0xf]
    %v439 = vld [vmem:[%s6 + $0x64] sm:$0xf]
    %v440 = vld [vmem:[%s6 + $0x68] sm:$0xf]
    %v441 = vld [vmem:[%s6 + $0x6c] sm:$0xf]
    %v442 = vld [vmem:[%s6 + $0x70] sm:$0xf]
    %v443 = vld [vmem:[%s6 + $0x74] sm:$0xf]
    %v444 = vld [vmem:[%s6 + $0x78] sm:$0xf]
    %v445 = vld [vmem:[%s6 + $0x7c] sm:$0xf]
    %v447 = vunpack.c.l.b16 %v413
    %v448 = vunpack.c.h.b16 %v413
    %v449 = vpack.c.b16 %v447, %v447
    %v450 = vpack.c.b16 %v448, %v448
    %v485 = vunpack.c.l.b16 %v414
    %v486 = vunpack.c.l.b16 %v415
    %v487 = vunpack.c.l.b16 %v416
    %v488 = vunpack.c.l.b16 %v417
    %v489 = vunpack.c.l.b16 %v418
    %v490 = vunpack.c.l.b16 %v419
    %v491 = vunpack.c.l.b16 %v420
    %v492 = vunpack.c.l.b16 %v421
    %v493 = vunpack.c.l.b16 %v422
    %v494 = vunpack.c.l.b16 %v423
    %v495 = vunpack.c.l.b16 %v424
    %v496 = vunpack.c.l.b16 %v425
    %v497 = vunpack.c.l.b16 %v426
    %v498 = vunpack.c.l.b16 %v427
    %v499 = vunpack.c.l.b16 %v428
    %v500 = vunpack.c.l.b16 %v429
    %v501 = vunpack.c.l.b16 %v430
    %v502 = vunpack.c.l.b16 %v431
    %v503 = vunpack.c.l.b16 %v432
    %v504 = vunpack.c.l.b16 %v433
    %v505 = vunpack.c.l.b16 %v434
    %v506 = vunpack.c.l.b16 %v435
    %v507 = vunpack.c.l.b16 %v436
    %v508 = vunpack.c.l.b16 %v437
    %v509 = vunpack.c.l.b16 %v438
    %v510 = vunpack.c.l.b16 %v439
    %v511 = vunpack.c.l.b16 %v440
    %v512 = vunpack.c.l.b16 %v441
    %v513 = vunpack.c.l.b16 %v442
    %v514 = vunpack.c.l.b16 %v443
    %v515 = vunpack.c.l.b16 %v444
    %v516 = vunpack.c.l.b16 %v445
    %v517 = vpack.c.b16 %v486, %v485
    %v518 = vpack.c.b16 %v488, %v487
    %v519 = vpack.c.b16 %v490, %v489
    %v520 = vpack.c.b16 %v492, %v491
    %v521 = vpack.c.b16 %v494, %v493
    %v522 = vpack.c.b16 %v496, %v495
    %v523 = vpack.c.b16 %v498, %v497
    %v524 = vpack.c.b16 %v500, %v499
    %v525 = vpack.c.b16 %v502, %v501
    %v526 = vpack.c.b16 %v504, %v503
    %v527 = vpack.c.b16 %v506, %v505
    %v528 = vpack.c.b16 %v508, %v507
    %v529 = vpack.c.b16 %v510, %v509
    %v530 = vpack.c.b16 %v512, %v511
    %v531 = vpack.c.b16 %v514, %v513
    %v532 = vpack.c.b16 %v516, %v515
    %549 = vmatprep.subr.bf16.mxu0 0
    %550 = vmatpush1.bf16.msra.mxu0 %v517
    %551 = vmatprep.subr.bf16.mxu0 0
    %552 = vmatpush1.bf16.msra.mxu0 %v518
    %553 = vmatprep.subr.bf16.mxu0 0
    %554 = vmatpush1.bf16.msra.mxu0 %v519
    %555 = vmatprep.subr.bf16.mxu0 0
    %556 = vmatpush1.bf16.msra.mxu0 %v520
    %557 = vmatprep.subr.bf16.mxu0 0
    %558 = vmatpush1.bf16.msra.mxu0 %v521
    %559 = vmatprep.subr.bf16.mxu0 0
    %560 = vmatpush1.bf16.msra.mxu0 %v522
    %561 = vmatprep.subr.bf16.mxu0 0
    %562 = vmatpush1.bf16.msra.mxu0 %v523
    %563 = vmatprep.subr.bf16.mxu0 0
    %564 = vmatpush1.bf16.msra.mxu0 %v524
    %565 = vmatprep.subr.bf16.mxu0 0
    %566 = vmatpush1.bf16.msra.mxu0 %v525
    %567 = vmatprep.subr.bf16.mxu0 0
    %568 = vmatpush1.bf16.msra.mxu0 %v526
    %569 = vmatprep.subr.bf16.mxu0 0
    %570 = vmatpush1.bf16.msra.mxu0 %v527
    %571 = vmatprep.subr.bf16.mxu0 0
    %572 = vmatpush1.bf16.msra.mxu0 %v528
    %573 = vmatprep.subr.bf16.mxu0 0
    %574 = vmatpush1.bf16.msra.mxu0 %v529
    %575 = vmatprep.subr.bf16.mxu0 0
    %576 = vmatpush1.bf16.msra.mxu0 %v530
    %577 = vmatprep.subr.bf16.mxu0 0
    %578 = vmatpush1.bf16.msra.mxu0 %v531
    %579 = vmatprep.subr.bf16.mxu0 0
    %580 = vmatpush1.bf16.msra.mxu0 %v532
    %581 = vmatprep.mubr.bf16.mxu0 %v450
    %582 = vmatmul.mubr.bf16.gmra.mrb[0].mxu0 %v449
    %v583 = vpop.f32.mrb[0].mxu0
    %v584 = vadd.f32 %v248, %v583
    %v585 = vpop.f32.mrb[0].mxu0
    %v586 = vpop.f32.mrb[0].mxu0
    %v587 = vpop.f32.mrb[0].mxu0
    %588 = vdwg.mxu0
    %v589 = vxor.u32 %v584, 2147483648
    %v590 = vmul.f32 %v589, 1.442695
    %v591 = vpow.pop %v590
    %v592 = vadd.f32 %v591, 1.0
    %v593 = vrcp.pop %v592
    %v594 = vmul.f32 1.0, %v593
    %v595 = vtanh.pop %v584
    %597 = vrot.lane.b32.xlu0 %v269, 32
    %v598 = vpop.permute.xlu0 %597
    %v600 = vmul.f32 %v594, %v598
    %602 = vrot.lane.b32.xlu0 %v595, 64
    %v603 = vpop.permute.xlu0 %602
    %v605 = vmul.f32 %v594, %v603
    %607 = vrot.lane.b32.xlu0 %v605, 32
    %v608 = vpop.permute.xlu0 %607
    %v610 = vadd.f32 %v600, %v608
    %v611 = vtanh.pop %v610
    %613 = vrot.lane.b32.xlu0 %v611, 64
    %v614 = vpop.permute.xlu0 %613
    %v616 = vmul.f32 %v594, %v614
    %v617 = vpack.c.bf16 %v616, %v616
    %v619 = vunpack.c.l.b16 %v617
    %v620 = vpack.c.b16 %v619, %v619
    %621 = vrot.lane.b32.xlu0 %v620, 32
    %v622 = vpop.permute.xlu0 %621
    %624 = vst.msk [vmem:[#allocation4 + $0x4] sm:$0xf] %vm253, %v622
    %626 = vrot.lane.b32.xlu0 %v616, 32
    %v627 = vpop.permute.xlu0 %626
    %vm629 = vcmask 261120
    %630 = vst.msk [vmem:[#allocation3] sm:$0xff] %vm629, %v627
    %s631 = scalar_lea.vmem [#allocation2], 8
    %v632 = vld [vmem:[%s631] sm:$0xff]
    %v633 = vld [vmem:[#allocation4] sm:$0xf]
    %v634 = vld [vmem:[#allocation5] sm:$0xf]
    %v635 = vld [vmem:[#allocation5 + $0x4] sm:$0xf]
    %v636 = vld [vmem:[#allocation5 + $0x8] sm:$0xf]
    %v637 = vld [vmem:[#allocation5 + $0xc] sm:$0xf]
    %v638 = vld [vmem:[#allocation5 + $0x10] sm:$0xf]
    %v639 = vld [vmem:[#allocation5 + $0x14] sm:$0xf]
    %v640 = vld [vmem:[#allocation5 + $0x18] sm:$0xf]
    %v641 = vld [vmem:[#allocation5 + $0x1c] sm:$0xf]
    %v642 = vld [vmem:[#allocation5 + $0x20] sm:$0xf]
    %v643 = vld [vmem:[#allocation5 + $0x24] sm:$0xf]
    %v644 = vld [vmem:[#allocation5 + $0x28] sm:$0xf]
    %v645 = vld [vmem:[#allocation5 + $0x2c] sm:$0xf]
    %v646 = vld [vmem:[#allocation5 + $0x30] sm:$0xf]
    %v647 = vld [vmem:[#allocation5 + $0x34] sm:$0xf]
    %v648 = vld [vmem:[#allocation5 + $0x38] sm:$0xf]
    %v649 = vld [vmem:[#allocation5 + $0x3c] sm:$0xf]
    %v666 = vunpack.c.l.b16 %v634
    %v667 = vunpack.c.l.b16 %v635
    %v668 = vunpack.c.l.b16 %v636
    %v669 = vunpack.c.l.b16 %v637
    %v670 = vunpack.c.l.b16 %v638
    %v671 = vunpack.c.l.b16 %v639
    %v672 = vunpack.c.l.b16 %v640
    %v673 = vunpack.c.l.b16 %v641
    %v674 = vunpack.c.l.b16 %v642
    %v675 = vunpack.c.l.b16 %v643
    %v676 = vunpack.c.l.b16 %v644
    %v677 = vunpack.c.l.b16 %v645
    %v678 = vunpack.c.l.b16 %v646
    %v679 = vunpack.c.l.b16 %v647
    %v680 = vunpack.c.l.b16 %v648
    %v681 = vunpack.c.l.b16 %v649
    %v682 = vpack.c.b16 %v667, %v666
    %v683 = vpack.c.b16 %v669, %v668
    %v684 = vpack.c.b16 %v671, %v670
    %v685 = vpack.c.b16 %v673, %v672
    %v686 = vpack.c.b16 %v675, %v674
    %v687 = vpack.c.b16 %v677, %v676
    %v688 = vpack.c.b16 %v679, %v678
    %v689 = vpack.c.b16 %v681, %v680
    %698 = vmatprep.subr.bf16.mxu0 0
    %699 = vmatpush1.bf16.msra.mxu0 %v682
    %700 = vmatprep.subr.bf16.mxu0 0
    %701 = vmatpush1.bf16.msra.mxu0 %v683
    %702 = vmatprep.subr.bf16.mxu0 0
    %703 = vmatpush1.bf16.msra.mxu0 %v684
    %704 = vmatprep.subr.bf16.mxu0 0
    %705 = vmatpush1.bf16.msra.mxu0 %v685
    %706 = vmatprep.subr.bf16.mxu0 0
    %707 = vmatpush1.bf16.msra.mxu0 %v686
    %708 = vmatprep.subr.bf16.mxu0 0
    %709 = vmatpush1.bf16.msra.mxu0 %v687
    %710 = vmatprep.subr.bf16.mxu0 0
    %711 = vmatpush1.bf16.msra.mxu0 %v688
    %712 = vmatprep.subr.bf16.mxu0 0
    %713 = vmatpush1.bf16.msra.mxu0 %v689
    %714 = vmatprep.subr.bf16.mxu0 0
    %715 = vmatpush1.bf16.msra.mxu0 0
    %716 = vmatprep.subr.bf16.mxu0 0
    %717 = vmatpush1.bf16.msra.mxu0 0
    %718 = vmatprep.subr.bf16.mxu0 0
    %719 = vmatpush1.bf16.msra.mxu0 0
    %720 = vmatprep.subr.bf16.mxu0 0
    %721 = vmatpush1.bf16.msra.mxu0 0
    %722 = vmatprep.subr.bf16.mxu0 0
    %723 = vmatpush1.bf16.msra.mxu0 0
    %724 = vmatprep.subr.bf16.mxu0 0
    %725 = vmatpush1.bf16.msra.mxu0 0
    %726 = vmatprep.subr.bf16.mxu0 0
    %727 = vmatpush1.bf16.msra.mxu0 0
    %728 = vmatprep.subr.bf16.mxu0 0
    %729 = vmatpush1.bf16.msra.mxu0 0
    %730 = vmatprep.mubr.bf16.mxu0 0
    %731 = vmatmul.mubr.bf16.gmra.mrb[0].mxu0 %v633
    %v732 = vpop.f32.mrb[0].mxu0
    %v733 = vadd.f32 0.0, %v732
    %v734 = vpop.f32.mrb[0].mxu0
    %v735 = vpop.f32.mrb[0].mxu0
    %v736 = vpop.f32.mrb[0].mxu0
    %737 = vdwg.mxu0
    %v738 = vadd.f32 %v632, %v733
    %v739 = vxor.u32 %v738, 2147483648
    %v740 = vmul.f32 %v739, 1.442695
    %v741 = vpow.pop %v740
    %v742 = vadd.f32 %v741, 1.0
    %v743 = vrcp.pop %v742
    %v744 = vmul.f32 1.0, %v743
    %v745 = vtanh.pop %v738
    %v746 = vmul.f32 %v744, %v398
    %748 = vrot.lane.b32.xlu0 %v745, 64
    %v749 = vpop.permute.xlu0 %748
    %v751 = vmul.f32 %v744, %v749
    %753 = vrot.lane.b32.xlu0 %v751, 32
    %v754 = vpop.permute.xlu0 %753
    %v756 = vadd.f32 %v746, %v754
    %v757 = vtanh.pop %v756
    %759 = vrot.lane.b32.xlu0 %v757, 64
    %v760 = vpop.permute.xlu0 %759
    %v762 = vmul.f32 %v744, %v760
    %v763 = vpack.c.bf16 %v762, %v762
    %v765 = vunpack.c.l.b16 %v763
    %v766 = vpack.c.b16 %v765, %v765
    %767 = vrot.lane.b32.xlu0 %v766, 32
    %v768 = vpop.permute.xlu0 %767
    %770 = vst.msk [vmem:[#allocation4] sm:$0xf] %vm253, %v768
    %v771 = vld [vmem:[#allocation4] sm:$0xff]
    %v772 = vld [vmem:[%s6] sm:$0xf]
    %v773 = vld [vmem:[%s6 + $0x4] sm:$0xf]
    %v774 = vld [vmem:[%s6 + $0x8] sm:$0xf]
    %v775 = vld [vmem:[%s6 + $0xc] sm:$0xf]
    %v776 = vld [vmem:[%s6 + $0x10] sm:$0xf]
    %v777 = vld [vmem:[%s6 + $0x14] sm:$0xf]
    %v778 = vld [vmem:[%s6 + $0x18] sm:$0xf]
    %v779 = vld [vmem:[%s6 + $0x1c] sm:$0xf]
    %v780 = vld [vmem:[%s6 + $0x20] sm:$0xf]
    %v781 = vld [vmem:[%s6 + $0x24] sm:$0xf]
    %v782 = vld [vmem:[%s6 + $0x28] sm:$0xf]
    %v783 = vld [vmem:[%s6 + $0x2c] sm:$0xf]
    %v784 = vld [vmem:[%s6 + $0x30] sm:$0xf]
    %v785 = vld [vmem:[%s6 + $0x34] sm:$0xf]
    %v786 = vld [vmem:[%s6 + $0x38] sm:$0xf]
    %v787 = vld [vmem:[%s6 + $0x3c] sm:$0xf]
    %v788 = vld [vmem:[%s6 + $0x40] sm:$0xf]
    %v789 = vld [vmem:[%s6 + $0x44] sm:$0xf]
    %v790 = vld [vmem:[%s6 + $0x48] sm:$0xf]
    %v791 = vld [vmem:[%s6 + $0x4c] sm:$0xf]
    %v792 = vld [vmem:[%s6 + $0x50] sm:$0xf]
    %v793 = vld [vmem:[%s6 + $0x54] sm:$0xf]
    %v794 = vld [vmem:[%s6 + $0x58] sm:$0xf]
    %v795 = vld [vmem:[%s6 + $0x5c] sm:$0xf]
    %v796 = vld [vmem:[%s6 + $0x60] sm:$0xf]
    %v797 = vld [vmem:[%s6 + $0x64] sm:$0xf]
    %v798 = vld [vmem:[%s6 + $0x68] sm:$0xf]
    %v799 = vld [vmem:[%s6 + $0x6c] sm:$0xf]
    %v800 = vld [vmem:[%s6 + $0x70] sm:$0xf]
    %v801 = vld [vmem:[%s6 + $0x74] sm:$0xf]
    %v802 = vld [vmem:[%s6 + $0x78] sm:$0xf]
    %v803 = vld [vmem:[%s6 + $0x7c] sm:$0xf]
    %v805 = vunpack.c.l.b16 %v771
    %v806 = vunpack.c.h.b16 %v771
    %v807 = vpack.c.b16 %v805, %v805
    %v808 = vpack.c.b16 %v806, %v806
    %v843 = vunpack.c.l.b16 %v772
    %v844 = vunpack.c.l.b16 %v773
    %v845 = vunpack.c.l.b16 %v774
    %v846 = vunpack.c.l.b16 %v775
    %v847 = vunpack.c.l.b16 %v776
    %v848 = vunpack.c.l.b16 %v777
    %v849 = vunpack.c.l.b16 %v778
    %v850 = vunpack.c.l.b16 %v779
    %v851 = vunpack.c.l.b16 %v780
    %v852 = vunpack.c.l.b16 %v781
    %v853 = vunpack.c.l.b16 %v782
    %v854 = vunpack.c.l.b16 %v783
    %v855 = vunpack.c.l.b16 %v784
    %v856 = vunpack.c.l.b16 %v785
    %v857 = vunpack.c.l.b16 %v786
    %v858 = vunpack.c.l.b16 %v787
    %v859 = vunpack.c.l.b16 %v788
    %v860 = vunpack.c.l.b16 %v789
    %v861 = vunpack.c.l.b16 %v790
    %v862 = vunpack.c.l.b16 %v791
    %v863 = vunpack.c.l.b16 %v792
    %v864 = vunpack.c.l.b16 %v793
    %v865 = vunpack.c.l.b16 %v794
    %v866 = vunpack.c.l.b16 %v795
    %v867 = vunpack.c.l.b16 %v796
    %v868 = vunpack.c.l.b16 %v797
    %v869 = vunpack.c.l.b16 %v798
    %v870 = vunpack.c.l.b16 %v799
    %v871 = vunpack.c.l.b16 %v800
    %v872 = vunpack.c.l.b16 %v801
    %v873 = vunpack.c.l.b16 %v802
    %v874 = vunpack.c.l.b16 %v803
    %v875 = vpack.c.b16 %v844, %v843
    %v876 = vpack.c.b16 %v846, %v845
    %v877 = vpack.c.b16 %v848, %v847
    %v878 = vpack.c.b16 %v850, %v849
    %v879 = vpack.c.b16 %v852, %v851
    %v880 = vpack.c.b16 %v854, %v853
    %v881 = vpack.c.b16 %v856, %v855
    %v882 = vpack.c.b16 %v858, %v857
    %v883 = vpack.c.b16 %v860, %v859
    %v884 = vpack.c.b16 %v862, %v861
    %v885 = vpack.c.b16 %v864, %v863
    %v886 = vpack.c.b16 %v866, %v865
    %v887 = vpack.c.b16 %v868, %v867
    %v888 = vpack.c.b16 %v870, %v869
    %v889 = vpack.c.b16 %v872, %v871
    %v890 = vpack.c.b16 %v874, %v873
    %907 = vmatprep.subr.bf16.mxu0 0
    %908 = vmatpush1.bf16.msra.mxu0 %v875
    %909 = vmatprep.subr.bf16.mxu0 0
    %910 = vmatpush1.bf16.msra.mxu0 %v876
    %911 = vmatprep.subr.bf16.mxu0 0
    %912 = vmatpush1.bf16.msra.mxu0 %v877
    %913 = vmatprep.subr.bf16.mxu0 0
    %914 = vmatpush1.bf16.msra.mxu0 %v878
    %915 = vmatprep.subr.bf16.mxu0 0
    %916 = vmatpush1.bf16.msra.mxu0 %v879
    %917 = vmatprep.subr.bf16.mxu0 0
    %918 = vmatpush1.bf16.msra.mxu0 %v880
    %919 = vmatprep.subr.bf16.mxu0 0
    %920 = vmatpush1.bf16.msra.mxu0 %v881
    %921 = vmatprep.subr.bf16.mxu0 0
    %922 = vmatpush1.bf16.msra.mxu0 %v882
    %923 = vmatprep.subr.bf16.mxu0 0
    %924 = vmatpush1.bf16.msra.mxu0 %v883
    %925 = vmatprep.subr.bf16.mxu0 0
    %926 = vmatpush1.bf16.msra.mxu0 %v884
    %927 = vmatprep.subr.bf16.mxu0 0
    %928 = vmatpush1.bf16.msra.mxu0 %v885
    %929 = vmatprep.subr.bf16.mxu0 0
    %930 = vmatpush1.bf16.msra.mxu0 %v886
    %931 = vmatprep.subr.bf16.mxu0 0
    %932 = vmatpush1.bf16.msra.mxu0 %v887
    %933 = vmatprep.subr.bf16.mxu0 0
    %934 = vmatpush1.bf16.msra.mxu0 %v888
    %935 = vmatprep.subr.bf16.mxu0 0
    %936 = vmatpush1.bf16.msra.mxu0 %v889
    %937 = vmatprep.subr.bf16.mxu0 0
    %938 = vmatpush1.bf16.msra.mxu0 %v890
    %939 = vmatprep.mubr.bf16.mxu0 %v808
    %940 = vmatmul.mubr.bf16.gmra.mrb[0].mxu0 %v807
    %v941 = vpop.f32.mrb[0].mxu0
    %v942 = vadd.f32 %v248, %v941
    %v943 = vpop.f32.mrb[0].mxu0
    %v944 = vpop.f32.mrb[0].mxu0
    %v945 = vpop.f32.mrb[0].mxu0
    %946 = vdwg.mxu0
    %v947 = vxor.u32 %v942, 2147483648
    %v948 = vmul.f32 %v947, 1.442695
    %v949 = vpow.pop %v948
    %v950 = vadd.f32 %v949, 1.0
    %v951 = vrcp.pop %v950
    %v952 = vmul.f32 1.0, %v951
    %v953 = vtanh.pop %v942
    %v954 = vmul.f32 %v952, %v610
    %956 = vrot.lane.b32.xlu0 %v953, 64
    %v957 = vpop.permute.xlu0 %956
    %v959 = vmul.f32 %v952, %v957
    %961 = vrot.lane.b32.xlu0 %v959, 32
    %v962 = vpop.permute.xlu0 %961
    %v964 = vadd.f32 %v954, %v962
    %v965 = vtanh.pop %v964
    %967 = vrot.lane.b32.xlu0 %v965, 64
    %v968 = vpop.permute.xlu0 %967
    %v970 = vmul.f32 %v952, %v968
    %v971 = vpack.c.bf16 %v970, %v970
    %v973 = vunpack.c.l.b16 %v971
    %v974 = vpack.c.b16 %v973, %v973
    %975 = vrot.lane.b32.xlu0 %v974, 32
    %v976 = vpop.permute.xlu0 %975
    %978 = vst.msk [vmem:[#allocation4 + $0x4] sm:$0xf] %vm253, %v976
    %980 = vrot.lane.b32.xlu0 %v970, 32
    %v981 = vpop.permute.xlu0 %980
    %s983 = scalar_lea.vmem [#allocation3], 8
    %984 = vst.msk [vmem:[%s983] sm:$0xff] %vm629, %v981
    %s985 = scalar_lea.vmem [#allocation2], 16
    %v986 = vld [vmem:[%s985] sm:$0xff]
    %v987 = vld [vmem:[#allocation4] sm:$0xf]
    %v988 = vld [vmem:[#allocation5] sm:$0xf]
    %v989 = vld [vmem:[#allocation5 + $0x4] sm:$0xf]
    %v990 = vld [vmem:[#allocation5 + $0x8] sm:$0xf]
    %v991 = vld [vmem:[#allocation5 + $0xc] sm:$0xf]
    %v992 = vld [vmem:[#allocation5 + $0x10] sm:$0xf]
    %v993 = vld [vmem:[#allocation5 + $0x14] sm:$0xf]
    %v994 = vld [vmem:[#allocation5 + $0x18] sm:$0xf]
    %v995 = vld [vmem:[#allocation5 + $0x1c] sm:$0xf]
    %v996 = vld [vmem:[#allocation5 + $0x20] sm:$0xf]
    %v997 = vld [vmem:[#allocation5 + $0x24] sm:$0xf]
    %v998 = vld [vmem:[#allocation5 + $0x28] sm:$0xf]
    %v999 = vld [vmem:[#allocation5 + $0x2c] sm:$0xf]
    %v1000 = vld [vmem:[#allocation5 + $0x30] sm:$0xf]
    %v1001 = vld [vmem:[#allocation5 + $0x34] sm:$0xf]
    %v1002 = vld [vmem:[#allocation5 + $0x38] sm:$0xf]
    %v1003 = vld [vmem:[#allocation5 + $0x3c] sm:$0xf]
    %v1020 = vunpack.c.l.b16 %v988
    %v1021 = vunpack.c.l.b16 %v989
    %v1022 = vunpack.c.l.b16 %v990
    %v1023 = vunpack.c.l.b16 %v991
    %v1024 = vunpack.c.l.b16 %v992
    %v1025 = vunpack.c.l.b16 %v993
    %v1026 = vunpack.c.l.b16 %v994
    %v1027 = vunpack.c.l.b16 %v995
    %v1028 = vunpack.c.l.b16 %v996
    %v1029 = vunpack.c.l.b16 %v997
    %v1030 = vunpack.c.l.b16 %v998
    %v1031 = vunpack.c.l.b16 %v999
    %v1032 = vunpack.c.l.b16 %v1000
    %v1033 = vunpack.c.l.b16 %v1001
    %v1034 = vunpack.c.l.b16 %v1002
    %v1035 = vunpack.c.l.b16 %v1003
    %v1036 = vpack.c.b16 %v1021, %v1020
    %v1037 = vpack.c.b16 %v1023, %v1022
    %v1038 = vpack.c.b16 %v1025, %v1024
    %v1039 = vpack.c.b16 %v1027, %v1026
    %v1040 = vpack.c.b16 %v1029, %v1028
    %v1041 = vpack.c.b16 %v1031, %v1030
    %v1042 = vpack.c.b16 %v1033, %v1032
    %v1043 = vpack.c.b16 %v1035, %v1034
    %1052 = vmatprep.subr.bf16.mxu0 0
    %1053 = vmatpush1.bf16.msra.mxu0 %v1036
    %1054 = vmatprep.subr.bf16.mxu0 0
    %1055 = vmatpush1.bf16.msra.mxu0 %v1037
    %1056 = vmatprep.subr.bf16.mxu0 0
    %1057 = vmatpush1.bf16.msra.mxu0 %v1038
    %1058 = vmatprep.subr.bf16.mxu0 0
    %1059 = vmatpush1.bf16.msra.mxu0 %v1039
    %1060 = vmatprep.subr.bf16.mxu0 0
    %1061 = vmatpush1.bf16.msra.mxu0 %v1040
    %1062 = vmatprep.subr.bf16.mxu0 0
    %1063 = vmatpush1.bf16.msra.mxu0 %v1041
    %1064 = vmatprep.subr.bf16.mxu0 0
    %1065 = vmatpush1.bf16.msra.mxu0 %v1042
    %1066 = vmatprep.subr.bf16.mxu0 0
    %1067 = vmatpush1.bf16.msra.mxu0 %v1043
    %1068 = vmatprep.subr.bf16.mxu0 0
    %1069 = vmatpush1.bf16.msra.mxu0 0
    %1070 = vmatprep.subr.bf16.mxu0 0
    %1071 = vmatpush1.bf16.msra.mxu0 0
    %1072 = vmatprep.subr.bf16.mxu0 0
    %1073 = vmatpush1.bf16.msra.mxu0 0
    %1074 = vmatprep.subr.bf16.mxu0 0
    %1075 = vmatpush1.bf16.msra.mxu0 0
    %1076 = vmatprep.subr.bf16.mxu0 0
    %1077 = vmatpush1.bf16.msra.mxu0 0
    %1078 = vmatprep.subr.bf16.mxu0 0
    %1079 = vmatpush1.bf16.msra.mxu0 0
    %1080 = vmatprep.subr.bf16.mxu0 0
    %1081 = vmatpush1.bf16.msra.mxu0 0
    %1082 = vmatprep.subr.bf16.mxu0 0
    %1083 = vmatpush1.bf16.msra.mxu0 0
    %1084 = vmatprep.mubr.bf16.mxu0 0
    %1085 = vmatmul.mubr.bf16.gmra.mrb[0].mxu0 %v987
    %v1086 = vpop.f32.mrb[0].mxu0
    %v1087 = vadd.f32 0.0, %v1086
    %v1088 = vpop.f32.mrb[0].mxu0
    %v1089 = vpop.f32.mrb[0].mxu0
    %v1090 = vpop.f32.mrb[0].mxu0
    %1091 = vdwg.mxu0
    %v1092 = vadd.f32 %v986, %v1087
    %v1093 = vxor.u32 %v1092, 2147483648
    %v1094 = vmul.f32 %v1093, 1.442695
    %v1095 = vpow.pop %v1094
    %v1096 = vadd.f32 %v1095, 1.0
    %v1097 = vrcp.pop %v1096
    %v1098 = vmul.f32 1.0, %v1097
    %v1099 = vtanh.pop %v1092
    %v1100 = vmul.f32 %v1098, %v756
    %1102 = vrot.lane.b32.xlu0 %v1099, 64
    %v1103 = vpop.permute.xlu0 %1102
    %v1105 = vmul.f32 %v1098, %v1103
    %1107 = vrot.lane.b32.xlu0 %v1105, 32
    %v1108 = vpop.permute.xlu0 %1107
    %v1110 = vadd.f32 %v1100, %v1108
    %v1111 = vtanh.pop %v1110
    %1113 = vrot.lane.b32.xlu0 %v1111, 64
    %v1114 = vpop.permute.xlu0 %1113
    %v1116 = vmul.f32 %v1098, %v1114
    %v1117 = vpack.c.bf16 %v1116, %v1116
    %v1119 = vunpack.c.l.b16 %v1117
    %v1120 = vpack.c.b16 %v1119, %v1119
    %1121 = vrot.lane.b32.xlu0 %v1120, 32
    %v1122 = vpop.permute.xlu0 %1121
    %1124 = vst.msk [vmem:[#allocation4] sm:$0xf] %vm253, %v1122
    %v1125 = vld [vmem:[#allocation4] sm:$0xff]
    %v1126 = vld [vmem:[%s6] sm:$0xf]
    %v1127 = vld [vmem:[%s6 + $0x4] sm:$0xf]
    %v1128 = vld [vmem:[%s6 + $0x8] sm:$0xf]
    %v1129 = vld [vmem:[%s6 + $0xc] sm:$0xf]
    %v1130 = vld [vmem:[%s6 + $0x10] sm:$0xf]
    %v1131 = vld [vmem:[%s6 + $0x14] sm:$0xf]
    %v1132 = vld [vmem:[%s6 + $0x18] sm:$0xf]
    %v1133 = vld [vmem:[%s6 + $0x1c] sm:$0xf]
    %v1134 = vld [vmem:[%s6 + $0x20] sm:$0xf]
    %v1135 = vld [vmem:[%s6 + $0x24] sm:$0xf]
    %v1136 = vld [vmem:[%s6 + $0x28] sm:$0xf]
    %v1137 = vld [vmem:[%s6 + $0x2c] sm:$0xf]
    %v1138 = vld [vmem:[%s6 + $0x30] sm:$0xf]
    %v1139 = vld [vmem:[%s6 + $0x34] sm:$0xf]
    %v1140 = vld [vmem:[%s6 + $0x38] sm:$0xf]
    %v1141 = vld [vmem:[%s6 + $0x3c] sm:$0xf]
    %v1142 = vld [vmem:[%s6 + $0x40] sm:$0xf]
    %v1143 = vld [vmem:[%s6 + $0x44] sm:$0xf]
    %v1144 = vld [vmem:[%s6 + $0x48] sm:$0xf]
    %v1145 = vld [vmem:[%s6 + $0x4c] sm:$0xf]
    %v1146 = vld [vmem:[%s6 + $0x50] sm:$0xf]
    %v1147 = vld [vmem:[%s6 + $0x54] sm:$0xf]
    %v1148 = vld [vmem:[%s6 + $0x58] sm:$0xf]
    %v1149 = vld [vmem:[%s6 + $0x5c] sm:$0xf]
    %v1150 = vld [vmem:[%s6 + $0x60] sm:$0xf]
    %v1151 = vld [vmem:[%s6 + $0x64] sm:$0xf]
    %v1152 = vld [vmem:[%s6 + $0x68] sm:$0xf]
    %v1153 = vld [vmem:[%s6 + $0x6c] sm:$0xf]
    %v1154 = vld [vmem:[%s6 + $0x70] sm:$0xf]
    %v1155 = vld [vmem:[%s6 + $0x74] sm:$0xf]
    %v1156 = vld [vmem:[%s6 + $0x78] sm:$0xf]
    %v1157 = vld [vmem:[%s6 + $0x7c] sm:$0xf]
    %v1159 = vunpack.c.l.b16 %v1125
    %v1160 = vunpack.c.h.b16 %v1125
    %v1161 = vpack.c.b16 %v1159, %v1159
    %v1162 = vpack.c.b16 %v1160, %v1160
    %v1197 = vunpack.c.l.b16 %v1126
    %v1198 = vunpack.c.l.b16 %v1127
    %v1199 = vunpack.c.l.b16 %v1128
    %v1200 = vunpack.c.l.b16 %v1129
    %v1201 = vunpack.c.l.b16 %v1130
    %v1202 = vunpack.c.l.b16 %v1131
    %v1203 = vunpack.c.l.b16 %v1132
    %v1204 = vunpack.c.l.b16 %v1133
    %v1205 = vunpack.c.l.b16 %v1134
    %v1206 = vunpack.c.l.b16 %v1135
    %v1207 = vunpack.c.l.b16 %v1136
    %v1208 = vunpack.c.l.b16 %v1137
    %v1209 = vunpack.c.l.b16 %v1138
    %v1210 = vunpack.c.l.b16 %v1139
    %v1211 = vunpack.c.l.b16 %v1140
    %v1212 = vunpack.c.l.b16 %v1141
    %v1213 = vunpack.c.l.b16 %v1142
    %v1214 = vunpack.c.l.b16 %v1143
    %v1215 = vunpack.c.l.b16 %v1144
    %v1216 = vunpack.c.l.b16 %v1145
    %v1217 = vunpack.c.l.b16 %v1146
    %v1218 = vunpack.c.l.b16 %v1147
    %v1219 = vunpack.c.l.b16 %v1148
    %v1220 = vunpack.c.l.b16 %v1149
    %v1221 = vunpack.c.l.b16 %v1150
    %v1222 = vunpack.c.l.b16 %v1151
    %v1223 = vunpack.c.l.b16 %v1152
    %v1224 = vunpack.c.l.b16 %v1153
    %v1225 = vunpack.c.l.b16 %v1154
    %v1226 = vunpack.c.l.b16 %v1155
    %v1227 = vunpack.c.l.b16 %v1156
    %v1228 = vunpack.c.l.b16 %v1157
    %v1229 = vpack.c.b16 %v1198, %v1197
    %v1230 = vpack.c.b16 %v1200, %v1199
    %v1231 = vpack.c.b16 %v1202, %v1201
    %v1232 = vpack.c.b16 %v1204, %v1203
    %v1233 = vpack.c.b16 %v1206, %v1205
    %v1234 = vpack.c.b16 %v1208, %v1207
    %v1235 = vpack.c.b16 %v1210, %v1209
    %v1236 = vpack.c.b16 %v1212, %v1211
    %v1237 = vpack.c.b16 %v1214, %v1213
    %v1238 = vpack.c.b16 %v1216, %v1215
    %v1239 = vpack.c.b16 %v1218, %v1217
    %v1240 = vpack.c.b16 %v1220, %v1219
    %v1241 = vpack.c.b16 %v1222, %v1221
    %v1242 = vpack.c.b16 %v1224, %v1223
    %v1243 = vpack.c.b16 %v1226, %v1225
    %v1244 = vpack.c.b16 %v1228, %v1227
    %1261 = vmatprep.subr.bf16.mxu0 0
    %1262 = vmatpush1.bf16.msra.mxu0 %v1229
    %1263 = vmatprep.subr.bf16.mxu0 0
    %1264 = vmatpush1.bf16.msra.mxu0 %v1230
    %1265 = vmatprep.subr.bf16.mxu0 0
    %1266 = vmatpush1.bf16.msra.mxu0 %v1231
    %1267 = vmatprep.subr.bf16.mxu0 0
    %1268 = vmatpush1.bf16.msra.mxu0 %v1232
    %1269 = vmatprep.subr.bf16.mxu0 0
    %1270 = vmatpush1.bf16.msra.mxu0 %v1233
    %1271 = vmatprep.subr.bf16.mxu0 0
    %1272 = vmatpush1.bf16.msra.mxu0 %v1234
    %1273 = vmatprep.subr.bf16.mxu0 0
    %1274 = vmatpush1.bf16.msra.mxu0 %v1235
    %1275 = vmatprep.subr.bf16.mxu0 0
    %1276 = vmatpush1.bf16.msra.mxu0 %v1236
    %1277 = vmatprep.subr.bf16.mxu0 0
    %1278 = vmatpush1.bf16.msra.mxu0 %v1237
    %1279 = vmatprep.subr.bf16.mxu0 0
    %1280 = vmatpush1.bf16.msra.mxu0 %v1238
    %1281 = vmatprep.subr.bf16.mxu0 0
    %1282 = vmatpush1.bf16.msra.mxu0 %v1239
    %1283 = vmatprep.subr.bf16.mxu0 0
    %1284 = vmatpush1.bf16.msra.mxu0 %v1240
    %1285 = vmatprep.subr.bf16.mxu0 0
    %1286 = vmatpush1.bf16.msra.mxu0 %v1241
    %1287 = vmatprep.subr.bf16.mxu0 0
    %1288 = vmatpush1.bf16.msra.mxu0 %v1242
    %1289 = vmatprep.subr.bf16.mxu0 0
    %1290 = vmatpush1.bf16.msra.mxu0 %v1243
    %1291 = vmatprep.subr.bf16.mxu0 0
    %1292 = vmatpush1.bf16.msra.mxu0 %v1244
    %1293 = vmatprep.mubr.bf16.mxu0 %v1162
    %1294 = vmatmul.mubr.bf16.gmra.mrb[0].mxu0 %v1161
    %v1295 = vpop.f32.mrb[0].mxu0
    %v1296 = vadd.f32 %v248, %v1295
    %v1297 = vpop.f32.mrb[0].mxu0
    %v1298 = vpop.f32.mrb[0].mxu0
    %v1299 = vpop.f32.mrb[0].mxu0
    %1300 = vdwg.mxu0
    %v1301 = vxor.u32 %v1296, 2147483648
    %v1302 = vmul.f32 %v1301, 1.442695
    %v1303 = vpow.pop %v1302
    %v1304 = vadd.f32 %v1303, 1.0
    %v1305 = vrcp.pop %v1304
    %v1306 = vmul.f32 1.0, %v1305
    %v1307 = vtanh.pop %v1296
    %v1308 = vmul.f32 %v1306, %v964
    %1310 = vrot.lane.b32.xlu0 %v1307, 64
    %v1311 = vpop.permute.xlu0 %1310
    %v1313 = vmul.f32 %v1306, %v1311
    %1315 = vrot.lane.b32.xlu0 %v1313, 32
    %v1316 = vpop.permute.xlu0 %1315
    %v1318 = vadd.f32 %v1308, %v1316
    %v1319 = vtanh.pop %v1318
    %1321 = vrot.lane.b32.xlu0 %v1319, 64
    %v1322 = vpop.permute.xlu0 %1321
    %v1324 = vmul.f32 %v1306, %v1322
    %v1325 = vpack.c.bf16 %v1324, %v1324
    %v1327 = vunpack.c.l.b16 %v1325
    %v1328 = vpack.c.b16 %v1327, %v1327
    %1329 = vrot.lane.b32.xlu0 %v1328, 32
    %v1330 = vpop.permute.xlu0 %1329
    %1332 = vst.msk [vmem:[#allocation4 + $0x4] sm:$0xf] %vm253, %v1330
    %1334 = vrot.lane.b32.xlu0 %v1324, 32
    %v1335 = vpop.permute.xlu0 %1334
    %s1337 = scalar_lea.vmem [#allocation3], 16
    %1338 = vst.msk [vmem:[%s1337] sm:$0xff] %vm629, %v1335
    %s1339 = scalar_lea.vmem [#allocation2], 24
    %v1340 = vld [vmem:[%s1339] sm:$0xff]
    %v1341 = vld [vmem:[#allocation4] sm:$0xf]
    %v1342 = vld [vmem:[#allocation5] sm:$0xf]
    %v1343 = vld [vmem:[#allocation5 + $0x4] sm:$0xf]
    %v1344 = vld [vmem:[#allocation5 + $0x8] sm:$0xf]
    %v1345 = vld [vmem:[#allocation5 + $0xc] sm:$0xf]
    %v1346 = vld [vmem:[#allocation5 + $0x10] sm:$0xf]
    %v1347 = vld [vmem:[#allocation5 + $0x14] sm:$0xf]
    %v1348 = vld [vmem:[#allocation5 + $0x18] sm:$0xf]
    %v1349 = vld [vmem:[#allocation5 + $0x1c] sm:$0xf]
    %v1350 = vld [vmem:[#allocation5 + $0x20] sm:$0xf]
    %v1351 = vld [vmem:[#allocation5 + $0x24] sm:$0xf]
    %v1352 = vld [vmem:[#allocation5 + $0x28] sm:$0xf]
    %v1353 = vld [vmem:[#allocation5 + $0x2c] sm:$0xf]
    %v1354 = vld [vmem:[#allocation5 + $0x30] sm:$0xf]
    %v1355 = vld [vmem:[#allocation5 + $0x34] sm:$0xf]
    %v1356 = vld [vmem:[#allocation5 + $0x38] sm:$0xf]
    %v1357 = vld [vmem:[#allocation5 + $0x3c] sm:$0xf]
    %v1374 = vunpack.c.l.b16 %v1342
    %v1375 = vunpack.c.l.b16 %v1343
    %v1376 = vunpack.c.l.b16 %v1344
    %v1377 = vunpack.c.l.b16 %v1345
    %v1378 = vunpack.c.l.b16 %v1346
    %v1379 = vunpack.c.l.b16 %v1347
    %v1380 = vunpack.c.l.b16 %v1348
    %v1381 = vunpack.c.l.b16 %v1349
    %v1382 = vunpack.c.l.b16 %v1350
    %v1383 = vunpack.c.l.b16 %v1351
    %v1384 = vunpack.c.l.b16 %v1352
    %v1385 = vunpack.c.l.b16 %v1353
    %v1386 = vunpack.c.l.b16 %v1354
    %v1387 = vunpack.c.l.b16 %v1355
    %v1388 = vunpack.c.l.b16 %v1356
    %v1389 = vunpack.c.l.b16 %v1357
    %v1390 = vpack.c.b16 %v1375, %v1374
    %v1391 = vpack.c.b16 %v1377, %v1376
    %v1392 = vpack.c.b16 %v1379, %v1378
    %v1393 = vpack.c.b16 %v1381, %v1380
    %v1394 = vpack.c.b16 %v1383, %v1382
    %v1395 = vpack.c.b16 %v1385, %v1384
    %v1396 = vpack.c.b16 %v1387, %v1386
    %v1397 = vpack.c.b16 %v1389, %v1388
    %1406 = vmatprep.subr.bf16.mxu0 0
    %1407 = vmatpush1.bf16.msra.mxu0 %v1390
    %1408 = vmatprep.subr.bf16.mxu0 0
    %1409 = vmatpush1.bf16.msra.mxu0 %v1391
    %1410 = vmatprep.subr.bf16.mxu0 0
    %1411 = vmatpush1.bf16.msra.mxu0 %v1392
    %1412 = vmatprep.subr.bf16.mxu0 0
    %1413 = vmatpush1.bf16.msra.mxu0 %v1393
    %1414 = vmatprep.subr.bf16.mxu0 0
    %1415 = vmatpush1.bf16.msra.mxu0 %v1394
    %1416 = vmatprep.subr.bf16.mxu0 0
    %1417 = vmatpush1.bf16.msra.mxu0 %v1395
    %1418 = vmatprep.subr.bf16.mxu0 0
    %1419 = vmatpush1.bf16.msra.mxu0 %v1396
    %1420 = vmatprep.subr.bf16.mxu0 0
    %1421 = vmatpush1.bf16.msra.mxu0 %v1397
    %1422 = vmatprep.subr.bf16.mxu0 0
    %1423 = vmatpush1.bf16.msra.mxu0 0
    %1424 = vmatprep.subr.bf16.mxu0 0
    %1425 = vmatpush1.bf16.msra.mxu0 0
    %1426 = vmatprep.subr.bf16.mxu0 0
    %1427 = vmatpush1.bf16.msra.mxu0 0
    %1428 = vmatprep.subr.bf16.mxu0 0
    %1429 = vmatpush1.bf16.msra.mxu0 0
    %1430 = vmatprep.subr.bf16.mxu0 0
    %1431 = vmatpush1.bf16.msra.mxu0 0
    %1432 = vmatprep.subr.bf16.mxu0 0
    %1433 = vmatpush1.bf16.msra.mxu0 0
    %1434 = vmatprep.subr.bf16.mxu0 0
    %1435 = vmatpush1.bf16.msra.mxu0 0
    %1436 = vmatprep.subr.bf16.mxu0 0
    %1437 = vmatpush1.bf16.msra.mxu0 0
    %1438 = vmatprep.mubr.bf16.mxu0 0
    %1439 = vmatmul.mubr.bf16.gmra.mrb[0].mxu0 %v1341
    %v1440 = vpop.f32.mrb[0].mxu0
    %v1441 = vadd.f32 0.0, %v1440
    %v1442 = vpop.f32.mrb[0].mxu0
    %v1443 = vpop.f32.mrb[0].mxu0
    %v1444 = vpop.f32.mrb[0].mxu0
    %1445 = vdwg.mxu0
    %v1446 = vadd.f32 %v1340, %v1441
    %v1447 = vxor.u32 %v1446, 2147483648
    %v1448 = vmul.f32 %v1447, 1.442695
    %v1449 = vpow.pop %v1448
    %v1450 = vadd.f32 %v1449, 1.0
    %v1451 = vrcp.pop %v1450
    %v1452 = vmul.f32 1.0, %v1451
    %v1453 = vtanh.pop %v1446
    %v1454 = vmul.f32 %v1452, %v1110
    %1456 = vrot.lane.b32.xlu0 %v1453, 64
    %v1457 = vpop.permute.xlu0 %1456
    %v1459 = vmul.f32 %v1452, %v1457
    %1461 = vrot.lane.b32.xlu0 %v1459, 32
    %v1462 = vpop.permute.xlu0 %1461
    %v1464 = vadd.f32 %v1454, %v1462
    %v1465 = vtanh.pop %v1464
    %1467 = vrot.lane.b32.xlu0 %v1465, 64
    %v1468 = vpop.permute.xlu0 %1467
    %v1470 = vmul.f32 %v1452, %v1468
    %v1471 = vpack.c.bf16 %v1470, %v1470
    %v1473 = vunpack.c.l.b16 %v1471
    %v1474 = vpack.c.b16 %v1473, %v1473
    %1475 = vrot.lane.b32.xlu0 %v1474, 32
    %v1476 = vpop.permute.xlu0 %1475
    %1478 = vst.msk [vmem:[#allocation4] sm:$0xf] %vm253, %v1476
    %v1479 = vld [vmem:[#allocation4] sm:$0xff]
    %v1480 = vld [vmem:[%s6] sm:$0xf]
    %v1481 = vld [vmem:[%s6 + $0x4] sm:$0xf]
    %v1482 = vld [vmem:[%s6 + $0x8] sm:$0xf]
    %v1483 = vld [vmem:[%s6 + $0xc] sm:$0xf]
    %v1484 = vld [vmem:[%s6 + $0x10] sm:$0xf]
    %v1485 = vld [vmem:[%s6 + $0x14] sm:$0xf]
    %v1486 = vld [vmem:[%s6 + $0x18] sm:$0xf]
    %v1487 = vld [vmem:[%s6 + $0x1c] sm:$0xf]
    %v1488 = vld [vmem:[%s6 + $0x20] sm:$0xf]
    %v1489 = vld [vmem:[%s6 + $0x24] sm:$0xf]
    %v1490 = vld [vmem:[%s6 + $0x28] sm:$0xf]
    %v1491 = vld [vmem:[%s6 + $0x2c] sm:$0xf]
    %v1492 = vld [vmem:[%s6 + $0x30] sm:$0xf]
    %v1493 = vld [vmem:[%s6 + $0x34] sm:$0xf]
    %v1494 = vld [vmem:[%s6 + $0x38] sm:$0xf]
    %v1495 = vld [vmem:[%s6 + $0x3c] sm:$0xf]
    %v1496 = vld [vmem:[%s6 + $0x40] sm:$0xf]
    %v1497 = vld [vmem:[%s6 + $0x44] sm:$0xf]
    %v1498 = vld [vmem:[%s6 + $0x48] sm:$0xf]
    %v1499 = vld [vmem:[%s6 + $0x4c] sm:$0xf]
    %v1500 = vld [vmem:[%s6 + $0x50] sm:$0xf]
    %v1501 = vld [vmem:[%s6 + $0x54] sm:$0xf]
    %v1502 = vld [vmem:[%s6 + $0x58] sm:$0xf]
    %v1503 = vld [vmem:[%s6 + $0x5c] sm:$0xf]
    %v1504 = vld [vmem:[%s6 + $0x60] sm:$0xf]
    %v1505 = vld [vmem:[%s6 + $0x64] sm:$0xf]
    %v1506 = vld [vmem:[%s6 + $0x68] sm:$0xf]
    %v1507 = vld [vmem:[%s6 + $0x6c] sm:$0xf]
    %v1508 = vld [vmem:[%s6 + $0x70] sm:$0xf]
    %v1509 = vld [vmem:[%s6 + $0x74] sm:$0xf]
    %v1510 = vld [vmem:[%s6 + $0x78] sm:$0xf]
    %v1511 = vld [vmem:[%s6 + $0x7c] sm:$0xf]
    %v1513 = vunpack.c.l.b16 %v1479
    %v1514 = vunpack.c.h.b16 %v1479
    %v1515 = vpack.c.b16 %v1513, %v1513
    %v1516 = vpack.c.b16 %v1514, %v1514
    %v1551 = vunpack.c.l.b16 %v1480
    %v1552 = vunpack.c.l.b16 %v1481
    %v1553 = vunpack.c.l.b16 %v1482
    %v1554 = vunpack.c.l.b16 %v1483
    %v1555 = vunpack.c.l.b16 %v1484
    %v1556 = vunpack.c.l.b16 %v1485
    %v1557 = vunpack.c.l.b16 %v1486
    %v1558 = vunpack.c.l.b16 %v1487
    %v1559 = vunpack.c.l.b16 %v1488
    %v1560 = vunpack.c.l.b16 %v1489
    %v1561 = vunpack.c.l.b16 %v1490
    %v1562 = vunpack.c.l.b16 %v1491
    %v1563 = vunpack.c.l.b16 %v1492
    %v1564 = vunpack.c.l.b16 %v1493
    %v1565 = vunpack.c.l.b16 %v1494
    %v1566 = vunpack.c.l.b16 %v1495
    %v1567 = vunpack.c.l.b16 %v1496
    %v1568 = vunpack.c.l.b16 %v1497
    %v1569 = vunpack.c.l.b16 %v1498
    %v1570 = vunpack.c.l.b16 %v1499
    %v1571 = vunpack.c.l.b16 %v1500
    %v1572 = vunpack.c.l.b16 %v1501
    %v1573 = vunpack.c.l.b16 %v1502
    %v1574 = vunpack.c.l.b16 %v1503
    %v1575 = vunpack.c.l.b16 %v1504
    %v1576 = vunpack.c.l.b16 %v1505
    %v1577 = vunpack.c.l.b16 %v1506
    %v1578 = vunpack.c.l.b16 %v1507
    %v1579 = vunpack.c.l.b16 %v1508
    %v1580 = vunpack.c.l.b16 %v1509
    %v1581 = vunpack.c.l.b16 %v1510
    %v1582 = vunpack.c.l.b16 %v1511
    %v1583 = vpack.c.b16 %v1552, %v1551
    %v1584 = vpack.c.b16 %v1554, %v1553
    %v1585 = vpack.c.b16 %v1556, %v1555
    %v1586 = vpack.c.b16 %v1558, %v1557
    %v1587 = vpack.c.b16 %v1560, %v1559
    %v1588 = vpack.c.b16 %v1562, %v1561
    %v1589 = vpack.c.b16 %v1564, %v1563
    %v1590 = vpack.c.b16 %v1566, %v1565
    %v1591 = vpack.c.b16 %v1568, %v1567
    %v1592 = vpack.c.b16 %v1570, %v1569
    %v1593 = vpack.c.b16 %v1572, %v1571
    %v1594 = vpack.c.b16 %v1574, %v1573
    %v1595 = vpack.c.b16 %v1576, %v1575
    %v1596 = vpack.c.b16 %v1578, %v1577
    %v1597 = vpack.c.b16 %v1580, %v1579
    %v1598 = vpack.c.b16 %v1582, %v1581
    %1615 = vmatprep.subr.bf16.mxu0 0
    %1616 = vmatpush1.bf16.msra.mxu0 %v1583
    %1617 = vmatprep.subr.bf16.mxu0 0
    %1618 = vmatpush1.bf16.msra.mxu0 %v1584
    %1619 = vmatprep.subr.bf16.mxu0 0
    %1620 = vmatpush1.bf16.msra.mxu0 %v1585
    %1621 = vmatprep.subr.bf16.mxu0 0
    %1622 = vmatpush1.bf16.msra.mxu0 %v1586
    %1623 = vmatprep.subr.bf16.mxu0 0
    %1624 = vmatpush1.bf16.msra.mxu0 %v1587
    %1625 = vmatprep.subr.bf16.mxu0 0
    %1626 = vmatpush1.bf16.msra.mxu0 %v1588
    %1627 = vmatprep.subr.bf16.mxu0 0
    %1628 = vmatpush1.bf16.msra.mxu0 %v1589
    %1629 = vmatprep.subr.bf16.mxu0 0
    %1630 = vmatpush1.bf16.msra.mxu0 %v1590
    %1631 = vmatprep.subr.bf16.mxu0 0
    %1632 = vmatpush1.bf16.msra.mxu0 %v1591
    %1633 = vmatprep.subr.bf16.mxu0 0
    %1634 = vmatpush1.bf16.msra.mxu0 %v1592
    %1635 = vmatprep.subr.bf16.mxu0 0
    %1636 = vmatpush1.bf16.msra.mxu0 %v1593
    %1637 = vmatprep.subr.bf16.mxu0 0
    %1638 = vmatpush1.bf16.msra.mxu0 %v1594
    %1639 = vmatprep.subr.bf16.mxu0 0
    %1640 = vmatpush1.bf16.msra.mxu0 %v1595
    %1641 = vmatprep.subr.bf16.mxu0 0
    %1642 = vmatpush1.bf16.msra.mxu0 %v1596
    %1643 = vmatprep.subr.bf16.mxu0 0
    %1644 = vmatpush1.bf16.msra.mxu0 %v1597
    %1645 = vmatprep.subr.bf16.mxu0 0
    %1646 = vmatpush1.bf16.msra.mxu0 %v1598
    %1647 = vmatprep.mubr.bf16.mxu0 %v1516
    %1648 = vmatmul.mubr.bf16.gmra.mrb[0].mxu0 %v1515
    %v1649 = vpop.f32.mrb[0].mxu0
    %v1650 = vadd.f32 %v248, %v1649
    %v1651 = vpop.f32.mrb[0].mxu0
    %v1652 = vpop.f32.mrb[0].mxu0
    %v1653 = vpop.f32.mrb[0].mxu0
    %1654 = vdwg.mxu0
    %v1655 = vxor.u32 %v1650, 2147483648
    %v1656 = vmul.f32 %v1655, 1.442695
    %v1657 = vpow.pop %v1656
    %v1658 = vadd.f32 %v1657, 1.0
    %v1659 = vrcp.pop %v1658
    %v1660 = vmul.f32 1.0, %v1659
    %v1661 = vtanh.pop %v1650
    %v1662 = vmul.f32 %v1660, %v1318
    %1664 = vrot.lane.b32.xlu0 %v1661, 64
    %v1665 = vpop.permute.xlu0 %1664
    %v1667 = vmul.f32 %v1660, %v1665
    %1669 = vrot.lane.b32.xlu0 %v1667, 32
    %v1670 = vpop.permute.xlu0 %1669
    %v1672 = vadd.f32 %v1662, %v1670
    %v1673 = vtanh.pop %v1672
    %1675 = vrot.lane.b32.xlu0 %v1673, 64
    %v1676 = vpop.permute.xlu0 %1675
    %v1678 = vmul.f32 %v1660, %v1676
    %v1679 = vpack.c.bf16 %v1678, %v1678
    %v1681 = vunpack.c.l.b16 %v1679
    %v1682 = vpack.c.b16 %v1681, %v1681
    %1683 = vrot.lane.b32.xlu0 %v1682, 32
    %v1684 = vpop.permute.xlu0 %1683
    %1686 = vst.msk [vmem:[#allocation4 + $0x4] sm:$0xf] %vm253, %v1684
    %1688 = vrot.lane.b32.xlu0 %v1678, 32
    %v1689 = vpop.permute.xlu0 %1688
    %s1691 = scalar_lea.vmem [#allocation3], 24
    %1692 = vst.msk [vmem:[%s1691] sm:$0xff] %vm629, %v1689
    %s1693 = scalar_lea.vmem [#allocation2], 32
    %v1694 = vld [vmem:[%s1693] sm:$0xff]
    %v1695 = vld [vmem:[#allocation4] sm:$0xf]
    %v1696 = vld [vmem:[#allocation5] sm:$0xf]
    %v1697 = vld [vmem:[#allocation5 + $0x4] sm:$0xf]
    %v1698 = vld [vmem:[#allocation5 + $0x8] sm:$0xf]
    %v1699 = vld [vmem:[#allocation5 + $0xc] sm:$0xf]
    %v1700 = vld [vmem:[#allocation5 + $0x10] sm:$0xf]
    %v1701 = vld [vmem:[#allocation5 + $0x14] sm:$0xf]
    %v1702 = vld [vmem:[#allocation5 + $0x18] sm:$0xf]
    %v1703 = vld [vmem:[#allocation5 + $0x1c] sm:$0xf]
    %v1704 = vld [vmem:[#allocation5 + $0x20] sm:$0xf]
    %v1705 = vld [vmem:[#allocation5 + $0x24] sm:$0xf]
    %v1706 = vld [vmem:[#allocation5 + $0x28] sm:$0xf]
    %v1707 = vld [vmem:[#allocation5 + $0x2c] sm:$0xf]
    %v1708 = vld [vmem:[#allocation5 + $0x30] sm:$0xf]
    %v1709 = vld [vmem:[#allocation5 + $0x34] sm:$0xf]
    %v1710 = vld [vmem:[#allocation5 + $0x38] sm:$0xf]
    %v1711 = vld [vmem:[#allocation5 + $0x3c] sm:$0xf]
    %v1728 = vunpack.c.l.b16 %v1696
    %v1729 = vunpack.c.l.b16 %v1697
    %v1730 = vunpack.c.l.b16 %v1698
    %v1731 = vunpack.c.l.b16 %v1699
    %v1732 = vunpack.c.l.b16 %v1700
    %v1733 = vunpack.c.l.b16 %v1701
    %v1734 = vunpack.c.l.b16 %v1702
    %v1735 = vunpack.c.l.b16 %v1703
    %v1736 = vunpack.c.l.b16 %v1704
    %v1737 = vunpack.c.l.b16 %v1705
    %v1738 = vunpack.c.l.b16 %v1706
    %v1739 = vunpack.c.l.b16 %v1707
    %v1740 = vunpack.c.l.b16 %v1708
    %v1741 = vunpack.c.l.b16 %v1709
    %v1742 = vunpack.c.l.b16 %v1710
    %v1743 = vunpack.c.l.b16 %v1711
    %v1744 = vpack.c.b16 %v1729, %v1728
    %v1745 = vpack.c.b16 %v1731, %v1730
    %v1746 = vpack.c.b16 %v1733, %v1732
    %v1747 = vpack.c.b16 %v1735, %v1734
    %v1748 = vpack.c.b16 %v1737, %v1736
    %v1749 = vpack.c.b16 %v1739, %v1738
    %v1750 = vpack.c.b16 %v1741, %v1740
    %v1751 = vpack.c.b16 %v1743, %v1742
    %1760 = vmatprep.subr.bf16.mxu0 0
    %1761 = vmatpush1.bf16.msra.mxu0 %v1744
    %1762 = vmatprep.subr.bf16.mxu0 0
    %1763 = vmatpush1.bf16.msra.mxu0 %v1745
    %1764 = vmatprep.subr.bf16.mxu0 0
    %1765 = vmatpush1.bf16.msra.mxu0 %v1746
    %1766 = vmatprep.subr.bf16.mxu0 0
    %1767 = vmatpush1.bf16.msra.mxu0 %v1747
    %1768 = vmatprep.subr.bf16.mxu0 0
    %1769 = vmatpush1.bf16.msra.mxu0 %v1748
    %1770 = vmatprep.subr.bf16.mxu0 0
    %1771 = vmatpush1.bf16.msra.mxu0 %v1749
    %1772 = vmatprep.subr.bf16.mxu0 0
    %1773 = vmatpush1.bf16.msra.mxu0 %v1750
    %1774 = vmatprep.subr.bf16.mxu0 0
    %1775 = vmatpush1.bf16.msra.mxu0 %v1751
    %1776 = vmatprep.subr.bf16.mxu0 0
    %1777 = vmatpush1.bf16.msra.mxu0 0
    %1778 = vmatprep.subr.bf16.mxu0 0
    %1779 = vmatpush1.bf16.msra.mxu0 0
    %1780 = vmatprep.subr.bf16.mxu0 0
    %1781 = vmatpush1.bf16.msra.mxu0 0
    %1782 = vmatprep.subr.bf16.mxu0 0
    %1783 = vmatpush1.bf16.msra.mxu0 0
    %1784 = vmatprep.subr.bf16.mxu0 0
    %1785 = vmatpush1.bf16.msra.mxu0 0
    %1786 = vmatprep.subr.bf16.mxu0 0
    %1787 = vmatpush1.bf16.msra.mxu0 0
    %1788 = vmatprep.subr.bf16.mxu0 0
    %1789 = vmatpush1.bf16.msra.mxu0 0
    %1790 = vmatprep.subr.bf16.mxu0 0
    %1791 = vmatpush1.bf16.msra.mxu0 0
    %1792 = vmatprep.mubr.bf16.mxu0 0
    %1793 = vmatmul.mubr.bf16.gmra.mrb[0].mxu0 %v1695
    %v1794 = vpop.f32.mrb[0].mxu0
    %v1795 = vadd.f32 0.0, %v1794
    %v1796 = vpop.f32.mrb[0].mxu0
    %v1797 = vpop.f32.mrb[0].mxu0
    %v1798 = vpop.f32.mrb[0].mxu0
    %1799 = vdwg.mxu0
    %v1800 = vadd.f32 %v1694, %v1795
    %v1801 = vxor.u32 %v1800, 2147483648
    %v1802 = vmul.f32 %v1801, 1.442695
    %v1803 = vpow.pop %v1802
    %v1804 = vadd.f32 %v1803, 1.0
    %v1805 = vrcp.pop %v1804
    %v1806 = vmul.f32 1.0, %v1805
    %v1807 = vtanh.pop %v1800
    %v1808 = vmul.f32 %v1806, %v1464
    %1810 = vrot.lane.b32.xlu0 %v1807, 64
    %v1811 = vpop.permute.xlu0 %1810
    %v1813 = vmul.f32 %v1806, %v1811
    %1815 = vrot.lane.b32.xlu0 %v1813, 32
    %v1816 = vpop.permute.xlu0 %1815
    %v1818 = vadd.f32 %v1808, %v1816
    %v1819 = vtanh.pop %v1818
    %1821 = vrot.lane.b32.xlu0 %v1819, 64
    %v1822 = vpop.permute.xlu0 %1821
    %v1824 = vmul.f32 %v1806, %v1822
    %v1825 = vpack.c.bf16 %v1824, %v1824
    %v1827 = vunpack.c.l.b16 %v1825
    %v1828 = vpack.c.b16 %v1827, %v1827
    %1829 = vrot.lane.b32.xlu0 %v1828, 32
    %v1830 = vpop.permute.xlu0 %1829
    %1832 = vst.msk [vmem:[#allocation4] sm:$0xf] %vm253, %v1830
    %v1833 = vld [vmem:[#allocation4] sm:$0xff]
    %v1834 = vld [vmem:[%s6] sm:$0xf]
    %v1835 = vld [vmem:[%s6 + $0x4] sm:$0xf]
    %v1836 = vld [vmem:[%s6 + $0x8] sm:$0xf]
    %v1837 = vld [vmem:[%s6 + $0xc] sm:$0xf]
    %v1838 = vld [vmem:[%s6 + $0x10] sm:$0xf]
    %v1839 = vld [vmem:[%s6 + $0x14] sm:$0xf]
    %v1840 = vld [vmem:[%s6 + $0x18] sm:$0xf]
    %v1841 = vld [vmem:[%s6 + $0x1c] sm:$0xf]
    %v1842 = vld [vmem:[%s6 + $0x20] sm:$0xf]
    %v1843 = vld [vmem:[%s6 + $0x24] sm:$0xf]
    %v1844 = vld [vmem:[%s6 + $0x28] sm:$0xf]
    %v1845 = vld [vmem:[%s6 + $0x2c] sm:$0xf]
    %v1846 = vld [vmem:[%s6 + $0x30] sm:$0xf]
    %v1847 = vld [vmem:[%s6 + $0x34] sm:$0xf]
    %v1848 = vld [vmem:[%s6 + $0x38] sm:$0xf]
    %v1849 = vld [vmem:[%s6 + $0x3c] sm:$0xf]
    %v1850 = vld [vmem:[%s6 + $0x40] sm:$0xf]
    %v1851 = vld [vmem:[%s6 + $0x44] sm:$0xf]
    %v1852 = vld [vmem:[%s6 + $0x48] sm:$0xf]
    %v1853 = vld [vmem:[%s6 + $0x4c] sm:$0xf]
    %v1854 = vld [vmem:[%s6 + $0x50] sm:$0xf]
    %v1855 = vld [vmem:[%s6 + $0x54] sm:$0xf]
    %v1856 = vld [vmem:[%s6 + $0x58] sm:$0xf]
    %v1857 = vld [vmem:[%s6 + $0x5c] sm:$0xf]
    %v1858 = vld [vmem:[%s6 + $0x60] sm:$0xf]
    %v1859 = vld [vmem:[%s6 + $0x64] sm:$0xf]
    %v1860 = vld [vmem:[%s6 + $0x68] sm:$0xf]
    %v1861 = vld [vmem:[%s6 + $0x6c] sm:$0xf]
    %v1862 = vld [vmem:[%s6 + $0x70] sm:$0xf]
    %v1863 = vld [vmem:[%s6 + $0x74] sm:$0xf]
    %v1864 = vld [vmem:[%s6 + $0x78] sm:$0xf]
    %v1865 = vld [vmem:[%s6 + $0x7c] sm:$0xf]
    %v1867 = vunpack.c.l.b16 %v1833
    %v1868 = vunpack.c.h.b16 %v1833
    %v1869 = vpack.c.b16 %v1867, %v1867
    %v1870 = vpack.c.b16 %v1868, %v1868
    %v1905 = vunpack.c.l.b16 %v1834
    %v1906 = vunpack.c.l.b16 %v1835
    %v1907 = vunpack.c.l.b16 %v1836
    %v1908 = vunpack.c.l.b16 %v1837
    %v1909 = vunpack.c.l.b16 %v1838
    %v1910 = vunpack.c.l.b16 %v1839
    %v1911 = vunpack.c.l.b16 %v1840
    %v1912 = vunpack.c.l.b16 %v1841
    %v1913 = vunpack.c.l.b16 %v1842
    %v1914 = vunpack.c.l.b16 %v1843
    %v1915 = vunpack.c.l.b16 %v1844
    %v1916 = vunpack.c.l.b16 %v1845
    %v1917 = vunpack.c.l.b16 %v1846
    %v1918 = vunpack.c.l.b16 %v1847
    %v1919 = vunpack.c.l.b16 %v1848
    %v1920 = vunpack.c.l.b16 %v1849
    %v1921 = vunpack.c.l.b16 %v1850
    %v1922 = vunpack.c.l.b16 %v1851
    %v1923 = vunpack.c.l.b16 %v1852
    %v1924 = vunpack.c.l.b16 %v1853
    %v1925 = vunpack.c.l.b16 %v1854
    %v1926 = vunpack.c.l.b16 %v1855
    %v1927 = vunpack.c.l.b16 %v1856
    %v1928 = vunpack.c.l.b16 %v1857
    %v1929 = vunpack.c.l.b16 %v1858
    %v1930 = vunpack.c.l.b16 %v1859
    %v1931 = vunpack.c.l.b16 %v1860
    %v1932 = vunpack.c.l.b16 %v1861
    %v1933 = vunpack.c.l.b16 %v1862
    %v1934 = vunpack.c.l.b16 %v1863
    %v1935 = vunpack.c.l.b16 %v1864
    %v1936 = vunpack.c.l.b16 %v1865
    %v1937 = vpack.c.b16 %v1906, %v1905
    %v1938 = vpack.c.b16 %v1908, %v1907
    %v1939 = vpack.c.b16 %v1910, %v1909
    %v1940 = vpack.c.b16 %v1912, %v1911
    %v1941 = vpack.c.b16 %v1914, %v1913
    %v1942 = vpack.c.b16 %v1916, %v1915
    %v1943 = vpack.c.b16 %v1918, %v1917
    %v1944 = vpack.c.b16 %v1920, %v1919
    %v1945 = vpack.c.b16 %v1922, %v1921
    %v1946 = vpack.c.b16 %v1924, %v1923
    %v1947 = vpack.c.b16 %v1926, %v1925
    %v1948 = vpack.c.b16 %v1928, %v1927
    %v1949 = vpack.c.b16 %v1930, %v1929
    %v1950 = vpack.c.b16 %v1932, %v1931
    %v1951 = vpack.c.b16 %v1934, %v1933
    %v1952 = vpack.c.b16 %v1936, %v1935
    %1969 = vmatprep.subr.bf16.mxu0 0
    %1970 = vmatpush1.bf16.msra.mxu0 %v1937
    %1971 = vmatprep.subr.bf16.mxu0 0
    %1972 = vmatpush1.bf16.msra.mxu0 %v1938
    %1973 = vmatprep.subr.bf16.mxu0 0
    %1974 = vmatpush1.bf16.msra.mxu0 %v1939
    %1975 = vmatprep.subr.bf16.mxu0 0
    %1976 = vmatpush1.bf16.msra.mxu0 %v1940
    %1977 = vmatprep.subr.bf16.mxu0 0
    %1978 = vmatpush1.bf16.msra.mxu0 %v1941
    %1979 = vmatprep.subr.bf16.mxu0 0
    %1980 = vmatpush1.bf16.msra.mxu0 %v1942
    %1981 = vmatprep.subr.bf16.mxu0 0
    %1982 = vmatpush1.bf16.msra.mxu0 %v1943
    %1983 = vmatprep.subr.bf16.mxu0 0
    %1984 = vmatpush1.bf16.msra.mxu0 %v1944
    %1985 = vmatprep.subr.bf16.mxu0 0
    %1986 = vmatpush1.bf16.msra.mxu0 %v1945
    %1987 = vmatprep.subr.bf16.mxu0 0
    %1988 = vmatpush1.bf16.msra.mxu0 %v1946
    %1989 = vmatprep.subr.bf16.mxu0 0
    %1990 = vmatpush1.bf16.msra.mxu0 %v1947
    %1991 = vmatprep.subr.bf16.mxu0 0
    %1992 = vmatpush1.bf16.msra.mxu0 %v1948
    %1993 = vmatprep.subr.bf16.mxu0 0
    %1994 = vmatpush1.bf16.msra.mxu0 %v1949
    %1995 = vmatprep.subr.bf16.mxu0 0
    %1996 = vmatpush1.bf16.msra.mxu0 %v1950
    %1997 = vmatprep.subr.bf16.mxu0 0
    %1998 = vmatpush1.bf16.msra.mxu0 %v1951
    %1999 = vmatprep.subr.bf16.mxu0 0
    %2000 = vmatpush1.bf16.msra.mxu0 %v1952
    %2001 = vmatprep.mubr.bf16.mxu0 %v1870
    %2002 = vmatmul.mubr.bf16.gmra.mrb[0].mxu0 %v1869
    %v2003 = vpop.f32.mrb[0].mxu0
    %v2004 = vadd.f32 %v248, %v2003
    %v2005 = vpop.f32.mrb[0].mxu0
    %v2006 = vpop.f32.mrb[0].mxu0
    %v2007 = vpop.f32.mrb[0].mxu0
    %2008 = vdwg.mxu0
    %v2009 = vxor.u32 %v2004, 2147483648
    %v2010 = vmul.f32 %v2009, 1.442695
    %v2011 = vpow.pop %v2010
    %v2012 = vadd.f32 %v2011, 1.0
    %v2013 = vrcp.pop %v2012
    %v2014 = vmul.f32 1.0, %v2013
    %v2015 = vtanh.pop %v2004
    %v2016 = vmul.f32 %v2014, %v1672
    %2018 = vrot.lane.b32.xlu0 %v2015, 64
    %v2019 = vpop.permute.xlu0 %2018
    %v2021 = vmul.f32 %v2014, %v2019
    %2023 = vrot.lane.b32.xlu0 %v2021, 32
    %v2024 = vpop.permute.xlu0 %2023
    %v2026 = vadd.f32 %v2016, %v2024
    %v2027 = vtanh.pop %v2026
    %2029 = vrot.lane.b32.xlu0 %v2027, 64
    %v2030 = vpop.permute.xlu0 %2029
    %v2032 = vmul.f32 %v2014, %v2030
    %v2033 = vpack.c.bf16 %v2032, %v2032
    %v2035 = vunpack.c.l.b16 %v2033
    %v2036 = vpack.c.b16 %v2035, %v2035
    %2037 = vrot.lane.b32.xlu0 %v2036, 32
    %v2038 = vpop.permute.xlu0 %2037
    %2040 = vst.msk [vmem:[#allocation4 + $0x4] sm:$0xf] %vm253, %v2038
    %2042 = vrot.lane.b32.xlu0 %v2032, 32
    %v2043 = vpop.permute.xlu0 %2042
    %s2045 = scalar_lea.vmem [#allocation3], 32
    %2046 = vst.msk [vmem:[%s2045] sm:$0xff] %vm629, %v2043
    %s2047 = scalar_lea.vmem [#allocation2], 40
    %v2048 = vld [vmem:[%s2047] sm:$0xff]
    %v2049 = vld [vmem:[#allocation4] sm:$0xf]
    %v2050 = vld [vmem:[#allocation5] sm:$0xf]
    %v2051 = vld [vmem:[#allocation5 + $0x4] sm:$0xf]
    %v2052 = vld [vmem:[#allocation5 + $0x8] sm:$0xf]
    %v2053 = vld [vmem:[#allocation5 + $0xc] sm:$0xf]
    %v2054 = vld [vmem:[#allocation5 + $0x10] sm:$0xf]
    %v2055 = vld [vmem:[#allocation5 + $0x14] sm:$0xf]
    %v2056 = vld [vmem:[#allocation5 + $0x18] sm:$0xf]
    %v2057 = vld [vmem:[#allocation5 + $0x1c] sm:$0xf]
    %v2058 = vld [vmem:[#allocation5 + $0x20] sm:$0xf]
    %v2059 = vld [vmem:[#allocation5 + $0x24] sm:$0xf]
    %v2060 = vld [vmem:[#allocation5 + $0x28] sm:$0xf]
    %v2061 = vld [vmem:[#allocation5 + $0x2c] sm:$0xf]
    %v2062 = vld [vmem:[#allocation5 + $0x30] sm:$0xf]
    %v2063 = vld [vmem:[#allocation5 + $0x34] sm:$0xf]
    %v2064 = vld [vmem:[#allocation5 + $0x38] sm:$0xf]
    %v2065 = vld [vmem:[#allocation5 + $0x3c] sm:$0xf]
    %v2082 = vunpack.c.l.b16 %v2050
    %v2083 = vunpack.c.l.b16 %v2051
    %v2084 = vunpack.c.l.b16 %v2052
    %v2085 = vunpack.c.l.b16 %v2053
    %v2086 = vunpack.c.l.b16 %v2054
    %v2087 = vunpack.c.l.b16 %v2055
    %v2088 = vunpack.c.l.b16 %v2056
    %v2089 = vunpack.c.l.b16 %v2057
    %v2090 = vunpack.c.l.b16 %v2058
    %v2091 = vunpack.c.l.b16 %v2059
    %v2092 = vunpack.c.l.b16 %v2060
    %v2093 = vunpack.c.l.b16 %v2061
    %v2094 = vunpack.c.l.b16 %v2062
    %v2095 = vunpack.c.l.b16 %v2063
    %v2096 = vunpack.c.l.b16 %v2064
    %v2097 = vunpack.c.l.b16 %v2065
    %v2098 = vpack.c.b16 %v2083, %v2082
    %v2099 = vpack.c.b16 %v2085, %v2084
    %v2100 = vpack.c.b16 %v2087, %v2086
    %v2101 = vpack.c.b16 %v2089, %v2088
    %v2102 = vpack.c.b16 %v2091, %v2090
    %v2103 = vpack.c.b16 %v2093, %v2092
    %v2104 = vpack.c.b16 %v2095, %v2094
    %v2105 = vpack.c.b16 %v2097, %v2096
    %2114 = vmatprep.subr.bf16.mxu0 0
    %2115 = vmatpush1.bf16.msra.mxu0 %v2098
    %2116 = vmatprep.subr.bf16.mxu0 0
    %2117 = vmatpush1.bf16.msra.mxu0 %v2099
    %2118 = vmatprep.subr.bf16.mxu0 0
    %2119 = vmatpush1.bf16.msra.mxu0 %v2100
    %2120 = vmatprep.subr.bf16.mxu0 0
    %2121 = vmatpush1.bf16.msra.mxu0 %v2101
    %2122 = vmatprep.subr.bf16.mxu0 0
    %2123 = vmatpush1.bf16.msra.mxu0 %v2102
    %2124 = vmatprep.subr.bf16.mxu0 0
    %2125 = vmatpush1.bf16.msra.mxu0 %v2103
    %2126 = vmatprep.subr.bf16.mxu0 0
    %2127 = vmatpush1.bf16.msra.mxu0 %v2104
    %2128 = vmatprep.subr.bf16.mxu0 0
    %2129 = vmatpush1.bf16.msra.mxu0 %v2105
    %2130 = vmatprep.subr.bf16.mxu0 0
    %2131 = vmatpush1.bf16.msra.mxu0 0
    %2132 = vmatprep.subr.bf16.mxu0 0
    %2133 = vmatpush1.bf16.msra.mxu0 0
    %2134 = vmatprep.subr.bf16.mxu0 0
    %2135 = vmatpush1.bf16.msra.mxu0 0
    %2136 = vmatprep.subr.bf16.mxu0 0
    %2137 = vmatpush1.bf16.msra.mxu0 0
    %2138 = vmatprep.subr.bf16.mxu0 0
    %2139 = vmatpush1.bf16.msra.mxu0 0
    %2140 = vmatprep.subr.bf16.mxu0 0
    %2141 = vmatpush1.bf16.msra.mxu0 0
    %2142 = vmatprep.subr.bf16.mxu0 0
    %2143 = vmatpush1.bf16.msra.mxu0 0
    %2144 = vmatprep.subr.bf16.mxu0 0
    %2145 = vmatpush1.bf16.msra.mxu0 0
    %2146 = vmatprep.mubr.bf16.mxu0 0
    %2147 = vmatmul.mubr.bf16.gmra.mrb[0].mxu0 %v2049
    %v2148 = vpop.f32.mrb[0].mxu0
    %v2149 = vadd.f32 0.0, %v2148
    %v2150 = vpop.f32.mrb[0].mxu0
    %v2151 = vpop.f32.mrb[0].mxu0
    %v2152 = vpop.f32.mrb[0].mxu0
    %2153 = vdwg.mxu0
    %v2154 = vadd.f32 %v2048, %v2149
    %v2155 = vxor.u32 %v2154, 2147483648
    %v2156 = vmul.f32 %v2155, 1.442695
    %v2157 = vpow.pop %v2156
    %v2158 = vadd.f32 %v2157, 1.0
    %v2159 = vrcp.pop %v2158
    %v2160 = vmul.f32 1.0, %v2159
    %v2161 = vtanh.pop %v2154
    %v2162 = vmul.f32 %v2160, %v1818
    %2164 = vrot.lane.b32.xlu0 %v2161, 64
    %v2165 = vpop.permute.xlu0 %2164
    %v2167 = vmul.f32 %v2160, %v2165
    %2169 = vrot.lane.b32.xlu0 %v2167, 32
    %v2170 = vpop.permute.xlu0 %2169
    %v2172 = vadd.f32 %v2162, %v2170
    %v2173 = vtanh.pop %v2172
    %2175 = vrot.lane.b32.xlu0 %v2173, 64
    %v2176 = vpop.permute.xlu0 %2175
    %v2178 = vmul.f32 %v2160, %v2176
    %v2179 = vpack.c.bf16 %v2178, %v2178
    %v2181 = vunpack.c.l.b16 %v2179
    %v2182 = vpack.c.b16 %v2181, %v2181
    %2183 = vrot.lane.b32.xlu0 %v2182, 32
    %v2184 = vpop.permute.xlu0 %2183
    %2186 = vst.msk [vmem:[#allocation4] sm:$0xf] %vm253, %v2184
    %v2187 = vld [vmem:[#allocation4] sm:$0xff]
    %v2188 = vld [vmem:[%s6] sm:$0xf]
    %v2189 = vld [vmem:[%s6 + $0x4] sm:$0xf]
    %v2190 = vld [vmem:[%s6 + $0x8] sm:$0xf]
    %v2191 = vld [vmem:[%s6 + $0xc] sm:$0xf]
    %v2192 = vld [vmem:[%s6 + $0x10] sm:$0xf]
    %v2193 = vld [vmem:[%s6 + $0x14] sm:$0xf]
    %v2194 = vld [vmem:[%s6 + $0x18] sm:$0xf]
    %v2195 = vld [vmem:[%s6 + $0x1c] sm:$0xf]
    %v2196 = vld [vmem:[%s6 + $0x20] sm:$0xf]
    %v2197 = vld [vmem:[%s6 + $0x24] sm:$0xf]
    %v2198 = vld [vmem:[%s6 + $0x28] sm:$0xf]
    %v2199 = vld [vmem:[%s6 + $0x2c] sm:$0xf]
    %v2200 = vld [vmem:[%s6 + $0x30] sm:$0xf]
    %v2201 = vld [vmem:[%s6 + $0x34] sm:$0xf]
    %v2202 = vld [vmem:[%s6 + $0x38] sm:$0xf]
    %v2203 = vld [vmem:[%s6 + $0x3c] sm:$0xf]
    %v2204 = vld [vmem:[%s6 + $0x40] sm:$0xf]
    %v2205 = vld [vmem:[%s6 + $0x44] sm:$0xf]
    %v2206 = vld [vmem:[%s6 + $0x48] sm:$0xf]
    %v2207 = vld [vmem:[%s6 + $0x4c] sm:$0xf]
    %v2208 = vld [vmem:[%s6 + $0x50] sm:$0xf]
    %v2209 = vld [vmem:[%s6 + $0x54] sm:$0xf]
    %v2210 = vld [vmem:[%s6 + $0x58] sm:$0xf]
    %v2211 = vld [vmem:[%s6 + $0x5c] sm:$0xf]
    %v2212 = vld [vmem:[%s6 + $0x60] sm:$0xf]
    %v2213 = vld [vmem:[%s6 + $0x64] sm:$0xf]
    %v2214 = vld [vmem:[%s6 + $0x68] sm:$0xf]
    %v2215 = vld [vmem:[%s6 + $0x6c] sm:$0xf]
    %v2216 = vld [vmem:[%s6 + $0x70] sm:$0xf]
    %v2217 = vld [vmem:[%s6 + $0x74] sm:$0xf]
    %v2218 = vld [vmem:[%s6 + $0x78] sm:$0xf]
    %v2219 = vld [vmem:[%s6 + $0x7c] sm:$0xf]
    %v2221 = vunpack.c.l.b16 %v2187
    %v2222 = vunpack.c.h.b16 %v2187
    %v2223 = vpack.c.b16 %v2221, %v2221
    %v2224 = vpack.c.b16 %v2222, %v2222
    %v2259 = vunpack.c.l.b16 %v2188
    %v2260 = vunpack.c.l.b16 %v2189
    %v2261 = vunpack.c.l.b16 %v2190
    %v2262 = vunpack.c.l.b16 %v2191
    %v2263 = vunpack.c.l.b16 %v2192
    %v2264 = vunpack.c.l.b16 %v2193
    %v2265 = vunpack.c.l.b16 %v2194
    %v2266 = vunpack.c.l.b16 %v2195
    %v2267 = vunpack.c.l.b16 %v2196
    %v2268 = vunpack.c.l.b16 %v2197
    %v2269 = vunpack.c.l.b16 %v2198
    %v2270 = vunpack.c.l.b16 %v2199
    %v2271 = vunpack.c.l.b16 %v2200
    %v2272 = vunpack.c.l.b16 %v2201
    %v2273 = vunpack.c.l.b16 %v2202
    %v2274 = vunpack.c.l.b16 %v2203
    %v2275 = vunpack.c.l.b16 %v2204
    %v2276 = vunpack.c.l.b16 %v2205
    %v2277 = vunpack.c.l.b16 %v2206
    %v2278 = vunpack.c.l.b16 %v2207
    %v2279 = vunpack.c.l.b16 %v2208
    %v2280 = vunpack.c.l.b16 %v2209
    %v2281 = vunpack.c.l.b16 %v2210
    %v2282 = vunpack.c.l.b16 %v2211
    %v2283 = vunpack.c.l.b16 %v2212
    %v2284 = vunpack.c.l.b16 %v2213
    %v2285 = vunpack.c.l.b16 %v2214
    %v2286 = vunpack.c.l.b16 %v2215
    %v2287 = vunpack.c.l.b16 %v2216
    %v2288 = vunpack.c.l.b16 %v2217
    %v2289 = vunpack.c.l.b16 %v2218
    %v2290 = vunpack.c.l.b16 %v2219
    %v2291 = vpack.c.b16 %v2260, %v2259
    %v2292 = vpack.c.b16 %v2262, %v2261
    %v2293 = vpack.c.b16 %v2264, %v2263
    %v2294 = vpack.c.b16 %v2266, %v2265
    %v2295 = vpack.c.b16 %v2268, %v2267
    %v2296 = vpack.c.b16 %v2270, %v2269
    %v2297 = vpack.c.b16 %v2272, %v2271
    %v2298 = vpack.c.b16 %v2274, %v2273
    %v2299 = vpack.c.b16 %v2276, %v2275
    %v2300 = vpack.c.b16 %v2278, %v2277
    %v2301 = vpack.c.b16 %v2280, %v2279
    %v2302 = vpack.c.b16 %v2282, %v2281
    %v2303 = vpack.c.b16 %v2284, %v2283
    %v2304 = vpack.c.b16 %v2286, %v2285
    %v2305 = vpack.c.b16 %v2288, %v2287
    %v2306 = vpack.c.b16 %v2290, %v2289
    %2323 = vmatprep.subr.bf16.mxu0 0
    %2324 = vmatpush1.bf16.msra.mxu0 %v2291
    %2325 = vmatprep.subr.bf16.mxu0 0
    %2326 = vmatpush1.bf16.msra.mxu0 %v2292
    %2327 = vmatprep.subr.bf16.mxu0 0
    %2328 = vmatpush1.bf16.msra.mxu0 %v2293
    %2329 = vmatprep.subr.bf16.mxu0 0
    %2330 = vmatpush1.bf16.msra.mxu0 %v2294
    %2331 = vmatprep.subr.bf16.mxu0 0
    %2332 = vmatpush1.bf16.msra.mxu0 %v2295
    %2333 = vmatprep.subr.bf16.mxu0 0
    %2334 = vmatpush1.bf16.msra.mxu0 %v2296
    %2335 = vmatprep.subr.bf16.mxu0 0
    %2336 = vmatpush1.bf16.msra.mxu0 %v2297
    %2337 = vmatprep.subr.bf16.mxu0 0
    %2338 = vmatpush1.bf16.msra.mxu0 %v2298
    %2339 = vmatprep.subr.bf16.mxu0 0
    %2340 = vmatpush1.bf16.msra.mxu0 %v2299
    %2341 = vmatprep.subr.bf16.mxu0 0
    %2342 = vmatpush1.bf16.msra.mxu0 %v2300
    %2343 = vmatprep.subr.bf16.mxu0 0
    %2344 = vmatpush1.bf16.msra.mxu0 %v2301
    %2345 = vmatprep.subr.bf16.mxu0 0
    %2346 = vmatpush1.bf16.msra.mxu0 %v2302
    %2347 = vmatprep.subr.bf16.mxu0 0
    %2348 = vmatpush1.bf16.msra.mxu0 %v2303
    %2349 = vmatprep.subr.bf16.mxu0 0
    %2350 = vmatpush1.bf16.msra.mxu0 %v2304
    %2351 = vmatprep.subr.bf16.mxu0 0
    %2352 = vmatpush1.bf16.msra.mxu0 %v2305
    %2353 = vmatprep.subr.bf16.mxu0 0
    %2354 = vmatpush1.bf16.msra.mxu0 %v2306
    %2355 = vmatprep.mubr.bf16.mxu0 %v2224
    %2356 = vmatmul.mubr.bf16.gmra.mrb[0].mxu0 %v2223
    %v2357 = vpop.f32.mrb[0].mxu0
    %v2358 = vadd.f32 %v248, %v2357
    %v2359 = vpop.f32.mrb[0].mxu0
    %v2360 = vpop.f32.mrb[0].mxu0
    %v2361 = vpop.f32.mrb[0].mxu0
    %2362 = vdwg.mxu0
    %v2363 = vxor.u32 %v2358, 2147483648
    %v2364 = vmul.f32 %v2363, 1.442695
    %v2365 = vpow.pop %v2364
    %v2366 = vadd.f32 %v2365, 1.0
    %v2367 = vrcp.pop %v2366
    %v2368 = vmul.f32 1.0, %v2367
    %v2369 = vtanh.pop %v2358
    %v2370 = vmul.f32 %v2368, %v2026
    %2372 = vrot.lane.b32.xlu0 %v2369, 64
    %v2373 = vpop.permute.xlu0 %2372
    %v2375 = vmul.f32 %v2368, %v2373
    %2377 = vrot.lane.b32.xlu0 %v2375, 32
    %v2378 = vpop.permute.xlu0 %2377
    %v2380 = vadd.f32 %v2370, %v2378
    %v2381 = vtanh.pop %v2380
    %2383 = vrot.lane.b32.xlu0 %v2381, 64
    %v2384 = vpop.permute.xlu0 %2383
    %v2386 = vmul.f32 %v2368, %v2384
    %v2387 = vpack.c.bf16 %v2386, %v2386
    %v2389 = vunpack.c.l.b16 %v2387
    %v2390 = vpack.c.b16 %v2389, %v2389
    %2391 = vrot.lane.b32.xlu0 %v2390, 32
    %v2392 = vpop.permute.xlu0 %2391
    %2394 = vst.msk [vmem:[#allocation4 + $0x4] sm:$0xf] %vm253, %v2392
    %2396 = vrot.lane.b32.xlu0 %v2386, 32
    %v2397 = vpop.permute.xlu0 %2396
    %s2399 = scalar_lea.vmem [#allocation3], 40
    %2400 = vst.msk [vmem:[%s2399] sm:$0xff] %vm629, %v2397
    %s2401 = scalar_lea.vmem [#allocation2], 48
    %v2402 = vld [vmem:[%s2401] sm:$0xff]
    %v2403 = vld [vmem:[#allocation4] sm:$0xf]
    %v2404 = vld [vmem:[#allocation5] sm:$0xf]
    %v2405 = vld [vmem:[#allocation5 + $0x4] sm:$0xf]
    %v2406 = vld [vmem:[#allocation5 + $0x8] sm:$0xf]
    %v2407 = vld [vmem:[#allocation5 + $0xc] sm:$0xf]
    %v2408 = vld [vmem:[#allocation5 + $0x10] sm:$0xf]
    %v2409 = vld [vmem:[#allocation5 + $0x14] sm:$0xf]
    %v2410 = vld [vmem:[#allocation5 + $0x18] sm:$0xf]
    %v2411 = vld [vmem:[#allocation5 + $0x1c] sm:$0xf]
    %v2412 = vld [vmem:[#allocation5 + $0x20] sm:$0xf]
    %v2413 = vld [vmem:[#allocation5 + $0x24] sm:$0xf]
    %v2414 = vld [vmem:[#allocation5 + $0x28] sm:$0xf]
    %v2415 = vld [vmem:[#allocation5 + $0x2c] sm:$0xf]
    %v2416 = vld [vmem:[#allocation5 + $0x30] sm:$0xf]
    %v2417 = vld [vmem:[#allocation5 + $0x34] sm:$0xf]
    %v2418 = vld [vmem:[#allocation5 + $0x38] sm:$0xf]
    %v2419 = vld [vmem:[#allocation5 + $0x3c] sm:$0xf]
    %v2436 = vunpack.c.l.b16 %v2404
    %v2437 = vunpack.c.l.b16 %v2405
    %v2438 = vunpack.c.l.b16 %v2406
    %v2439 = vunpack.c.l.b16 %v2407
    %v2440 = vunpack.c.l.b16 %v2408
    %v2441 = vunpack.c.l.b16 %v2409
    %v2442 = vunpack.c.l.b16 %v2410
    %v2443 = vunpack.c.l.b16 %v2411
    %v2444 = vunpack.c.l.b16 %v2412
    %v2445 = vunpack.c.l.b16 %v2413
    %v2446 = vunpack.c.l.b16 %v2414
    %v2447 = vunpack.c.l.b16 %v2415
    %v2448 = vunpack.c.l.b16 %v2416
    %v2449 = vunpack.c.l.b16 %v2417
    %v2450 = vunpack.c.l.b16 %v2418
    %v2451 = vunpack.c.l.b16 %v2419
    %v2452 = vpack.c.b16 %v2437, %v2436
    %v2453 = vpack.c.b16 %v2439, %v2438
    %v2454 = vpack.c.b16 %v2441, %v2440
    %v2455 = vpack.c.b16 %v2443, %v2442
    %v2456 = vpack.c.b16 %v2445, %v2444
    %v2457 = vpack.c.b16 %v2447, %v2446
    %v2458 = vpack.c.b16 %v2449, %v2448
    %v2459 = vpack.c.b16 %v2451, %v2450
    %2468 = vmatprep.subr.bf16.mxu0 0
    %2469 = vmatpush1.bf16.msra.mxu0 %v2452
    %2470 = vmatprep.subr.bf16.mxu0 0
    %2471 = vmatpush1.bf16.msra.mxu0 %v2453
    %2472 = vmatprep.subr.bf16.mxu0 0
    %2473 = vmatpush1.bf16.msra.mxu0 %v2454
    %2474 = vmatprep.subr.bf16.mxu0 0
    %2475 = vmatpush1.bf16.msra.mxu0 %v2455
    %2476 = vmatprep.subr.bf16.mxu0 0
    %2477 = vmatpush1.bf16.msra.mxu0 %v2456
    %2478 = vmatprep.subr.bf16.mxu0 0
    %2479 = vmatpush1.bf16.msra.mxu0 %v2457
    %2480 = vmatprep.subr.bf16.mxu0 0
    %2481 = vmatpush1.bf16.msra.mxu0 %v2458
    %2482 = vmatprep.subr.bf16.mxu0 0
    %2483 = vmatpush1.bf16.msra.mxu0 %v2459
    %2484 = vmatprep.subr.bf16.mxu0 0
    %2485 = vmatpush1.bf16.msra.mxu0 0
    %2486 = vmatprep.subr.bf16.mxu0 0
    %2487 = vmatpush1.bf16.msra.mxu0 0
    %2488 = vmatprep.subr.bf16.mxu0 0
    %2489 = vmatpush1.bf16.msra.mxu0 0
    %2490 = vmatprep.subr.bf16.mxu0 0
    %2491 = vmatpush1.bf16.msra.mxu0 0
    %2492 = vmatprep.subr.bf16.mxu0 0
    %2493 = vmatpush1.bf16.msra.mxu0 0
    %2494 = vmatprep.subr.bf16.mxu0 0
    %2495 = vmatpush1.bf16.msra.mxu0 0
    %2496 = vmatprep.subr.bf16.mxu0 0
    %2497 = vmatpush1.bf16.msra.mxu0 0
    %2498 = vmatprep.subr.bf16.mxu0 0
    %2499 = vmatpush1.bf16.msra.mxu0 0
    %2500 = vmatprep.mubr.bf16.mxu0 0
    %2501 = vmatmul.mubr.bf16.gmra.mrb[0].mxu0 %v2403
    %v2502 = vpop.f32.mrb[0].mxu0
    %v2503 = vadd.f32 0.0, %v2502
    %v2504 = vpop.f32.mrb[0].mxu0
    %v2505 = vpop.f32.mrb[0].mxu0
    %v2506 = vpop.f32.mrb[0].mxu0
    %2507 = vdwg.mxu0
    %v2508 = vadd.f32 %v2402, %v2503
    %v2509 = vxor.u32 %v2508, 2147483648
    %v2510 = vmul.f32 %v2509, 1.442695
    %v2511 = vpow.pop %v2510
    %v2512 = vadd.f32 %v2511, 1.0
    %v2513 = vrcp.pop %v2512
    %v2514 = vmul.f32 1.0, %v2513
    %v2515 = vtanh.pop %v2508
    %v2516 = vmul.f32 %v2514, %v2172
    %2518 = vrot.lane.b32.xlu0 %v2515, 64
    %v2519 = vpop.permute.xlu0 %2518
    %v2521 = vmul.f32 %v2514, %v2519
    %2523 = vrot.lane.b32.xlu0 %v2521, 32
    %v2524 = vpop.permute.xlu0 %2523
    %v2526 = vadd.f32 %v2516, %v2524
    %v2527 = vtanh.pop %v2526
    %2529 = vrot.lane.b32.xlu0 %v2527, 64
    %v2530 = vpop.permute.xlu0 %2529
    %v2532 = vmul.f32 %v2514, %v2530
    %v2533 = vpack.c.bf16 %v2532, %v2532
    %v2535 = vunpack.c.l.b16 %v2533
    %v2536 = vpack.c.b16 %v2535, %v2535
    %2537 = vrot.lane.b32.xlu0 %v2536, 32
    %v2538 = vpop.permute.xlu0 %2537
    %2540 = vst.msk [vmem:[#allocation4] sm:$0xf] %vm253, %v2538
    %v2541 = vld [vmem:[#allocation4] sm:$0xff]
    %v2542 = vld [vmem:[%s6] sm:$0xf]
    %v2543 = vld [vmem:[%s6 + $0x4] sm:$0xf]
    %v2544 = vld [vmem:[%s6 + $0x8] sm:$0xf]
    %v2545 = vld [vmem:[%s6 + $0xc] sm:$0xf]
    %v2546 = vld [vmem:[%s6 + $0x10] sm:$0xf]
    %v2547 = vld [vmem:[%s6 + $0x14] sm:$0xf]
    %v2548 = vld [vmem:[%s6 + $0x18] sm:$0xf]
    %v2549 = vld [vmem:[%s6 + $0x1c] sm:$0xf]
    %v2550 = vld [vmem:[%s6 + $0x20] sm:$0xf]
    %v2551 = vld [vmem:[%s6 + $0x24] sm:$0xf]
    %v2552 = vld [vmem:[%s6 + $0x28] sm:$0xf]
    %v2553 = vld [vmem:[%s6 + $0x2c] sm:$0xf]
    %v2554 = vld [vmem:[%s6 + $0x30] sm:$0xf]
    %v2555 = vld [vmem:[%s6 + $0x34] sm:$0xf]
    %v2556 = vld [vmem:[%s6 + $0x38] sm:$0xf]
    %v2557 = vld [vmem:[%s6 + $0x3c] sm:$0xf]
    %v2558 = vld [vmem:[%s6 + $0x40] sm:$0xf]
    %v2559 = vld [vmem:[%s6 + $0x44] sm:$0xf]
    %v2560 = vld [vmem:[%s6 + $0x48] sm:$0xf]
    %v2561 = vld [vmem:[%s6 + $0x4c] sm:$0xf]
    %v2562 = vld [vmem:[%s6 + $0x50] sm:$0xf]
    %v2563 = vld [vmem:[%s6 + $0x54] sm:$0xf]
    %v2564 = vld [vmem:[%s6 + $0x58] sm:$0xf]
    %v2565 = vld [vmem:[%s6 + $0x5c] sm:$0xf]
    %v2566 = vld [vmem:[%s6 + $0x60] sm:$0xf]
    %v2567 = vld [vmem:[%s6 + $0x64] sm:$0xf]
    %v2568 = vld [vmem:[%s6 + $0x68] sm:$0xf]
    %v2569 = vld [vmem:[%s6 + $0x6c] sm:$0xf]
    %v2570 = vld [vmem:[%s6 + $0x70] sm:$0xf]
    %v2571 = vld [vmem:[%s6 + $0x74] sm:$0xf]
    %v2572 = vld [vmem:[%s6 + $0x78] sm:$0xf]
    %v2573 = vld [vmem:[%s6 + $0x7c] sm:$0xf]
    %v2575 = vunpack.c.l.b16 %v2541
    %v2576 = vunpack.c.h.b16 %v2541
    %v2577 = vpack.c.b16 %v2575, %v2575
    %v2578 = vpack.c.b16 %v2576, %v2576
    %v2613 = vunpack.c.l.b16 %v2542
    %v2614 = vunpack.c.l.b16 %v2543
    %v2615 = vunpack.c.l.b16 %v2544
    %v2616 = vunpack.c.l.b16 %v2545
    %v2617 = vunpack.c.l.b16 %v2546
    %v2618 = vunpack.c.l.b16 %v2547
    %v2619 = vunpack.c.l.b16 %v2548
    %v2620 = vunpack.c.l.b16 %v2549
    %v2621 = vunpack.c.l.b16 %v2550
    %v2622 = vunpack.c.l.b16 %v2551
    %v2623 = vunpack.c.l.b16 %v2552
    %v2624 = vunpack.c.l.b16 %v2553
    %v2625 = vunpack.c.l.b16 %v2554
    %v2626 = vunpack.c.l.b16 %v2555
    %v2627 = vunpack.c.l.b16 %v2556
    %v2628 = vunpack.c.l.b16 %v2557
    %v2629 = vunpack.c.l.b16 %v2558
    %v2630 = vunpack.c.l.b16 %v2559
    %v2631 = vunpack.c.l.b16 %v2560
    %v2632 = vunpack.c.l.b16 %v2561
    %v2633 = vunpack.c.l.b16 %v2562
    %v2634 = vunpack.c.l.b16 %v2563
    %v2635 = vunpack.c.l.b16 %v2564
    %v2636 = vunpack.c.l.b16 %v2565
    %v2637 = vunpack.c.l.b16 %v2566
    %v2638 = vunpack.c.l.b16 %v2567
    %v2639 = vunpack.c.l.b16 %v2568
    %v2640 = vunpack.c.l.b16 %v2569
    %v2641 = vunpack.c.l.b16 %v2570
    %v2642 = vunpack.c.l.b16 %v2571
    %v2643 = vunpack.c.l.b16 %v2572
    %v2644 = vunpack.c.l.b16 %v2573
    %v2645 = vpack.c.b16 %v2614, %v2613
    %v2646 = vpack.c.b16 %v2616, %v2615
    %v2647 = vpack.c.b16 %v2618, %v2617
    %v2648 = vpack.c.b16 %v2620, %v2619
    %v2649 = vpack.c.b16 %v2622, %v2621
    %v2650 = vpack.c.b16 %v2624, %v2623
    %v2651 = vpack.c.b16 %v2626, %v2625
    %v2652 = vpack.c.b16 %v2628, %v2627
    %v2653 = vpack.c.b16 %v2630, %v2629
    %v2654 = vpack.c.b16 %v2632, %v2631
    %v2655 = vpack.c.b16 %v2634, %v2633
    %v2656 = vpack.c.b16 %v2636, %v2635
    %v2657 = vpack.c.b16 %v2638, %v2637
    %v2658 = vpack.c.b16 %v2640, %v2639
    %v2659 = vpack.c.b16 %v2642, %v2641
    %v2660 = vpack.c.b16 %v2644, %v2643
    %2677 = vmatprep.subr.bf16.mxu0 0
    %2678 = vmatpush1.bf16.msra.mxu0 %v2645
    %2679 = vmatprep.subr.bf16.mxu0 0
    %2680 = vmatpush1.bf16.msra.mxu0 %v2646
    %2681 = vmatprep.subr.bf16.mxu0 0
    %2682 = vmatpush1.bf16.msra.mxu0 %v2647
    %2683 = vmatprep.subr.bf16.mxu0 0
    %2684 = vmatpush1.bf16.msra.mxu0 %v2648
    %2685 = vmatprep.subr.bf16.mxu0 0
    %2686 = vmatpush1.bf16.msra.mxu0 %v2649
    %2687 = vmatprep.subr.bf16.mxu0 0
    %2688 = vmatpush1.bf16.msra.mxu0 %v2650
    %2689 = vmatprep.subr.bf16.mxu0 0
    %2690 = vmatpush1.bf16.msra.mxu0 %v2651
    %2691 = vmatprep.subr.bf16.mxu0 0
    %2692 = vmatpush1.bf16.msra.mxu0 %v2652
    %2693 = vmatprep.subr.bf16.mxu0 0
    %2694 = vmatpush1.bf16.msra.mxu0 %v2653
    %2695 = vmatprep.subr.bf16.mxu0 0
    %2696 = vmatpush1.bf16.msra.mxu0 %v2654
    %2697 = vmatprep.subr.bf16.mxu0 0
    %2698 = vmatpush1.bf16.msra.mxu0 %v2655
    %2699 = vmatprep.subr.bf16.mxu0 0
    %2700 = vmatpush1.bf16.msra.mxu0 %v2656
    %2701 = vmatprep.subr.bf16.mxu0 0
    %2702 = vmatpush1.bf16.msra.mxu0 %v2657
    %2703 = vmatprep.subr.bf16.mxu0 0
    %2704 = vmatpush1.bf16.msra.mxu0 %v2658
    %2705 = vmatprep.subr.bf16.mxu0 0
    %2706 = vmatpush1.bf16.msra.mxu0 %v2659
    %2707 = vmatprep.subr.bf16.mxu0 0
    %2708 = vmatpush1.bf16.msra.mxu0 %v2660
    %2709 = vmatprep.mubr.bf16.mxu0 %v2578
    %2710 = vmatmul.mubr.bf16.gmra.mrb[0].mxu0 %v2577
    %v2711 = vpop.f32.mrb[0].mxu0
    %v2712 = vadd.f32 %v248, %v2711
    %v2713 = vpop.f32.mrb[0].mxu0
    %v2714 = vpop.f32.mrb[0].mxu0
    %v2715 = vpop.f32.mrb[0].mxu0
    %2716 = vdwg.mxu0
    %v2717 = vxor.u32 %v2712, 2147483648
    %v2718 = vmul.f32 %v2717, 1.442695
    %v2719 = vpow.pop %v2718
    %v2720 = vadd.f32 %v2719, 1.0
    %v2721 = vrcp.pop %v2720
    %v2722 = vmul.f32 1.0, %v2721
    %v2723 = vtanh.pop %v2712
    %v2724 = vmul.f32 %v2722, %v2380
    %2726 = vrot.lane.b32.xlu0 %v2723, 64
    %v2727 = vpop.permute.xlu0 %2726
    %v2729 = vmul.f32 %v2722, %v2727
    %2731 = vrot.lane.b32.xlu0 %v2729, 32
    %v2732 = vpop.permute.xlu0 %2731
    %v2734 = vadd.f32 %v2724, %v2732
    %v2735 = vtanh.pop %v2734
    %2737 = vrot.lane.b32.xlu0 %v2735, 64
    %v2738 = vpop.permute.xlu0 %2737
    %v2740 = vmul.f32 %v2722, %v2738
    %v2741 = vpack.c.bf16 %v2740, %v2740
    %v2743 = vunpack.c.l.b16 %v2741
    %v2744 = vpack.c.b16 %v2743, %v2743
    %2745 = vrot.lane.b32.xlu0 %v2744, 32
    %v2746 = vpop.permute.xlu0 %2745
    %2748 = vst.msk [vmem:[#allocation4 + $0x4] sm:$0xf] %vm253, %v2746
    %2750 = vrot.lane.b32.xlu0 %v2740, 32
    %v2751 = vpop.permute.xlu0 %2750
    %s2753 = scalar_lea.vmem [#allocation3], 48
    %2754 = vst.msk [vmem:[%s2753] sm:$0xff] %vm629, %v2751
    %s2755 = scalar_lea.vmem [#allocation2], 56
    %v2756 = vld [vmem:[%s2755] sm:$0xff]
    %v2757 = vld [vmem:[#allocation4] sm:$0xf]
    %v2758 = vld [vmem:[#allocation5] sm:$0xf]
    %v2759 = vld [vmem:[#allocation5 + $0x4] sm:$0xf]
    %v2760 = vld [vmem:[#allocation5 + $0x8] sm:$0xf]
    %v2761 = vld [vmem:[#allocation5 + $0xc] sm:$0xf]
    %v2762 = vld [vmem:[#allocation5 + $0x10] sm:$0xf]
    %v2763 = vld [vmem:[#allocation5 + $0x14] sm:$0xf]
    %v2764 = vld [vmem:[#allocation5 + $0x18] sm:$0xf]
    %v2765 = vld [vmem:[#allocation5 + $0x1c] sm:$0xf]
    %v2766 = vld [vmem:[#allocation5 + $0x20] sm:$0xf]
    %v2767 = vld [vmem:[#allocation5 + $0x24] sm:$0xf]
    %v2768 = vld [vmem:[#allocation5 + $0x28] sm:$0xf]
    %v2769 = vld [vmem:[#allocation5 + $0x2c] sm:$0xf]
    %v2770 = vld [vmem:[#allocation5 + $0x30] sm:$0xf]
    %v2771 = vld [vmem:[#allocation5 + $0x34] sm:$0xf]
    %v2772 = vld [vmem:[#allocation5 + $0x38] sm:$0xf]
    %v2773 = vld [vmem:[#allocation5 + $0x3c] sm:$0xf]
    %v2790 = vunpack.c.l.b16 %v2758
    %v2791 = vunpack.c.l.b16 %v2759
    %v2792 = vunpack.c.l.b16 %v2760
    %v2793 = vunpack.c.l.b16 %v2761
    %v2794 = vunpack.c.l.b16 %v2762
    %v2795 = vunpack.c.l.b16 %v2763
    %v2796 = vunpack.c.l.b16 %v2764
    %v2797 = vunpack.c.l.b16 %v2765
    %v2798 = vunpack.c.l.b16 %v2766
    %v2799 = vunpack.c.l.b16 %v2767
    %v2800 = vunpack.c.l.b16 %v2768
    %v2801 = vunpack.c.l.b16 %v2769
    %v2802 = vunpack.c.l.b16 %v2770
    %v2803 = vunpack.c.l.b16 %v2771
    %v2804 = vunpack.c.l.b16 %v2772
    %v2805 = vunpack.c.l.b16 %v2773
    %v2806 = vpack.c.b16 %v2791, %v2790
    %v2807 = vpack.c.b16 %v2793, %v2792
    %v2808 = vpack.c.b16 %v2795, %v2794
    %v2809 = vpack.c.b16 %v2797, %v2796
    %v2810 = vpack.c.b16 %v2799, %v2798
    %v2811 = vpack.c.b16 %v2801, %v2800
    %v2812 = vpack.c.b16 %v2803, %v2802
    %v2813 = vpack.c.b16 %v2805, %v2804
    %2822 = vmatprep.subr.bf16.mxu0 0
    %2823 = vmatpush1.bf16.msra.mxu0 %v2806
    %2824 = vmatprep.subr.bf16.mxu0 0
    %2825 = vmatpush1.bf16.msra.mxu0 %v2807
    %2826 = vmatprep.subr.bf16.mxu0 0
    %2827 = vmatpush1.bf16.msra.mxu0 %v2808
    %2828 = vmatprep.subr.bf16.mxu0 0
    %2829 = vmatpush1.bf16.msra.mxu0 %v2809
    %2830 = vmatprep.subr.bf16.mxu0 0
    %2831 = vmatpush1.bf16.msra.mxu0 %v2810
    %2832 = vmatprep.subr.bf16.mxu0 0
    %2833 = vmatpush1.bf16.msra.mxu0 %v2811
    %2834 = vmatprep.subr.bf16.mxu0 0
    %2835 = vmatpush1.bf16.msra.mxu0 %v2812
    %2836 = vmatprep.subr.bf16.mxu0 0
    %2837 = vmatpush1.bf16.msra.mxu0 %v2813
    %2838 = vmatprep.subr.bf16.mxu0 0
    %2839 = vmatpush1.bf16.msra.mxu0 0
    %2840 = vmatprep.subr.bf16.mxu0 0
    %2841 = vmatpush1.bf16.msra.mxu0 0
    %2842 = vmatprep.subr.bf16.mxu0 0
    %2843 = vmatpush1.bf16.msra.mxu0 0
    %2844 = vmatprep.subr.bf16.mxu0 0
    %2845 = vmatpush1.bf16.msra.mxu0 0
    %2846 = vmatprep.subr.bf16.mxu0 0
    %2847 = vmatpush1.bf16.msra.mxu0 0
    %2848 = vmatprep.subr.bf16.mxu0 0
    %2849 = vmatpush1.bf16.msra.mxu0 0
    %2850 = vmatprep.subr.bf16.mxu0 0
    %2851 = vmatpush1.bf16.msra.mxu0 0
    %2852 = vmatprep.subr.bf16.mxu0 0
    %2853 = vmatpush1.bf16.msra.mxu0 0
    %2854 = vmatprep.mubr.bf16.mxu0 0
    %2855 = vmatmul.mubr.bf16.gmra.mrb[0].mxu0 %v2757
    %v2856 = vpop.f32.mrb[0].mxu0
    %v2857 = vadd.f32 0.0, %v2856
    %v2858 = vpop.f32.mrb[0].mxu0
    %v2859 = vpop.f32.mrb[0].mxu0
    %v2860 = vpop.f32.mrb[0].mxu0
    %2861 = vdwg.mxu0
    %v2862 = vadd.f32 %v2756, %v2857
    %v2863 = vxor.u32 %v2862, 2147483648
    %v2864 = vmul.f32 %v2863, 1.442695
    %v2865 = vpow.pop %v2864
    %v2866 = vadd.f32 %v2865, 1.0
    %v2867 = vrcp.pop %v2866
    %v2868 = vmul.f32 1.0, %v2867
    %v2869 = vtanh.pop %v2862
    %v2870 = vmul.f32 %v2868, %v2526
    %2872 = vrot.lane.b32.xlu0 %v2869, 64
    %v2873 = vpop.permute.xlu0 %2872
    %v2875 = vmul.f32 %v2868, %v2873
    %2877 = vrot.lane.b32.xlu0 %v2875, 32
    %v2878 = vpop.permute.xlu0 %2877
    %v2880 = vadd.f32 %v2870, %v2878
    %v2881 = vtanh.pop %v2880
    %2883 = vrot.lane.b32.xlu0 %v2881, 64
    %v2884 = vpop.permute.xlu0 %2883
    %v2886 = vmul.f32 %v2868, %v2884
    %v2887 = vpack.c.bf16 %v2886, %v2886
    %v2889 = vunpack.c.l.b16 %v2887
    %v2890 = vpack.c.b16 %v2889, %v2889
    %2891 = vrot.lane.b32.xlu0 %v2890, 32
    %v2892 = vpop.permute.xlu0 %2891
    %2894 = vst.msk [vmem:[#allocation4] sm:$0xf] %vm253, %v2892
    %v2895 = vld [vmem:[#allocation4] sm:$0xff]
    %v2896 = vld [vmem:[%s6] sm:$0xf]
    %v2897 = vld [vmem:[%s6 + $0x4] sm:$0xf]
    %v2898 = vld [vmem:[%s6 + $0x8] sm:$0xf]
    %v2899 = vld [vmem:[%s6 + $0xc] sm:$0xf]
    %v2900 = vld [vmem:[%s6 + $0x10] sm:$0xf]
    %v2901 = vld [vmem:[%s6 + $0x14] sm:$0xf]
    %v2902 = vld [vmem:[%s6 + $0x18] sm:$0xf]
    %v2903 = vld [vmem:[%s6 + $0x1c] sm:$0xf]
    %v2904 = vld [vmem:[%s6 + $0x20] sm:$0xf]
    %v2905 = vld [vmem:[%s6 + $0x24] sm:$0xf]
    %v2906 = vld [vmem:[%s6 + $0x28] sm:$0xf]
    %v2907 = vld [vmem:[%s6 + $0x2c] sm:$0xf]
    %v2908 = vld [vmem:[%s6 + $0x30] sm:$0xf]
    %v2909 = vld [vmem:[%s6 + $0x34] sm:$0xf]
    %v2910 = vld [vmem:[%s6 + $0x38] sm:$0xf]
    %v2911 = vld [vmem:[%s6 + $0x3c] sm:$0xf]
    %v2912 = vld [vmem:[%s6 + $0x40] sm:$0xf]
    %v2913 = vld [vmem:[%s6 + $0x44] sm:$0xf]
    %v2914 = vld [vmem:[%s6 + $0x48] sm:$0xf]
    %v2915 = vld [vmem:[%s6 + $0x4c] sm:$0xf]
    %v2916 = vld [vmem:[%s6 + $0x50] sm:$0xf]
    %v2917 = vld [vmem:[%s6 + $0x54] sm:$0xf]
    %v2918 = vld [vmem:[%s6 + $0x58] sm:$0xf]
    %v2919 = vld [vmem:[%s6 + $0x5c] sm:$0xf]
    %v2920 = vld [vmem:[%s6 + $0x60] sm:$0xf]
    %v2921 = vld [vmem:[%s6 + $0x64] sm:$0xf]
    %v2922 = vld [vmem:[%s6 + $0x68] sm:$0xf]
    %v2923 = vld [vmem:[%s6 + $0x6c] sm:$0xf]
    %v2924 = vld [vmem:[%s6 + $0x70] sm:$0xf]
    %v2925 = vld [vmem:[%s6 + $0x74] sm:$0xf]
    %v2926 = vld [vmem:[%s6 + $0x78] sm:$0xf]
    %v2927 = vld [vmem:[%s6 + $0x7c] sm:$0xf]
    %v2929 = vunpack.c.l.b16 %v2895
    %v2930 = vunpack.c.h.b16 %v2895
    %v2931 = vpack.c.b16 %v2929, %v2929
    %v2932 = vpack.c.b16 %v2930, %v2930
    %v2967 = vunpack.c.l.b16 %v2896
    %v2968 = vunpack.c.l.b16 %v2897
    %v2969 = vunpack.c.l.b16 %v2898
    %v2970 = vunpack.c.l.b16 %v2899
    %v2971 = vunpack.c.l.b16 %v2900
    %v2972 = vunpack.c.l.b16 %v2901
    %v2973 = vunpack.c.l.b16 %v2902
    %v2974 = vunpack.c.l.b16 %v2903
    %v2975 = vunpack.c.l.b16 %v2904
    %v2976 = vunpack.c.l.b16 %v2905
    %v2977 = vunpack.c.l.b16 %v2906
    %v2978 = vunpack.c.l.b16 %v2907
    %v2979 = vunpack.c.l.b16 %v2908
    %v2980 = vunpack.c.l.b16 %v2909
    %v2981 = vunpack.c.l.b16 %v2910
    %v2982 = vunpack.c.l.b16 %v2911
    %v2983 = vunpack.c.l.b16 %v2912
    %v2984 = vunpack.c.l.b16 %v2913
    %v2985 = vunpack.c.l.b16 %v2914
    %v2986 = vunpack.c.l.b16 %v2915
    %v2987 = vunpack.c.l.b16 %v2916
    %v2988 = vunpack.c.l.b16 %v2917
    %v2989 = vunpack.c.l.b16 %v2918
    %v2990 = vunpack.c.l.b16 %v2919
    %v2991 = vunpack.c.l.b16 %v2920
    %v2992 = vunpack.c.l.b16 %v2921
    %v2993 = vunpack.c.l.b16 %v2922
    %v2994 = vunpack.c.l.b16 %v2923
    %v2995 = vunpack.c.l.b16 %v2924
    %v2996 = vunpack.c.l.b16 %v2925
    %v2997 = vunpack.c.l.b16 %v2926
    %v2998 = vunpack.c.l.b16 %v2927
    %v2999 = vpack.c.b16 %v2968, %v2967
    %v3000 = vpack.c.b16 %v2970, %v2969
    %v3001 = vpack.c.b16 %v2972, %v2971
    %v3002 = vpack.c.b16 %v2974, %v2973
    %v3003 = vpack.c.b16 %v2976, %v2975
    %v3004 = vpack.c.b16 %v2978, %v2977
    %v3005 = vpack.c.b16 %v2980, %v2979
    %v3006 = vpack.c.b16 %v2982, %v2981
    %v3007 = vpack.c.b16 %v2984, %v2983
    %v3008 = vpack.c.b16 %v2986, %v2985
    %v3009 = vpack.c.b16 %v2988, %v2987
    %v3010 = vpack.c.b16 %v2990, %v2989
    %v3011 = vpack.c.b16 %v2992, %v2991
    %v3012 = vpack.c.b16 %v2994, %v2993
    %v3013 = vpack.c.b16 %v2996, %v2995
    %v3014 = vpack.c.b16 %v2998, %v2997
    %3031 = vmatprep.subr.bf16.mxu0 0
    %3032 = vmatpush1.bf16.msra.mxu0 %v2999
    %3033 = vmatprep.subr.bf16.mxu0 0
    %3034 = vmatpush1.bf16.msra.mxu0 %v3000
    %3035 = vmatprep.subr.bf16.mxu0 0
    %3036 = vmatpush1.bf16.msra.mxu0 %v3001
    %3037 = vmatprep.subr.bf16.mxu0 0
    %3038 = vmatpush1.bf16.msra.mxu0 %v3002
    %3039 = vmatprep.subr.bf16.mxu0 0
    %3040 = vmatpush1.bf16.msra.mxu0 %v3003
    %3041 = vmatprep.subr.bf16.mxu0 0
    %3042 = vmatpush1.bf16.msra.mxu0 %v3004
    %3043 = vmatprep.subr.bf16.mxu0 0
    %3044 = vmatpush1.bf16.msra.mxu0 %v3005
    %3045 = vmatprep.subr.bf16.mxu0 0
    %3046 = vmatpush1.bf16.msra.mxu0 %v3006
    %3047 = vmatprep.subr.bf16.mxu0 0
    %3048 = vmatpush1.bf16.msra.mxu0 %v3007
    %3049 = vmatprep.subr.bf16.mxu0 0
    %3050 = vmatpush1.bf16.msra.mxu0 %v3008
    %3051 = vmatprep.subr.bf16.mxu0 0
    %3052 = vmatpush1.bf16.msra.mxu0 %v3009
    %3053 = vmatprep.subr.bf16.mxu0 0
    %3054 = vmatpush1.bf16.msra.mxu0 %v3010
    %3055 = vmatprep.subr.bf16.mxu0 0
    %3056 = vmatpush1.bf16.msra.mxu0 %v3011
    %3057 = vmatprep.subr.bf16.mxu0 0
    %3058 = vmatpush1.bf16.msra.mxu0 %v3012
    %3059 = vmatprep.subr.bf16.mxu0 0
    %3060 = vmatpush1.bf16.msra.mxu0 %v3013
    %3061 = vmatprep.subr.bf16.mxu0 0
    %3062 = vmatpush1.bf16.msra.mxu0 %v3014
    %3063 = vmatprep.mubr.bf16.mxu0 %v2932
    %3064 = vmatmul.mubr.bf16.gmra.mrb[0].mxu0 %v2931
    %v3065 = vpop.f32.mrb[0].mxu0
    %v3066 = vadd.f32 %v248, %v3065
    %v3067 = vpop.f32.mrb[0].mxu0
    %v3068 = vpop.f32.mrb[0].mxu0
    %v3069 = vpop.f32.mrb[0].mxu0
    %3070 = vdwg.mxu0
    %v3071 = vxor.u32 %v3066, 2147483648
    %v3072 = vmul.f32 %v3071, 1.442695
    %v3073 = vpow.pop %v3072
    %v3074 = vadd.f32 %v3073, 1.0
    %v3075 = vrcp.pop %v3074
    %v3076 = vmul.f32 1.0, %v3075
    %v3077 = vtanh.pop %v3066
    %v3078 = vmul.f32 %v3076, %v2734
    %3080 = vrot.lane.b32.xlu0 %v3077, 64
    %v3081 = vpop.permute.xlu0 %3080
    %v3083 = vmul.f32 %v3076, %v3081
    %3085 = vrot.lane.b32.xlu0 %v3083, 32
    %v3086 = vpop.permute.xlu0 %3085
    %v3088 = vadd.f32 %v3078, %v3086
    %v3089 = vtanh.pop %v3088
    %3091 = vrot.lane.b32.xlu0 %v3089, 64
    %v3092 = vpop.permute.xlu0 %3091
    %v3094 = vmul.f32 %v3076, %v3092
    %v3095 = vpack.c.bf16 %v3094, %v3094
    %v3097 = vunpack.c.l.b16 %v3095
    %v3098 = vpack.c.b16 %v3097, %v3097
    %3099 = vrot.lane.b32.xlu0 %v3098, 32
    %v3100 = vpop.permute.xlu0 %3099
    %3102 = vst.msk [vmem:[#allocation4 + $0x4] sm:$0xf] %vm253, %v3100
    %3104 = vrot.lane.b32.xlu0 %v3094, 32
    %v3105 = vpop.permute.xlu0 %3104
    %s3107 = scalar_lea.vmem [#allocation3], 56
    %3108 = vst.msk [vmem:[%s3107] sm:$0xff] %vm629, %v3105
    %v3109 = vld [vmem:[#allocation3] sm:$0xff]
    %v3110 = vld [vmem:[#allocation3 + $0x8] sm:$0xff]
    %v3111 = vld [vmem:[#allocation3 + $0x10] sm:$0xff]
    %v3112 = vld [vmem:[#allocation3 + $0x18] sm:$0xff]
    %v3113 = vld [vmem:[#allocation3 + $0x20] sm:$0xff]
    %v3114 = vld [vmem:[#allocation3 + $0x28] sm:$0xff]
    %v3115 = vld [vmem:[#allocation3 + $0x30] sm:$0xff]
    %v3116 = vld [vmem:[#allocation3 + $0x38] sm:$0xff]
    %v3117 = vpack.c.bf16 %v3110, %v3109
    %v3118 = vpack.c.bf16 %v3112, %v3111
    %v3119 = vpack.c.bf16 %v3114, %v3113
    %v3120 = vpack.c.bf16 %v3116, %v3115
    %v3121 = vld [vmem:[#allocation7] sm:$0xf]
    %v3122 = vld [vmem:[#allocation7 + $0x4] sm:$0xf]
    %v3123 = vld [vmem:[#allocation7 + $0x8] sm:$0xf]
    %v3124 = vld [vmem:[#allocation7 + $0xc] sm:$0xf]
    %v3125 = vld [vmem:[#allocation7 + $0x10] sm:$0xf]
    %v3126 = vld [vmem:[#allocation7 + $0x14] sm:$0xf]
    %v3127 = vld [vmem:[#allocation7 + $0x18] sm:$0xf]
    %v3128 = vld [vmem:[#allocation7 + $0x1c] sm:$0xf]
    %v3129 = vld [vmem:[#allocation7 + $0x20] sm:$0xf]
    %v3130 = vld [vmem:[#allocation7 + $0x24] sm:$0xf]
    %v3131 = vld [vmem:[#allocation7 + $0x28] sm:$0xf]
    %v3132 = vld [vmem:[#allocation7 + $0x2c] sm:$0xf]
    %v3133 = vld [vmem:[#allocation7 + $0x30] sm:$0xf]
    %v3134 = vld [vmem:[#allocation7 + $0x34] sm:$0xf]
    %v3135 = vld [vmem:[#allocation7 + $0x38] sm:$0xf]
    %v3136 = vld [vmem:[#allocation7 + $0x3c] sm:$0xf]
    %v3137 = vld [vmem:[%s9] sm:$0x1]
    %v3139 = vlaneseq
    %v3140 = vshrl.u32 %v3139, 7
    %v3141 = vsub.s32 0, %v3140
    %v3142 = vrot.slane %v3137, %v3141
    %v3160 = vunpack.c.l.b16 %v3121
    %v3161 = vunpack.c.l.b16 %v3122
    %v3162 = vunpack.c.l.b16 %v3123
    %v3163 = vunpack.c.l.b16 %v3124
    %v3164 = vunpack.c.l.b16 %v3125
    %v3165 = vunpack.c.l.b16 %v3126
    %v3166 = vunpack.c.l.b16 %v3127
    %v3167 = vunpack.c.l.b16 %v3128
    %v3168 = vunpack.c.l.b16 %v3129
    %v3169 = vunpack.c.l.b16 %v3130
    %v3170 = vunpack.c.l.b16 %v3131
    %v3171 = vunpack.c.l.b16 %v3132
    %v3172 = vunpack.c.l.b16 %v3133
    %v3173 = vunpack.c.l.b16 %v3134
    %v3174 = vunpack.c.l.b16 %v3135
    %v3175 = vunpack.c.l.b16 %v3136
    %v3176 = vpack.c.b16 %v3161, %v3160
    %v3177 = vpack.c.b16 %v3163, %v3162
    %v3178 = vpack.c.b16 %v3165, %v3164
    %v3179 = vpack.c.b16 %v3167, %v3166
    %v3180 = vpack.c.b16 %v3169, %v3168
    %v3181 = vpack.c.b16 %v3171, %v3170
    %v3182 = vpack.c.b16 %v3173, %v3172
    %v3183 = vpack.c.b16 %v3175, %v3174
    %3192 = vmatprep.subr.bf16.mxu0 0
    %3193 = vmatpush1.bf16.msra.mxu0 %v3176
    %3194 = vmatprep.subr.bf16.mxu0 0
    %3195 = vmatpush1.bf16.msra.mxu0 %v3177
    %3196 = vmatprep.subr.bf16.mxu0 0
    %3197 = vmatpush1.bf16.msra.mxu0 %v3178
    %3198 = vmatprep.subr.bf16.mxu0 0
    %3199 = vmatpush1.bf16.msra.mxu0 %v3179
    %3200 = vmatprep.subr.bf16.mxu0 0
    %3201 = vmatpush1.bf16.msra.mxu0 %v3180
    %3202 = vmatprep.subr.bf16.mxu0 0
    %3203 = vmatpush1.bf16.msra.mxu0 %v3181
    %3204 = vmatprep.subr.bf16.mxu0 0
    %3205 = vmatpush1.bf16.msra.mxu0 %v3182
    %3206 = vmatprep.subr.bf16.mxu0 0
    %3207 = vmatpush1.bf16.msra.mxu0 %v3183
    %3208 = vmatprep.subr.bf16.mxu0 0
    %3209 = vmatpush1.bf16.msra.mxu0 0
    %3210 = vmatprep.subr.bf16.mxu0 0
    %3211 = vmatpush1.bf16.msra.mxu0 0
    %3212 = vmatprep.subr.bf16.mxu0 0
    %3213 = vmatpush1.bf16.msra.mxu0 0
    %3214 = vmatprep.subr.bf16.mxu0 0
    %3215 = vmatpush1.bf16.msra.mxu0 0
    %3216 = vmatprep.subr.bf16.mxu0 0
    %3217 = vmatpush1.bf16.msra.mxu0 0
    %3218 = vmatprep.subr.bf16.mxu0 0
    %3219 = vmatpush1.bf16.msra.mxu0 0
    %3220 = vmatprep.subr.bf16.mxu0 0
    %3221 = vmatpush1.bf16.msra.mxu0 0
    %3222 = vmatprep.subr.bf16.mxu0 0
    %3223 = vmatpush1.bf16.msra.mxu0 0
    %3224 = vmatprep.mubr.bf16.mxu0 0
    %3225 = vmatmul.mubr.bf16.gmra.mrb[0].mxu0 %v3117
    %v3226 = vpop.f32.mrb[0].mxu0
    %v3227 = vadd.f32 %v3142, %v3226
    %v3228 = vpop.f32.mrb[0].mxu0
    %v3229 = vpop.f32.mrb[0].mxu0
    %v3230 = vadd.f32 %v3142, %v3229
    %v3231 = vpop.f32.mrb[0].mxu0
    %3232 = vmatprep.mubr.bf16.mxu0 0
    %3233 = vmatmul.mubr.bf16.gmra.mrb[0].mxu0 %v3118
    %v3234 = vpop.f32.mrb[0].mxu0
    %v3235 = vadd.f32 %v3142, %v3234
    %v3236 = vpop.f32.mrb[0].mxu0
    %v3237 = vpop.f32.mrb[0].mxu0
    %v3238 = vadd.f32 %v3142, %v3237
    %v3239 = vpop.f32.mrb[0].mxu0
    %3240 = vmatprep.mubr.bf16.mxu0 0
    %3241 = vmatmul.mubr.bf16.gmra.mrb[0].mxu0 %v3119
    %v3242 = vpop.f32.mrb[0].mxu0
    %v3243 = vadd.f32 %v3142, %v3242
    %v3244 = vpop.f32.mrb[0].mxu0
    %v3245 = vpop.f32.mrb[0].mxu0
    %v3246 = vadd.f32 %v3142, %v3245
    %v3247 = vpop.f32.mrb[0].mxu0
    %3248 = vmatprep.mubr.bf16.mxu0 0
    %3249 = vmatmul.mubr.bf16.gmra.mrb[0].mxu0 %v3120
    %v3250 = vpop.f32.mrb[0].mxu0
    %v3251 = vadd.f32 %v3142, %v3250
    %v3252 = vpop.f32.mrb[0].mxu0
    %v3253 = vpop.f32.mrb[0].mxu0
    %v3254 = vadd.f32 %v3142, %v3253
    %v3255 = vpop.f32.mrb[0].mxu0
    %3256 = vdwg.mxu0
    %3257 = vst [vmem:[%s10] sm:$0xff] %v3227
    %3258 = vst [vmem:[%s10 + $0x8] sm:$0xff] %v3230
    %3259 = vst [vmem:[%s10 + $0x10] sm:$0xff] %v3235
    %3260 = vst [vmem:[%s10 + $0x18] sm:$0xff] %v3238
    %3261 = vst [vmem:[%s10 + $0x20] sm:$0xff] %v3243
    %3262 = vst [vmem:[%s10 + $0x28] sm:$0xff] %v3246
    %3263 = vst [vmem:[%s10 + $0x30] sm:$0xff] %v3251
    %3264 = vst [vmem:[%s10 + $0x38] sm:$0xff] %v3254
    %3266 = vrot.lane.b32.xlu0 %v2886, 32
    %v3267 = vpop.permute.xlu0 %3266
    %3269 = vst.msk [vmem:[%s11] sm:$0xff] %vm629, %v3267
    %s3270 = scalar_lea.vmem %s11, 8
    %3271 = vst.msk [vmem:[%s3270] sm:$0xff] %vm629, %v3105
    %3273 = vrot.lane.b32.xlu0 %v2880, 96
    %v3274 = vpop.permute.xlu0 %3273
    %3276 = vst.msk [vmem:[%s12] sm:$0xff] %vm629, %v3274
    %3278 = vrot.lane.b32.xlu0 %v3088, 96
    %v3279 = vpop.permute.xlu0 %3278
    %s3281 = scalar_lea.vmem %s12, 8
    %3282 = vst.msk [vmem:[%s3281] sm:$0xff] %vm629, %v3279
    // Predicated region
    $region50: #{lstm_char_rnn_forward.1} parent=1 // pred_check
      _
    $region51: #{lstm_char_rnn_forward.1} parent=1 // pred_check_branch
      %3284 = sbr.rel (0) target = $region53
    $region52: #{lstm_char_rnn_forward.1} parent=1 // pred_region
      _
    $region53: #{lstm_char_rnn_forward.1} parent=1 // pred_fallthru
      _
    // Predicated region
    $region54: #{lstm_char_rnn_forward.1} parent=1 // pred_check
      _
    $region55: #{lstm_char_rnn_forward.1} parent=1 // pred_check_branch
      %3286 = sbr.rel (0) target = $region57
    $region56: #{lstm_char_rnn_forward.1} parent=1 // pred_region
      _
    $region57: #{lstm_char_rnn_forward.1} parent=1 // pred_fallthru
      _
    // Predicated region
    $region58: #{lstm_char_rnn_forward.1} parent=1 // pred_check
      _
    $region59: #{lstm_char_rnn_forward.1} parent=1 // pred_check_branch
      %3288 = sbr.rel (0) target = $region61
    $region60: #{lstm_char_rnn_forward.1} parent=1 // pred_region
      _
    $region61: #{lstm_char_rnn_forward.1} parent=1 // pred_fallthru
      _
    // Predicated region
    $region62: #{lstm_char_rnn_forward.1} parent=1 // pred_check
      _
    $region63: #{lstm_char_rnn_forward.1} parent=1 // pred_check_branch
      %3290 = sbr.rel (0) target = $region65
    $region64: #{lstm_char_rnn_forward.1} parent=1 // pred_region
      _
    $region65: #{lstm_char_rnn_forward.1} parent=1 // pred_fallthru
      _
    // Predicated region
    $region66: #{lstm_char_rnn_forward.1} parent=1 // pred_check
      _
    $region67: #{lstm_char_rnn_forward.1} parent=1 // pred_check_branch
      %3292 = sbr.rel (0) target = $region69
    $region68: #{lstm_char_rnn_forward.1} parent=1 // pred_region
      _
    $region69: #{lstm_char_rnn_forward.1} parent=1 // pred_fallthru
      _
    // Predicated region
    $region70: #{lstm_char_rnn_forward.1} parent=1 // pred_check
      _
    $region71: #{lstm_char_rnn_forward.1} parent=1 // pred_check_branch
      %3294 = sbr.rel (0) target = $region73
    $region72: #{lstm_char_rnn_forward.1} parent=1 // pred_region
      _
    $region73: #{lstm_char_rnn_forward.1} parent=1 // pred_fallthru
      _
    %3295 = vsyncpa [#allocation6], 1
    %3296 = vsyncpa [#allocation8], 1

</llo_original>
